<compile_context>
chip_gen: v7x
topology: tpu7x:2x2x1
jax: 0.10.0
libtpu: 0.0.40
codegen_flags: <defaults>
</compile_context>

<pallas_src>
from typing import Any, NamedTuple

import jax
import jax.numpy as jnp
from jax.experimental import pallas as pl
from jax.experimental.pallas import tpu as pltpu

_LANE = 128


def _round_up(n, m):
    return ((n + m - 1) // m) * m


def _sublane(dtype):
    # sublane packing granularity: f32 -> 8, bf16 -> 16, 8-bit -> 32
    return {2: 16, 1: 32}.get(jnp.dtype(dtype).itemsize, 8)


def _tpu_vmem_bytes():
    try:
        info = pltpu.get_tpu_info()
        cap = getattr(info, "vmem_capacity_bytes", None)
        if cap:
            return int(cap)
    except Exception:
        pass
    return 64 * 1024 * 1024  # conservative default (v7x per-TC VMEM)


def _tpu_num_cores():
    try:
        info = pltpu.get_tpu_info()
        for attr in ("num_cores", "tensorcore_count", "num_tensorcores",
                     "cores_per_chip"):
            n = getattr(info, attr, None)
            if n:
                return int(n)
    except Exception:
        pass
    return 1


# --------------------------------------------------------------------------
# Kernel: one batch tile -> encode (fc1 -> relu -> fc2), decode (fc3 -> relu
# -> fc4).  MXU operands may be bf16; accumulation, bias add and ReLU stay
# in f32 (v5e-compatible).
# --------------------------------------------------------------------------
def _ae_kernel(x_ref,
               w1_ref, b1_ref,
               w2_ref, b2_ref,
               w3_ref, b3_ref,
               w4_ref, b4_ref,
               recon_ref, z_ref):
    cd = w1_ref.dtype  # MXU operand dtype (f32 or bf16)
    x = x_ref[...]

    # ---- encode ----
    h1 = jnp.dot(x, w1_ref[...], preferred_element_type=jnp.float32) + b1_ref[...]
    h1 = jnp.maximum(h1, 0.0).astype(cd)
    z = jnp.dot(h1, w2_ref[...], preferred_element_type=jnp.float32) + b2_ref[...]

    # ---- decode ----
    h3 = jnp.dot(z.astype(cd), w3_ref[...], preferred_element_type=jnp.float32) + b3_ref[...]
    h3 = jnp.maximum(h3, 0.0).astype(cd)
    recon = jnp.dot(h3, w4_ref[...], preferred_element_type=jnp.float32) + b4_ref[...]

    z_ref[...] = z.astype(z_ref.dtype)
    recon_ref[...] = recon.astype(recon_ref.dtype)
    # TODO(synk): for very large `units` (>= ~2048 padded), chunk the fc1/fc4
    # output (units) dimension in an inner loop so the f32 h1/h3 intermediates
    # stay bounded and the batch tile can stay large.


# --------------------------------------------------------------------------
# One-time parameter prep: pad to lane-dense (multiple-of-128) feature dims,
# cast weights to the MXU operand dtype, keep biases f32.  Zero padding keeps
# padded lanes exactly zero through ReLU and all four layers.
# --------------------------------------------------------------------------
class PreparedAEParams(NamedTuple):
    flat: tuple          # (w1, b1, w2, b2, w3, b3, w4, b4) padded / cast
    dims: tuple          # (in_size, units, latent_dim)
    padded_dims: tuple   # (in_p, un_p, la_p)
    compute_dtype: Any


def prepare_ae_params(params, compute_dtype=jnp.bfloat16):
    (w1, b1), (w2, b2), (w3, b3), (w4, b4) = params
    in_size, units = w1.shape
    latent_dim = w2.shape[1]
    in_p = _round_up(in_size, _LANE)
    un_p = _round_up(units, _LANE)
    la_p = _round_up(latent_dim, _LANE)

    def padw(a, rows, cols):
        a = jnp.asarray(a, jnp.float32)
        return jnp.pad(a, ((0, rows - a.shape[0]),
                           (0, cols - a.shape[1]))).astype(compute_dtype)

    def padb(a, cols):
        a = jnp.asarray(a, jnp.float32).reshape(1, -1)
        return jnp.pad(a, ((0, 0), (0, cols - a.shape[1])))  # stays f32 (VPU)

    flat = (padw(w1, in_p, un_p), padb(b1, un_p),   # fc1
            padw(w2, un_p, la_p), padb(b2, la_p),   # fc2
            padw(w3, la_p, un_p), padb(b3, un_p),   # fc3
            padw(w4, un_p, in_p), padb(b4, in_p))   # fc4
    flat = jax.block_until_ready(flat)  # materialize once, off the hot path
    return PreparedAEParams(flat, (in_size, units, latent_dim),
                            (in_p, un_p, la_p), compute_dtype)


# --------------------------------------------------------------------------
# Forward wrapper
# --------------------------------------------------------------------------
def ae_forward(x, prepared: PreparedAEParams, *, max_block_b=1024,
               out_dtype=jnp.float32, min_rows_per_core=512):
    """Pallas implementation of AE.forward: returns (recon, z)."""
    in_size, units, latent_dim = prepared.dims
    in_p, un_p, la_p = prepared.padded_dims
    cd = prepared.compute_dtype
    op_bytes = jnp.dtype(cd).itemsize
    out_bytes = jnp.dtype(out_dtype).itemsize
    sub = _sublane(cd)

    B = x.shape[0]
    rows = _round_up(B, sub)

    # ---- generation-aware VMEM budget & batch tiling ----
    vmem_cap = _tpu_vmem_bytes()                               # 64 MiB v7x, 128 MiB v5e/v6e
    vmem_limit = min(vmem_cap * 3 // 4, 96 * 1024 * 1024)      # 48 MiB on v7x
    budget = vmem_limit * 3 // 4                               # headroom for scratch

    weight_bytes = (in_p * un_p + un_p * la_p + la_p * un_p + un_p * in_p) * op_bytes
    bias_bytes = (2 * un_p + la_p + in_p) * 4
    const_bytes = weight_bytes + bias_bytes                    # Buffered(1): one copy
    per_row = (2 * in_p * op_bytes                             # x tile (double-buffered)
               + 2 * (in_p + la_p) * out_bytes                 # recon+z tiles (double-buf)
               + (3 * un_p + 2 * la_p + in_p) * 4)             # f32 intermediates (bound)
    bb_cap = max(sub, ((budget - const_bytes) // per_row) // sub * sub)

    n_cores = _tpu_num_cores()
    if n_cores > 1 and rows >= n_cores * min_rows_per_core:
        # Megacore (v7x): even grid so every TensorCore gets a big tile.
        bb = _round_up(-(-rows // n_cores), sub)
    else:
        # Single-TC chip (v5e/v6e) or tiny work: one tile -> grid length 1,
        # no per-step overhead, no repeated x/out DMA rounds.
        bb = rows
    bb = max(sub, min(bb, bb_cap, _round_up(max_block_b, sub)))
    bb = (bb // sub) * sub
    Bp = _round_up(rows, bb)
    grid = (Bp // bb,)

    # ---- activation pad (only when needed) ----
    if x.shape == (Bp, in_p) and x.dtype == jnp.dtype(cd):
        xp = x  # data pipeline already provides lane-dense, padded activations
    else:
        # TODO(synk): perf-critical callers should keep activations stored
        # pre-padded (or fuse this pad into the pallas_call input) to remove
        # this extra HBM round trip from the hot path.
        xp = jnp.pad(jnp.asarray(x, jnp.float32),
                     ((0, Bp - B), (0, in_p - in_size))).astype(cd)

    x_spec = pl.BlockSpec((bb, in_p), lambda i: (i, 0))
    out_specs = [pl.BlockSpec((bb, in_p), lambda i: (i, 0)),   # recon tile
                 pl.BlockSpec((bb, la_p), lambda i: (i, 0))]   # z tile
    out_shape = (jax.ShapeDtypeStruct((Bp, in_p), out_dtype),
                 jax.ShapeDtypeStruct((Bp, la_p), out_dtype))

    weight_elems = in_p * un_p + un_p * la_p + la_p * un_p + un_p * in_p
    cost = pl.CostEstimate(
        flops=2 * Bp * weight_elems,
        transcendentals=0,
        bytes_accessed=(Bp * in_p * op_bytes            # x
                        + weight_bytes + bias_bytes     # params (single copy)
                        + Bp * (in_p + la_p) * out_bytes))

    def call(buffer_constants):
        def const_spec(shape):
            if buffer_constants:
                # Grid-invariant operand: a single VMEM copy is enough; the
                # default double-buffering would just double its footprint.
                return pl.BlockSpec(shape, lambda i: (0, 0),
                                    pipeline_mode=pl.Buffered(1))
            return pl.BlockSpec(shape, lambda i: (0, 0))

        grid_spec = pl.GridSpec(
            grid=grid,
            in_specs=[x_spec,
                      const_spec((in_p, un_p)), const_spec((1, un_p)),   # fc1
                      const_spec((un_p, la_p)), const_spec((1, la_p)),   # fc2
                      const_spec((la_p, un_p)), const_spec((1, un_p)),   # fc3
                      const_spec((un_p, in_p)), const_spec((1, in_p))],  # fc4
            out_specs=out_specs)

        return pl.pallas_call(
            _ae_kernel,
            out_shape=out_shape,
            grid_spec=grid_spec,
            cost_estimate=cost,
            compiler_params=pltpu.CompilerParams(
                dimension_semantics=("parallel",),
                vmem_limit_bytes=vmem_limit),
        )(xp, *prepared.flat)

    try:
        recon_p, z_p = call(True)      # single-buffered constants (preferred)
    except Exception:
        recon_p, z_p = call(False)     # fallback if Buffered(1) is rejected

    return recon_p[:B, :in_size], z_p[:B, :latent_dim]


# --------------------------------------------------------------------------
# Init + pure-JAX reference
# --------------------------------------------------------------------------
def init_ae_params(key, in_size, units, latent_dim):
    """Deterministic init mimicking nn.Linear (uniform +/- 1/sqrt(fan_in)).
    Weights stored transposed: (in_features, out_features)."""
    def linear(k, fan_in, fan_out):
        kw, kb = jax.random.split(k)
        bound = 1.0 / jnp.sqrt(jnp.float32(fan_in))
        w = jax.random.uniform(kw, (fan_in, fan_out), jnp.float32, -bound, bound)
        b = jax.random.uniform(kb, (1, fan_out), jnp.float32, -bound, bound)
        return w, b

    k1, k2, k3, k4 = jax.random.split(key, 4)
    return (
        linear(k1, in_size, units),      # fc1
        linear(k2, units, latent_dim),   # fc2
        linear(k3, latent_dim, units),   # fc3
        linear(k4, units, in_size),      # fc4
    )


def ae_forward_ref(x, params):
    """Pure-JAX f32 reference matching the PyTorch module."""
    (w1, b1), (w2, b2), (w3, b3), (w4, b4) = params
    h1 = jnp.maximum(x @ w1 + b1, 0.0)
    z = h1 @ w2 + b2
    h3 = jnp.maximum(z @ w3 + b3, 0.0)
    recon = h3 @ w4 + b4
    return recon, z


if __name__ == "__main__":
    in_size, units, latent_dim = 32, 64, 16
    batch = 256

    key = jax.random.PRNGKey(0)
    kx, kp = jax.random.split(key)
    x = jax.random.normal(kx, (batch, in_size), jnp.float32)
    params = init_ae_params(kp, in_size, units, latent_dim)

    recon_ref, z_ref = ae_forward_ref(x, params)

    # f32-operand path: exact match with the reference.
    prep32 = prepare_ae_params(params, compute_dtype=jnp.float32)
    recon32, z32 = ae_forward(x, prep32)
    jax.block_until_ready((recon32, z32))
    assert jnp.allclose(recon32, recon_ref, atol=1e-5, rtol=1e-5)
    assert jnp.allclose(z32, z_ref, atol=1e-5, rtol=1e-5)

    # bf16 MXU-operand path (fast path on v6e/v7x): looser tolerance.
    prep16 = prepare_ae_params(params, compute_dtype=jnp.bfloat16)
    recon16, z16 = ae_forward(x, prep16)
    jax.block_until_ready((recon16, z16))
    assert jnp.allclose(recon16, recon_ref, atol=3e-2, rtol=3e-2)
    assert jnp.allclose(z16, z_ref, atol=3e-2, rtol=3e-2)

    print("KERNEL_OK")
</pallas_src>

<mosaic_0001>
module attributes {stable_mosaic.version = 11 : i64} {
  func.func @_ae_kernel(%arg0: i32, %arg1: memref<256x128xf32, #tpu.memory_space<vmem>>, %arg2: memref<128x128xf32, #tpu.memory_space<vmem>>, %arg3: memref<1x128xf32, #tpu.memory_space<vmem>>, %arg4: memref<128x128xf32, #tpu.memory_space<vmem>>, %arg5: memref<1x128xf32, #tpu.memory_space<vmem>>, %arg6: memref<128x128xf32, #tpu.memory_space<vmem>>, %arg7: memref<1x128xf32, #tpu.memory_space<vmem>>, %arg8: memref<128x128xf32, #tpu.memory_space<vmem>>, %arg9: memref<1x128xf32, #tpu.memory_space<vmem>>, %arg10: memref<256x128xf32, #tpu.memory_space<vmem>>, %arg11: memref<256x128xf32, #tpu.memory_space<vmem>>) attributes {dimension_semantics = [#tpu.dimension_semantics<parallel>], iteration_bounds = array<i64: 1>, scalar_prefetch = 0 : i64, scratch_operands = 0 : i64, tpu.core_type = #tpu.core_type<tc>, window_params = [{transform_indices = @transform_0, window_bounds = array<i64: 256, 128>}, {pipeline_mode = #tpu.pipeline_mode<synchronous>, transform_indices = @transform_1, window_bounds = array<i64: 128, 128>}, {pipeline_mode = #tpu.pipeline_mode<synchronous>, transform_indices = @transform_2, window_bounds = array<i64: 1, 128>}, {pipeline_mode = #tpu.pipeline_mode<synchronous>, transform_indices = @transform_3, window_bounds = array<i64: 128, 128>}, {pipeline_mode = #tpu.pipeline_mode<synchronous>, transform_indices = @transform_4, window_bounds = array<i64: 1, 128>}, {pipeline_mode = #tpu.pipeline_mode<synchronous>, transform_indices = @transform_5, window_bounds = array<i64: 128, 128>}, {pipeline_mode = #tpu.pipeline_mode<synchronous>, transform_indices = @transform_6, window_bounds = array<i64: 1, 128>}, {pipeline_mode = #tpu.pipeline_mode<synchronous>, transform_indices = @transform_7, window_bounds = array<i64: 128, 128>}, {pipeline_mode = #tpu.pipeline_mode<synchronous>, transform_indices = @transform_8, window_bounds = array<i64: 1, 128>}, {transform_indices = @transform_9, window_bounds = array<i64: 256, 128>}, {transform_indices = @transform_10, window_bounds = array<i64: 256, 128>}]} {
    %c0 = arith.constant 0 : index
    %c0_0 = arith.constant 0 : index
    %0 = vector.load %arg1[%c0, %c0_0] : memref<256x128xf32, #tpu.memory_space<vmem>>, vector<256x128xf32>
    %c0_1 = arith.constant 0 : index
    %c0_2 = arith.constant 0 : index
    %1 = vector.load %arg2[%c0_1, %c0_2] : memref<128x128xf32, #tpu.memory_space<vmem>>, vector<128x128xf32>
    %cst = arith.constant dense<0.000000e+00> : vector<256x128xf32>
    %2 = tpu.matmul %0, %1, %cst {dimension_numbers = #tpu.dot_dimension_numbers<[1], [0], [0], [1], [0, 0, 1, 1], [], []>} : vector<256x128xf32>, vector<128x128xf32>, vector<256x128xf32> -> vector<256x128xf32>
    %c0_3 = arith.constant 0 : index
    %c0_4 = arith.constant 0 : index
    %3 = vector.load %arg3[%c0_3, %c0_4] : memref<1x128xf32, #tpu.memory_space<vmem>>, vector<1x128xf32>
    %4 = vector.broadcast %3 : vector<1x128xf32> to vector<256x128xf32>
    %5 = arith.addf %2, %4 : vector<256x128xf32>
    %cst_5 = arith.constant 0.000000e+00 : f32
    %6 = vector.broadcast %cst_5 : f32 to vector<256x128xf32>
    %7 = arith.maximumf %5, %6 : vector<256x128xf32>
    %c0_6 = arith.constant 0 : index
    %c0_7 = arith.constant 0 : index
    %8 = vector.load %arg4[%c0_6, %c0_7] : memref<128x128xf32, #tpu.memory_space<vmem>>, vector<128x128xf32>
    %cst_8 = arith.constant dense<0.000000e+00> : vector<256x128xf32>
    %9 = tpu.matmul %7, %8, %cst_8 {dimension_numbers = #tpu.dot_dimension_numbers<[1], [0], [0], [1], [0, 0, 1, 1], [], []>} : vector<256x128xf32>, vector<128x128xf32>, vector<256x128xf32> -> vector<256x128xf32>
    %c0_9 = arith.constant 0 : index
    %c0_10 = arith.constant 0 : index
    %10 = vector.load %arg5[%c0_9, %c0_10] : memref<1x128xf32, #tpu.memory_space<vmem>>, vector<1x128xf32>
    %11 = vector.broadcast %10 : vector<1x128xf32> to vector<256x128xf32>
    %12 = arith.addf %9, %11 : vector<256x128xf32>
    %c0_11 = arith.constant 0 : index
    %c0_12 = arith.constant 0 : index
    %13 = vector.load %arg6[%c0_11, %c0_12] : memref<128x128xf32, #tpu.memory_space<vmem>>, vector<128x128xf32>
    %cst_13 = arith.constant dense<0.000000e+00> : vector<256x128xf32>
    %14 = tpu.matmul %12, %13, %cst_13 {dimension_numbers = #tpu.dot_dimension_numbers<[1], [0], [0], [1], [0, 0, 1, 1], [], []>} : vector<256x128xf32>, vector<128x128xf32>, vector<256x128xf32> -> vector<256x128xf32>
    %c0_14 = arith.constant 0 : index
    %c0_15 = arith.constant 0 : index
    %15 = vector.load %arg7[%c0_14, %c0_15] : memref<1x128xf32, #tpu.memory_space<vmem>>, vector<1x128xf32>
    %16 = vector.broadcast %15 : vector<1x128xf32> to vector<256x128xf32>
    %17 = arith.addf %14, %16 : vector<256x128xf32>
    %cst_16 = arith.constant 0.000000e+00 : f32
    %18 = vector.broadcast %cst_16 : f32 to vector<256x128xf32>
    %19 = arith.maximumf %17, %18 : vector<256x128xf32>
    %c0_17 = arith.constant 0 : index
    %c0_18 = arith.constant 0 : index
    %20 = vector.load %arg8[%c0_17, %c0_18] : memref<128x128xf32, #tpu.memory_space<vmem>>, vector<128x128xf32>
    %cst_19 = arith.constant dense<0.000000e+00> : vector<256x128xf32>
    %21 = tpu.matmul %19, %20, %cst_19 {dimension_numbers = #tpu.dot_dimension_numbers<[1], [0], [0], [1], [0, 0, 1, 1], [], []>} : vector<256x128xf32>, vector<128x128xf32>, vector<256x128xf32> -> vector<256x128xf32>
    %c0_20 = arith.constant 0 : index
    %c0_21 = arith.constant 0 : index
    %22 = vector.load %arg9[%c0_20, %c0_21] : memref<1x128xf32, #tpu.memory_space<vmem>>, vector<1x128xf32>
    %23 = vector.broadcast %22 : vector<1x128xf32> to vector<256x128xf32>
    %24 = arith.addf %21, %23 : vector<256x128xf32>
    %c0_22 = arith.constant 0 : index
    %c0_23 = arith.constant 0 : index
    %25 = vector.load %arg11[%c0_22, %c0_23] : memref<256x128xf32, #tpu.memory_space<vmem>>, vector<256x128xf32>
    tpu.vector_store %arg11[%c0_22, %c0_23], %12 {strides = array<i32>} : memref<256x128xf32, #tpu.memory_space<vmem>>, vector<256x128xf32>,
    %c0_24 = arith.constant 0 : index
    %c0_25 = arith.constant 0 : index
    %26 = vector.load %arg10[%c0_24, %c0_25] : memref<256x128xf32, #tpu.memory_space<vmem>>, vector<256x128xf32>
    tpu.vector_store %arg10[%c0_24, %c0_25], %24 {strides = array<i32>} : memref<256x128xf32, #tpu.memory_space<vmem>>, vector<256x128xf32>,
    return
  }
  func.func @transform_0(%arg0: i32) -> (i32, i32) {
    %c0_i32 = arith.constant 0 : i32
    %c0_i32_0 = arith.constant 0 : i32
    return %arg0, %c0_i32 : i32, i32
  }
  func.func @transform_1(%arg0: i32) -> (i32, i32) {
    %c0_i32 = arith.constant 0 : i32
    %c0_i32_0 = arith.constant 0 : i32
    %c0_i32_1 = arith.constant 0 : i32
    return %c0_i32, %c0_i32_0 : i32, i32
  }
  func.func @transform_2(%arg0: i32) -> (i32, i32) {
    %c0_i32 = arith.constant 0 : i32
    %c0_i32_0 = arith.constant 0 : i32
    %c0_i32_1 = arith.constant 0 : i32
    return %c0_i32, %c0_i32_0 : i32, i32
  }
  func.func @transform_3(%arg0: i32) -> (i32, i32) {
    %c0_i32 = arith.constant 0 : i32
    %c0_i32_0 = arith.constant 0 : i32
    %c0_i32_1 = arith.constant 0 : i32
    return %c0_i32, %c0_i32_0 : i32, i32
  }
  func.func @transform_4(%arg0: i32) -> (i32, i32) {
    %c0_i32 = arith.constant 0 : i32
    %c0_i32_0 = arith.constant 0 : i32
    %c0_i32_1 = arith.constant 0 : i32
    return %c0_i32, %c0_i32_0 : i32, i32
  }
  func.func @transform_5(%arg0: i32) -> (i32, i32) {
    %c0_i32 = arith.constant 0 : i32
    %c0_i32_0 = arith.constant 0 : i32
    %c0_i32_1 = arith.constant 0 : i32
    return %c0_i32, %c0_i32_0 : i32, i32
  }
  func.func @transform_6(%arg0: i32) -> (i32, i32) {
    %c0_i32 = arith.constant 0 : i32
    %c0_i32_0 = arith.constant 0 : i32
    %c0_i32_1 = arith.constant 0 : i32
    return %c0_i32, %c0_i32_0 : i32, i32
  }
  func.func @transform_7(%arg0: i32) -> (i32, i32) {
    %c0_i32 = arith.constant 0 : i32
    %c0_i32_0 = arith.constant 0 : i32
    %c0_i32_1 = arith.constant 0 : i32
    return %c0_i32, %c0_i32_0 : i32, i32
  }
  func.func @transform_8(%arg0: i32) -> (i32, i32) {
    %c0_i32 = arith.constant 0 : i32
    %c0_i32_0 = arith.constant 0 : i32
    %c0_i32_1 = arith.constant 0 : i32
    return %c0_i32, %c0_i32_0 : i32, i32
  }
  func.func @transform_9(%arg0: i32) -> (i32, i32) {
    %c0_i32 = arith.constant 0 : i32
    %c0_i32_0 = arith.constant 0 : i32
    return %arg0, %c0_i32 : i32, i32
  }
  func.func @transform_10(%arg0: i32) -> (i32, i32) {
    %c0_i32 = arith.constant 0 : i32
    %c0_i32_0 = arith.constant 0 : i32
    return %arg0, %c0_i32 : i32, i32
  }
}

module attributes {stable_mosaic.version = 11 : i64} {
  func.func @_ae_kernel(%arg0: i32, %arg1: memref<256x128xf32, #tpu.memory_space<vmem>>, %arg2: memref<128x128xf32, #tpu.memory_space<vmem>>, %arg3: memref<1x128xf32, #tpu.memory_space<vmem>>, %arg4: memref<128x128xf32, #tpu.memory_space<vmem>>, %arg5: memref<1x128xf32, #tpu.memory_space<vmem>>, %arg6: memref<128x128xf32, #tpu.memory_space<vmem>>, %arg7: memref<1x128xf32, #tpu.memory_space<vmem>>, %arg8: memref<128x128xf32, #tpu.memory_space<vmem>>, %arg9: memref<1x128xf32, #tpu.memory_space<vmem>>, %arg10: memref<256x128xf32, #tpu.memory_space<vmem>>, %arg11: memref<256x128xf32, #tpu.memory_space<vmem>>) attributes {dimension_semantics = [#tpu.dimension_semantics<parallel>], iteration_bounds = array<i64: 1>, scalar_prefetch = 0 : i64, scratch_operands = 0 : i64, tpu.core_type = #tpu.core_type<tc>, window_params = [{transform_indices = @transform_0, window_bounds = array<i64: 256, 128>}, {pipeline_mode = #tpu.pipeline_mode<synchronous>, transform_indices = @transform_1, window_bounds = array<i64: 128, 128>}, {pipeline_mode = #tpu.pipeline_mode<synchronous>, transform_indices = @transform_2, window_bounds = array<i64: 1, 128>}, {pipeline_mode = #tpu.pipeline_mode<synchronous>, transform_indices = @transform_3, window_bounds = array<i64: 128, 128>}, {pipeline_mode = #tpu.pipeline_mode<synchronous>, transform_indices = @transform_4, window_bounds = array<i64: 1, 128>}, {pipeline_mode = #tpu.pipeline_mode<synchronous>, transform_indices = @transform_5, window_bounds = array<i64: 128, 128>}, {pipeline_mode = #tpu.pipeline_mode<synchronous>, transform_indices = @transform_6, window_bounds = array<i64: 1, 128>}, {pipeline_mode = #tpu.pipeline_mode<synchronous>, transform_indices = @transform_7, window_bounds = array<i64: 128, 128>}, {pipeline_mode = #tpu.pipeline_mode<synchronous>, transform_indices = @transform_8, window_bounds = array<i64: 1, 128>}, {transform_indices = @transform_9, window_bounds = array<i64: 256, 128>}, {transform_indices = @transform_10, window_bounds = array<i64: 256, 128>}]} {
    %c0 = arith.constant 0 : index
    %c0_0 = arith.constant 0 : index
    %0 = vector.load %arg1[%c0, %c0_0] : memref<256x128xf32, #tpu.memory_space<vmem>>, vector<256x128xf32>
    %c0_1 = arith.constant 0 : index
    %c0_2 = arith.constant 0 : index
    %1 = vector.load %arg2[%c0_1, %c0_2] : memref<128x128xf32, #tpu.memory_space<vmem>>, vector<128x128xf32>
    %cst = arith.constant dense<0.000000e+00> : vector<256x128xf32>
    %2 = tpu.matmul %0, %1, %cst {dimension_numbers = #tpu.dot_dimension_numbers<[1], [0], [0], [1], [0, 0, 1, 1], [], []>} : vector<256x128xf32>, vector<128x128xf32>, vector<256x128xf32> -> vector<256x128xf32>
    %c0_3 = arith.constant 0 : index
    %c0_4 = arith.constant 0 : index
    %3 = vector.load %arg3[%c0_3, %c0_4] : memref<1x128xf32, #tpu.memory_space<vmem>>, vector<1x128xf32>
    %4 = vector.broadcast %3 : vector<1x128xf32> to vector<256x128xf32>
    %5 = arith.addf %2, %4 : vector<256x128xf32>
    %cst_5 = arith.constant 0.000000e+00 : f32
    %6 = vector.broadcast %cst_5 : f32 to vector<256x128xf32>
    %7 = arith.maximumf %5, %6 : vector<256x128xf32>
    %c0_6 = arith.constant 0 : index
    %c0_7 = arith.constant 0 : index
    %8 = vector.load %arg4[%c0_6, %c0_7] : memref<128x128xf32, #tpu.memory_space<vmem>>, vector<128x128xf32>
    %cst_8 = arith.constant dense<0.000000e+00> : vector<256x128xf32>
    %9 = tpu.matmul %7, %8, %cst_8 {dimension_numbers = #tpu.dot_dimension_numbers<[1], [0], [0], [1], [0, 0, 1, 1], [], []>} : vector<256x128xf32>, vector<128x128xf32>, vector<256x128xf32> -> vector<256x128xf32>
    %c0_9 = arith.constant 0 : index
    %c0_10 = arith.constant 0 : index
    %10 = vector.load %arg5[%c0_9, %c0_10] : memref<1x128xf32, #tpu.memory_space<vmem>>, vector<1x128xf32>
    %11 = vector.broadcast %10 : vector<1x128xf32> to vector<256x128xf32>
    %12 = arith.addf %9, %11 : vector<256x128xf32>
    %c0_11 = arith.constant 0 : index
    %c0_12 = arith.constant 0 : index
    %13 = vector.load %arg6[%c0_11, %c0_12] : memref<128x128xf32, #tpu.memory_space<vmem>>, vector<128x128xf32>
    %cst_13 = arith.constant dense<0.000000e+00> : vector<256x128xf32>
    %14 = tpu.matmul %12, %13, %cst_13 {dimension_numbers = #tpu.dot_dimension_numbers<[1], [0], [0], [1], [0, 0, 1, 1], [], []>} : vector<256x128xf32>, vector<128x128xf32>, vector<256x128xf32> -> vector<256x128xf32>
    %c0_14 = arith.constant 0 : index
    %c0_15 = arith.constant 0 : index
    %15 = vector.load %arg7[%c0_14, %c0_15] : memref<1x128xf32, #tpu.memory_space<vmem>>, vector<1x128xf32>
    %16 = vector.broadcast %15 : vector<1x128xf32> to vector<256x128xf32>
    %17 = arith.addf %14, %16 : vector<256x128xf32>
    %cst_16 = arith.constant 0.000000e+00 : f32
    %18 = vector.broadcast %cst_16 : f32 to vector<256x128xf32>
    %19 = arith.maximumf %17, %18 : vector<256x128xf32>
    %c0_17 = arith.constant 0 : index
    %c0_18 = arith.constant 0 : index
    %20 = vector.load %arg8[%c0_17, %c0_18] : memref<128x128xf32, #tpu.memory_space<vmem>>, vector<128x128xf32>
    %cst_19 = arith.constant dense<0.000000e+00> : vector<256x128xf32>
    %21 = tpu.matmul %19, %20, %cst_19 {dimension_numbers = #tpu.dot_dimension_numbers<[1], [0], [0], [1], [0, 0, 1, 1], [], []>} : vector<256x128xf32>, vector<128x128xf32>, vector<256x128xf32> -> vector<256x128xf32>
    %c0_20 = arith.constant 0 : index
    %c0_21 = arith.constant 0 : index
    %22 = vector.load %arg9[%c0_20, %c0_21] : memref<1x128xf32, #tpu.memory_space<vmem>>, vector<1x128xf32>
    %23 = vector.broadcast %22 : vector<1x128xf32> to vector<256x128xf32>
    %24 = arith.addf %21, %23 : vector<256x128xf32>
    %c0_22 = arith.constant 0 : index
    %c0_23 = arith.constant 0 : index
    %25 = vector.load %arg11[%c0_22, %c0_23] : memref<256x128xf32, #tpu.memory_space<vmem>>, vector<256x128xf32>
    tpu.vector_store %arg11[%c0_22, %c0_23], %12 {strides = array<i32>} : memref<256x128xf32, #tpu.memory_space<vmem>>, vector<256x128xf32>,
    %c0_24 = arith.constant 0 : index
    %c0_25 = arith.constant 0 : index
    %26 = vector.load %arg10[%c0_24, %c0_25] : memref<256x128xf32, #tpu.memory_space<vmem>>, vector<256x128xf32>
    tpu.vector_store %arg10[%c0_24, %c0_25], %24 {strides = array<i32>} : memref<256x128xf32, #tpu.memory_space<vmem>>, vector<256x128xf32>,
    return
  }
  func.func @transform_0(%arg0: i32) -> (i32, i32) {
    %c0_i32 = arith.constant 0 : i32
    %c0_i32_0 = arith.constant 0 : i32
    return %arg0, %c0_i32 : i32, i32
  }
  func.func @transform_1(%arg0: i32) -> (i32, i32) {
    %c0_i32 = arith.constant 0 : i32
    %c0_i32_0 = arith.constant 0 : i32
    %c0_i32_1 = arith.constant 0 : i32
    return %c0_i32, %c0_i32_0 : i32, i32
  }
  func.func @transform_2(%arg0: i32) -> (i32, i32) {
    %c0_i32 = arith.constant 0 : i32
    %c0_i32_0 = arith.constant 0 : i32
    %c0_i32_1 = arith.constant 0 : i32
    return %c0_i32, %c0_i32_0 : i32, i32
  }
  func.func @transform_3(%arg0: i32) -> (i32, i32) {
    %c0_i32 = arith.constant 0 : i32
    %c0_i32_0 = arith.constant 0 : i32
    %c0_i32_1 = arith.constant 0 : i32
    return %c0_i32, %c0_i32_0 : i32, i32
  }
  func.func @transform_4(%arg0: i32) -> (i32, i32) {
    %c0_i32 = arith.constant 0 : i32
    %c0_i32_0 = arith.constant 0 : i32
    %c0_i32_1 = arith.constant 0 : i32
    return %c0_i32, %c0_i32_0 : i32, i32
  }
  func.func @transform_5(%arg0: i32) -> (i32, i32) {
    %c0_i32 = arith.constant 0 : i32
    %c0_i32_0 = arith.constant 0 : i32
    %c0_i32_1 = arith.constant 0 : i32
    return %c0_i32, %c0_i32_0 : i32, i32
  }
  func.func @transform_6(%arg0: i32) -> (i32, i32) {
    %c0_i32 = arith.constant 0 : i32
    %c0_i32_0 = arith.constant 0 : i32
    %c0_i32_1 = arith.constant 0 : i32
    return %c0_i32, %c0_i32_0 : i32, i32
  }
  func.func @transform_7(%arg0: i32) -> (i32, i32) {
    %c0_i32 = arith.constant 0 : i32
    %c0_i32_0 = arith.constant 0 : i32
    %c0_i32_1 = arith.constant 0 : i32
    return %c0_i32, %c0_i32_0 : i32, i32
  }
  func.func @transform_8(%arg0: i32) -> (i32, i32) {
    %c0_i32 = arith.constant 0 : i32
    %c0_i32_0 = arith.constant 0 : i32
    %c0_i32_1 = arith.constant 0 : i32
    return %c0_i32, %c0_i32_0 : i32, i32
  }
  func.func @transform_9(%arg0: i32) -> (i32, i32) {
    %c0_i32 = arith.constant 0 : i32
    %c0_i32_0 = arith.constant 0 : i32
    return %arg0, %c0_i32 : i32, i32
  }
  func.func @transform_10(%arg0: i32) -> (i32, i32) {
    %c0_i32 = arith.constant 0 : i32
    %c0_i32_0 = arith.constant 0 : i32
    return %arg0, %c0_i32 : i32, i32
  }
}

</mosaic_0001>

<llo_original>
// kernel: tpu_custom_call.1
$region0: #{tpu_custom_call.1}
  #allocation0 [shape = 'u32[]', space=smem, size = 0x4, offset = 0x4, fixed_abs, tag = 'smem constant byte address 0x4 - core index']
  #allocation1 [shape = 'u32[144,128]{1,0:T(1,128)}', space=vmem, size = 0x12000, scoped, tag = 'internal scratch']
  %s0 = inlined_call_operand.hbm [shape: f32[256,128], index: 0, kind: input, shape index: {}]
  %s1 = inlined_call_operand.hbm [shape: f32[128,128], index: 1, kind: input, shape index: {}]
  %s2 = inlined_call_operand.vmem [shape: f32[1,128], index: 2, kind: input, shape index: {}]
  %s3 = inlined_call_operand.hbm [shape: f32[128,128], index: 3, kind: input, shape index: {}]
  %s4 = inlined_call_operand.vmem [shape: f32[1,128], index: 4, kind: input, shape index: {}]
  %s5 = inlined_call_operand.hbm [shape: f32[128,128], index: 5, kind: input, shape index: {}]
  %s6 = inlined_call_operand.vmem [shape: f32[1,128], index: 6, kind: input, shape index: {}]
  %s7 = inlined_call_operand.hbm [shape: f32[128,128], index: 7, kind: input, shape index: {}]
  %s8 = inlined_call_operand.vmem [shape: f32[1,128], index: 8, kind: input, shape index: {}]
  %s9 = inlined_call_operand.hbm [shape: f32[256,128], index: 9, kind: output, shape index: {0}]
  %s10 = inlined_call_operand.hbm [shape: f32[256,128], index: 10, kind: output, shape index: {1}]
  %11 = xla_tuple %s9, %s10
  %s12 = sld [smem:[#allocation0]]
  $region74: #{tpu_custom_call.1} parent=0
    _
  %s14 = ssub.s32 1, %s12
  %s15 = scalar_select 0, %s14, %s12
  $region1: #{tpu_custom_call.1} parent=0
    #allocation2 [shape = 'u8[131072]{0}', space=vmem, size = 0x20000, scoped, tag = 'input window, operand 0, single buffered']
    #allocation3 [shape = 's32[1]{0}', space=sflag, size = 0x4, scoped, tag = 'scoped memory for tpu_custom_call.1']
    #allocation4 [shape = 's32[1]{0}', space=sflag, size = 0x4, scoped, tag = 'scoped memory for tpu_custom_call.1']
    #allocation5 [shape = 'u8[65536]{0}', space=vmem, size = 0x10000, scoped, tag = 'input window, operand 1, single buffered']
    #allocation6 [shape = 's32[1]{0}', space=sflag, size = 0x4, scoped, tag = 'scoped memory for tpu_custom_call.1']
    #allocation7 [shape = 'u8[65536]{0}', space=vmem, size = 0x10000, scoped, tag = 'input window, operand 3, single buffered']
    #allocation8 [shape = 'u8[65536]{0}', space=vmem, size = 0x10000, scoped, tag = 'input window, operand 5, single buffered']
    #allocation9 [shape = 's32[1]{0}', space=sflag, size = 0x4, scoped, tag = 'scoped memory for tpu_custom_call.1']
    #allocation10 [shape = 'u8[65536]{0}', space=vmem, size = 0x10000, scoped, tag = 'input window, operand 7, single buffered']
    #allocation11 [shape = 'u8[131072]{0}', space=vmem, size = 0x20000, scoped, tag = 'output window, operand 0, single buffered']
    #allocation12 [shape = 'u8[131072]{0}', space=vmem, size = 0x20000, scoped, tag = 'output window, operand 1, single buffered']
    #allocation13 [shape = 's32[1]{0}', space=sflag, size = 0x4, scoped, tag = 'scoped memory for tpu_custom_call.1']
    %16 = vsyncpa [#allocation3], 0
    %17 = vsyncpa [#allocation6], 0
    %18 = vsyncpa [#allocation9], 0
    %19 = vsyncpa [#allocation4], 0
    %20 = vsyncpa [#allocation13], 0
    // Predicated region
    $region2: #{tpu_custom_call.1} parent=1 // pred_check
      _
    $region3: #{tpu_custom_call.1} parent=1 // pred_check_branch
      %22 = sbr.rel (0) target = $region5
    $region4: #{tpu_custom_call.1} parent=1 // pred_region
      %s24 = ssub.s32 4096, 4096
      %25 = vsyncadd [#allocation3], %s24
      %s26 = sshll.u32 [#allocation2], 4
      %s27 = int_to_ptr.vmem [resolvable:$true] %s26
      %32 = dma.hbm_to_vmem [thread:$0]  %s0, 4096, %s27, [#allocation3], 128, 128, 8
    $region5: #{tpu_custom_call.1} parent=1 // pred_fallthru
      _
    // Predicated region
    $region6: #{tpu_custom_call.1} parent=1 // pred_check
      _
    $region7: #{tpu_custom_call.1} parent=1 // pred_check_branch
      %34 = sbr.rel (0) target = $region9
    $region8: #{tpu_custom_call.1} parent=1 // pred_region
      %s36 = ssub.s32 2048, 2048
      %37 = vsyncadd [#allocation6], %s36
      %s38 = sshll.u32 [#allocation5], 4
      %s39 = int_to_ptr.vmem [resolvable:$true] %s38
      %44 = dma.hbm_to_vmem [thread:$0]  %s1, 2048, %s39, [#allocation6], 128, 128, 8
    $region9: #{tpu_custom_call.1} parent=1 // pred_fallthru
      _
    // Predicated region
    $region10: #{tpu_custom_call.1} parent=1 // pred_check
      _
    $region11: #{tpu_custom_call.1} parent=1 // pred_check_branch
      %46 = sbr.rel (0) target = $region13
    $region12: #{tpu_custom_call.1} parent=1 // pred_region
      _
    $region13: #{tpu_custom_call.1} parent=1 // pred_fallthru
      _
    // Predicated region
    $region14: #{tpu_custom_call.1} parent=1 // pred_check
      _
    $region15: #{tpu_custom_call.1} parent=1 // pred_check_branch
      %48 = sbr.rel (0) target = $region17
    $region16: #{tpu_custom_call.1} parent=1 // pred_region
      %s50 = ssub.s32 2048, 2048
      %51 = vsyncadd [#allocation6], %s50
      %s52 = sshll.u32 [#allocation7], 4
      %s53 = int_to_ptr.vmem [resolvable:$true] %s52
      %58 = dma.hbm_to_vmem [thread:$0]  %s3, 2048, %s53, [#allocation6], 128, 128, 8
    $region17: #{tpu_custom_call.1} parent=1 // pred_fallthru
      _
    // Predicated region
    $region18: #{tpu_custom_call.1} parent=1 // pred_check
      _
    $region19: #{tpu_custom_call.1} parent=1 // pred_check_branch
      %60 = sbr.rel (0) target = $region21
    $region20: #{tpu_custom_call.1} parent=1 // pred_region
      _
    $region21: #{tpu_custom_call.1} parent=1 // pred_fallthru
      _
    // Predicated region
    $region22: #{tpu_custom_call.1} parent=1 // pred_check
      _
    $region23: #{tpu_custom_call.1} parent=1 // pred_check_branch
      %62 = sbr.rel (0) target = $region25
    $region24: #{tpu_custom_call.1} parent=1 // pred_region
      %s64 = ssub.s32 2048, 2048
      %65 = vsyncadd [#allocation9], %s64
      %s66 = sshll.u32 [#allocation8], 4
      %s67 = int_to_ptr.vmem [resolvable:$true] %s66
      %72 = dma.hbm_to_vmem [thread:$0]  %s5, 2048, %s67, [#allocation9], 128, 128, 8
    $region25: #{tpu_custom_call.1} parent=1 // pred_fallthru
      _
    // Predicated region
    $region26: #{tpu_custom_call.1} parent=1 // pred_check
      _
    $region27: #{tpu_custom_call.1} parent=1 // pred_check_branch
      %74 = sbr.rel (0) target = $region29
    $region28: #{tpu_custom_call.1} parent=1 // pred_region
      _
    $region29: #{tpu_custom_call.1} parent=1 // pred_fallthru
      _
    // Predicated region
    $region30: #{tpu_custom_call.1} parent=1 // pred_check
      _
    $region31: #{tpu_custom_call.1} parent=1 // pred_check_branch
      %76 = sbr.rel (0) target = $region33
    $region32: #{tpu_custom_call.1} parent=1 // pred_region
      %s78 = ssub.s32 2048, 2048
      %79 = vsyncadd [#allocation9], %s78
      %s80 = sshll.u32 [#allocation10], 4
      %s81 = int_to_ptr.vmem [resolvable:$true] %s80
      %86 = dma.hbm_to_vmem [thread:$0]  %s7, 2048, %s81, [#allocation9], 128, 128, 8
    $region33: #{tpu_custom_call.1} parent=1 // pred_fallthru
      _
    // Predicated region
    $region34: #{tpu_custom_call.1} parent=1 // pred_check
      _
    $region35: #{tpu_custom_call.1} parent=1 // pred_check_branch
      %88 = sbr.rel (0) target = $region37
    $region36: #{tpu_custom_call.1} parent=1 // pred_region
      _
    $region37: #{tpu_custom_call.1} parent=1 // pred_fallthru
      _
    // Predicated region
    $region38: #{tpu_custom_call.1} parent=1 // pred_check
      _
    $region39: #{tpu_custom_call.1} parent=1 // pred_check_branch
      %90 = sbr.rel (0) target = $region41
    $region40: #{tpu_custom_call.1} parent=1 // pred_region
      %91 = dma.done [#allocation3], 4096
    $region41: #{tpu_custom_call.1} parent=1 // pred_fallthru
      _
    // Predicated region
    $region42: #{tpu_custom_call.1} parent=1 // pred_check
      _
    $region43: #{tpu_custom_call.1} parent=1 // pred_check_branch
      %93 = sbr.rel (0) target = $region45
    $region44: #{tpu_custom_call.1} parent=1 // pred_region
      %94 = dma.done [#allocation6], 2048
    $region45: #{tpu_custom_call.1} parent=1 // pred_fallthru
      _
    // Predicated region
    $region46: #{tpu_custom_call.1} parent=1 // pred_check
      _
    $region47: #{tpu_custom_call.1} parent=1 // pred_check_branch
      %96 = sbr.rel (0) target = $region49
    $region48: #{tpu_custom_call.1} parent=1 // pred_region
      %97 = dma.done [#allocation6], 2048
    $region49: #{tpu_custom_call.1} parent=1 // pred_fallthru
      _
    // Predicated region
    $region50: #{tpu_custom_call.1} parent=1 // pred_check
      _
    $region51: #{tpu_custom_call.1} parent=1 // pred_check_branch
      %99 = sbr.rel (0) target = $region53
    $region52: #{tpu_custom_call.1} parent=1 // pred_region
      %100 = dma.done [#allocation9], 2048
    $region53: #{tpu_custom_call.1} parent=1 // pred_fallthru
      _
    // Predicated region
    $region54: #{tpu_custom_call.1} parent=1 // pred_check
      _
    $region55: #{tpu_custom_call.1} parent=1 // pred_check_branch
      %102 = sbr.rel (0) target = $region57
    $region56: #{tpu_custom_call.1} parent=1 // pred_region
      %103 = dma.done [#allocation9], 2048
    $region57: #{tpu_custom_call.1} parent=1 // pred_fallthru
      _
    %v104 = vld [vmem:[#allocation2] sm:$0xff]
    %v105 = vld [vmem:[#allocation2 + $0x8] sm:$0xff]
    %v106 = vld [vmem:[#allocation2 + $0x10] sm:$0xff]
    %v107 = vld [vmem:[#allocation2 + $0x18] sm:$0xff]
    %v108 = vld [vmem:[#allocation2 + $0x20] sm:$0xff]
    %v109 = vld [vmem:[#allocation2 + $0x28] sm:$0xff]
    %v110 = vld [vmem:[#allocation2 + $0x30] sm:$0xff]
    %v111 = vld [vmem:[#allocation2 + $0x38] sm:$0xff]
    %v112 = vld [vmem:[#allocation2 + $0x40] sm:$0xff]
    %v113 = vld [vmem:[#allocation2 + $0x48] sm:$0xff]
    %v114 = vld [vmem:[#allocation2 + $0x50] sm:$0xff]
    %v115 = vld [vmem:[#allocation2 + $0x58] sm:$0xff]
    %v116 = vld [vmem:[#allocation2 + $0x60] sm:$0xff]
    %v117 = vld [vmem:[#allocation2 + $0x68] sm:$0xff]
    %v118 = vld [vmem:[#allocation2 + $0x70] sm:$0xff]
    %v119 = vld [vmem:[#allocation2 + $0x78] sm:$0xff]
    %v120 = vld [vmem:[#allocation2 + $0x80] sm:$0xff]
    %v121 = vld [vmem:[#allocation2 + $0x88] sm:$0xff]
    %v122 = vld [vmem:[#allocation2 + $0x90] sm:$0xff]
    %v123 = vld [vmem:[#allocation2 + $0x98] sm:$0xff]
    %v124 = vld [vmem:[#allocation2 + $0xa0] sm:$0xff]
    %v125 = vld [vmem:[#allocation2 + $0xa8] sm:$0xff]
    %v126 = vld [vmem:[#allocation2 + $0xb0] sm:$0xff]
    %v127 = vld [vmem:[#allocation2 + $0xb8] sm:$0xff]
    %v128 = vld [vmem:[#allocation2 + $0xc0] sm:$0xff]
    %v129 = vld [vmem:[#allocation2 + $0xc8] sm:$0xff]
    %v130 = vld [vmem:[#allocation2 + $0xd0] sm:$0xff]
    %v131 = vld [vmem:[#allocation2 + $0xd8] sm:$0xff]
    %v132 = vld [vmem:[#allocation2 + $0xe0] sm:$0xff]
    %v133 = vld [vmem:[#allocation2 + $0xe8] sm:$0xff]
    %v134 = vld [vmem:[#allocation2 + $0xf0] sm:$0xff]
    %v135 = vld [vmem:[#allocation2 + $0xf8] sm:$0xff]
    %v136 = vld [vmem:[#allocation5] sm:$0xff]
    %v137 = vld [vmem:[#allocation5 + $0x8] sm:$0xff]
    %v138 = vld [vmem:[#allocation5 + $0x10] sm:$0xff]
    %v139 = vld [vmem:[#allocation5 + $0x18] sm:$0xff]
    %v140 = vld [vmem:[#allocation5 + $0x20] sm:$0xff]
    %v141 = vld [vmem:[#allocation5 + $0x28] sm:$0xff]
    %v142 = vld [vmem:[#allocation5 + $0x30] sm:$0xff]
    %v143 = vld [vmem:[#allocation5 + $0x38] sm:$0xff]
    %v144 = vld [vmem:[#allocation5 + $0x40] sm:$0xff]
    %v145 = vld [vmem:[#allocation5 + $0x48] sm:$0xff]
    %v146 = vld [vmem:[#allocation5 + $0x50] sm:$0xff]
    %v147 = vld [vmem:[#allocation5 + $0x58] sm:$0xff]
    %v148 = vld [vmem:[#allocation5 + $0x60] sm:$0xff]
    %v149 = vld [vmem:[#allocation5 + $0x68] sm:$0xff]
    %v150 = vld [vmem:[#allocation5 + $0x70] sm:$0xff]
    %v151 = vld [vmem:[#allocation5 + $0x78] sm:$0xff]
    %v152 = vld [vmem:[%s2] sm:$0x1]
    %v154 = vlaneseq
    %v155 = vshrl.u32 %v154, 7
    %v156 = vsub.s32 0, %v155
    %v157 = vrot.slane %v152, %v156
    %159 = vmatprep.subr.mxu0 0.0
    %160 = vmatpush1.msra.mxu0 %v136
    %161 = vmatprep.subr.mxu0 0.0
    %162 = vmatpush1.msra.mxu0 %v137
    %163 = vmatprep.subr.mxu0 0.0
    %164 = vmatpush1.msra.mxu0 %v138
    %165 = vmatprep.subr.mxu0 0.0
    %166 = vmatpush1.msra.mxu0 %v139
    %167 = vmatprep.subr.mxu0 0.0
    %168 = vmatpush1.msra.mxu0 %v140
    %169 = vmatprep.subr.mxu0 0.0
    %170 = vmatpush1.msra.mxu0 %v141
    %171 = vmatprep.subr.mxu0 0.0
    %172 = vmatpush1.msra.mxu0 %v142
    %173 = vmatprep.subr.mxu0 0.0
    %174 = vmatpush1.msra.mxu0 %v143
    %175 = vmatprep.subr.mxu0 0.0
    %176 = vmatpush1.msra.mxu0 %v144
    %177 = vmatprep.subr.mxu0 0.0
    %178 = vmatpush1.msra.mxu0 %v145
    %179 = vmatprep.subr.mxu0 0.0
    %180 = vmatpush1.msra.mxu0 %v146
    %181 = vmatprep.subr.mxu0 0.0
    %182 = vmatpush1.msra.mxu0 %v147
    %183 = vmatprep.subr.mxu0 0.0
    %184 = vmatpush1.msra.mxu0 %v148
    %185 = vmatprep.subr.mxu0 0.0
    %186 = vmatpush1.msra.mxu0 %v149
    %187 = vmatprep.subr.mxu0 0.0
    %188 = vmatpush1.msra.mxu0 %v150
    %189 = vmatprep.subr.mxu0 0.0
    %190 = vmatpush1.msra.mxu0 %v151
    %191 = vmatprep.subr.mxu0 0.0
    %192 = vmatpush1.msra.mxu0 0.0
    %193 = vmatprep.subr.mxu0 0.0
    %194 = vmatpush1.msra.mxu0 0.0
    %195 = vmatprep.subr.mxu0 0.0
    %196 = vmatpush1.msra.mxu0 0.0
    %197 = vmatprep.subr.mxu0 0.0
    %198 = vmatpush1.msra.mxu0 0.0
    %199 = vmatprep.subr.mxu0 0.0
    %200 = vmatpush1.msra.mxu0 0.0
    %201 = vmatprep.subr.mxu0 0.0
    %202 = vmatpush1.msra.mxu0 0.0
    %203 = vmatprep.subr.mxu0 0.0
    %204 = vmatpush1.msra.mxu0 0.0
    %205 = vmatprep.subr.mxu0 0.0
    %206 = vmatpush1.msra.mxu0 0.0
    %207 = vmatprep.subr.mxu0 0.0
    %208 = vmatpush1.msra.mxu0 0.0
    %209 = vmatprep.subr.mxu0 0.0
    %210 = vmatpush1.msra.mxu0 0.0
    %211 = vmatprep.subr.mxu0 0.0
    %212 = vmatpush1.msra.mxu0 0.0
    %213 = vmatprep.subr.mxu0 0.0
    %214 = vmatpush1.msra.mxu0 0.0
    %215 = vmatprep.subr.mxu0 0.0
    %216 = vmatpush1.msra.mxu0 0.0
    %217 = vmatprep.subr.mxu0 0.0
    %218 = vmatpush1.msra.mxu0 0.0
    %219 = vmatprep.subr.mxu0 0.0
    %220 = vmatpush1.msra.mxu0 0.0
    %221 = vmatprep.subr.mxu0 0.0
    %222 = vmatpush1.msra.mxu0 0.0
    %223 = vmatprep.mubr.f32.mxu0 0.0
    %224 = vmatmul.mubr.f32.gmra.mrb[0].mxu0 %v104
    %v225 = vpop.f32.mrb[0].mxu0
    %v226 = vadd.f32 %v157, %v225
    %v227 = vpop.f32.mrb[0].mxu0
    %228 = vmatprep.mubr.f32.mxu0 0.0
    %229 = vmatmul.mubr.f32.gmra.mrb[0].mxu0 %v105
    %v230 = vpop.f32.mrb[0].mxu0
    %v231 = vadd.f32 %v157, %v230
    %v232 = vpop.f32.mrb[0].mxu0
    %233 = vmatprep.mubr.f32.mxu0 0.0
    %234 = vmatmul.mubr.f32.gmra.mrb[0].mxu0 %v106
    %v235 = vpop.f32.mrb[0].mxu0
    %v236 = vadd.f32 %v157, %v235
    %v237 = vpop.f32.mrb[0].mxu0
    %238 = vmatprep.mubr.f32.mxu0 0.0
    %239 = vmatmul.mubr.f32.gmra.mrb[0].mxu0 %v107
    %v240 = vpop.f32.mrb[0].mxu0
    %v241 = vadd.f32 %v157, %v240
    %v242 = vpop.f32.mrb[0].mxu0
    %243 = vmatprep.mubr.f32.mxu0 0.0
    %244 = vmatmul.mubr.f32.gmra.mrb[0].mxu0 %v108
    %v245 = vpop.f32.mrb[0].mxu0
    %v246 = vadd.f32 %v157, %v245
    %v247 = vpop.f32.mrb[0].mxu0
    %248 = vmatprep.mubr.f32.mxu0 0.0
    %249 = vmatmul.mubr.f32.gmra.mrb[0].mxu0 %v109
    %v250 = vpop.f32.mrb[0].mxu0
    %v251 = vadd.f32 %v157, %v250
    %v252 = vpop.f32.mrb[0].mxu0
    %253 = vmatprep.mubr.f32.mxu0 0.0
    %254 = vmatmul.mubr.f32.gmra.mrb[0].mxu0 %v110
    %v255 = vpop.f32.mrb[0].mxu0
    %v256 = vadd.f32 %v157, %v255
    %v257 = vpop.f32.mrb[0].mxu0
    %258 = vmatprep.mubr.f32.mxu0 0.0
    %259 = vmatmul.mubr.f32.gmra.mrb[0].mxu0 %v111
    %v260 = vpop.f32.mrb[0].mxu0
    %v261 = vadd.f32 %v157, %v260
    %v262 = vpop.f32.mrb[0].mxu0
    %263 = vmatprep.mubr.f32.mxu0 0.0
    %264 = vmatmul.mubr.f32.gmra.mrb[0].mxu0 %v112
    %v265 = vpop.f32.mrb[0].mxu0
    %v266 = vadd.f32 %v157, %v265
    %v267 = vpop.f32.mrb[0].mxu0
    %268 = vmatprep.mubr.f32.mxu0 0.0
    %269 = vmatmul.mubr.f32.gmra.mrb[0].mxu0 %v113
    %v270 = vpop.f32.mrb[0].mxu0
    %v271 = vadd.f32 %v157, %v270
    %v272 = vpop.f32.mrb[0].mxu0
    %273 = vmatprep.mubr.f32.mxu0 0.0
    %274 = vmatmul.mubr.f32.gmra.mrb[0].mxu0 %v114
    %v275 = vpop.f32.mrb[0].mxu0
    %v276 = vadd.f32 %v157, %v275
    %v277 = vpop.f32.mrb[0].mxu0
    %278 = vmatprep.mubr.f32.mxu0 0.0
    %279 = vmatmul.mubr.f32.gmra.mrb[0].mxu0 %v115
    %v280 = vpop.f32.mrb[0].mxu0
    %v281 = vadd.f32 %v157, %v280
    %v282 = vpop.f32.mrb[0].mxu0
    %283 = vmatprep.mubr.f32.mxu0 0.0
    %284 = vmatmul.mubr.f32.gmra.mrb[0].mxu0 %v116
    %v285 = vpop.f32.mrb[0].mxu0
    %v286 = vadd.f32 %v157, %v285
    %v287 = vpop.f32.mrb[0].mxu0
    %288 = vmatprep.mubr.f32.mxu0 0.0
    %289 = vmatmul.mubr.f32.gmra.mrb[0].mxu0 %v117
    %v290 = vpop.f32.mrb[0].mxu0
    %v291 = vadd.f32 %v157, %v290
    %v292 = vpop.f32.mrb[0].mxu0
    %293 = vmatprep.mubr.f32.mxu0 0.0
    %294 = vmatmul.mubr.f32.gmra.mrb[0].mxu0 %v118
    %v295 = vpop.f32.mrb[0].mxu0
    %v296 = vadd.f32 %v157, %v295
    %v297 = vpop.f32.mrb[0].mxu0
    %298 = vmatprep.mubr.f32.mxu0 0.0
    %299 = vmatmul.mubr.f32.gmra.mrb[0].mxu0 %v119
    %v300 = vpop.f32.mrb[0].mxu0
    %v301 = vadd.f32 %v157, %v300
    %v302 = vpop.f32.mrb[0].mxu0
    %303 = vmatprep.mubr.f32.mxu0 0.0
    %304 = vmatmul.mubr.f32.gmra.mrb[0].mxu0 %v120
    %v305 = vpop.f32.mrb[0].mxu0
    %v306 = vadd.f32 %v157, %v305
    %v307 = vpop.f32.mrb[0].mxu0
    %308 = vmatprep.mubr.f32.mxu0 0.0
    %309 = vmatmul.mubr.f32.gmra.mrb[0].mxu0 %v121
    %v310 = vpop.f32.mrb[0].mxu0
    %v311 = vadd.f32 %v157, %v310
    %v312 = vpop.f32.mrb[0].mxu0
    %313 = vmatprep.mubr.f32.mxu0 0.0
    %314 = vmatmul.mubr.f32.gmra.mrb[0].mxu0 %v122
    %v315 = vpop.f32.mrb[0].mxu0
    %v316 = vadd.f32 %v157, %v315
    %v317 = vpop.f32.mrb[0].mxu0
    %318 = vmatprep.mubr.f32.mxu0 0.0
    %319 = vmatmul.mubr.f32.gmra.mrb[0].mxu0 %v123
    %v320 = vpop.f32.mrb[0].mxu0
    %v321 = vadd.f32 %v157, %v320
    %v322 = vpop.f32.mrb[0].mxu0
    %323 = vmatprep.mubr.f32.mxu0 0.0
    %324 = vmatmul.mubr.f32.gmra.mrb[0].mxu0 %v124
    %v325 = vpop.f32.mrb[0].mxu0
    %v326 = vadd.f32 %v157, %v325
    %v327 = vpop.f32.mrb[0].mxu0
    %328 = vmatprep.mubr.f32.mxu0 0.0
    %329 = vmatmul.mubr.f32.gmra.mrb[0].mxu0 %v125
    %v330 = vpop.f32.mrb[0].mxu0
    %v331 = vadd.f32 %v157, %v330
    %v332 = vpop.f32.mrb[0].mxu0
    %333 = vmatprep.mubr.f32.mxu0 0.0
    %334 = vmatmul.mubr.f32.gmra.mrb[0].mxu0 %v126
    %v335 = vpop.f32.mrb[0].mxu0
    %v336 = vadd.f32 %v157, %v335
    %v337 = vpop.f32.mrb[0].mxu0
    %338 = vmatprep.mubr.f32.mxu0 0.0
    %339 = vmatmul.mubr.f32.gmra.mrb[0].mxu0 %v127
    %v340 = vpop.f32.mrb[0].mxu0
    %v341 = vadd.f32 %v157, %v340
    %v342 = vpop.f32.mrb[0].mxu0
    %343 = vmatprep.mubr.f32.mxu0 0.0
    %344 = vmatmul.mubr.f32.gmra.mrb[0].mxu0 %v128
    %v345 = vpop.f32.mrb[0].mxu0
    %v346 = vadd.f32 %v157, %v345
    %v347 = vpop.f32.mrb[0].mxu0
    %348 = vmatprep.mubr.f32.mxu0 0.0
    %349 = vmatmul.mubr.f32.gmra.mrb[0].mxu0 %v129
    %v350 = vpop.f32.mrb[0].mxu0
    %v351 = vadd.f32 %v157, %v350
    %v352 = vpop.f32.mrb[0].mxu0
    %353 = vmatprep.mubr.f32.mxu0 0.0
    %354 = vmatmul.mubr.f32.gmra.mrb[0].mxu0 %v130
    %v355 = vpop.f32.mrb[0].mxu0
    %v356 = vadd.f32 %v157, %v355
    %v357 = vpop.f32.mrb[0].mxu0
    %358 = vmatprep.mubr.f32.mxu0 0.0
    %359 = vmatmul.mubr.f32.gmra.mrb[0].mxu0 %v131
    %v360 = vpop.f32.mrb[0].mxu0
    %v361 = vadd.f32 %v157, %v360
    %v362 = vpop.f32.mrb[0].mxu0
    %363 = vmatprep.mubr.f32.mxu0 0.0
    %364 = vmatmul.mubr.f32.gmra.mrb[0].mxu0 %v132
    %v365 = vpop.f32.mrb[0].mxu0
    %v366 = vadd.f32 %v157, %v365
    %v367 = vpop.f32.mrb[0].mxu0
    %368 = vmatprep.mubr.f32.mxu0 0.0
    %369 = vmatmul.mubr.f32.gmra.mrb[0].mxu0 %v133
    %v370 = vpop.f32.mrb[0].mxu0
    %v371 = vadd.f32 %v157, %v370
    %v372 = vpop.f32.mrb[0].mxu0
    %373 = vmatprep.mubr.f32.mxu0 0.0
    %374 = vmatmul.mubr.f32.gmra.mrb[0].mxu0 %v134
    %v375 = vpop.f32.mrb[0].mxu0
    %v376 = vadd.f32 %v157, %v375
    %v377 = vpop.f32.mrb[0].mxu0
    %378 = vmatprep.mubr.f32.mxu0 0.0
    %379 = vmatmul.mubr.f32.gmra.mrb[0].mxu0 %v135
    %v380 = vpop.f32.mrb[0].mxu0
    %v381 = vadd.f32 %v157, %v380
    %v382 = vpop.f32.mrb[0].mxu0
    %383 = vdwg.mxu0
    %v384 = vmax.f32 %v226, 0.0
    %v385 = vmax.f32 %v231, 0.0
    %v386 = vmax.f32 %v236, 0.0
    %v387 = vmax.f32 %v241, 0.0
    %v388 = vmax.f32 %v246, 0.0
    %v389 = vmax.f32 %v251, 0.0
    %v390 = vmax.f32 %v256, 0.0
    %v391 = vmax.f32 %v261, 0.0
    %v392 = vmax.f32 %v266, 0.0
    %v393 = vmax.f32 %v271, 0.0
    %v394 = vmax.f32 %v276, 0.0
    %v395 = vmax.f32 %v281, 0.0
    %v396 = vmax.f32 %v286, 0.0
    %v397 = vmax.f32 %v291, 0.0
    %v398 = vmax.f32 %v296, 0.0
    %v399 = vmax.f32 %v301, 0.0
    %v400 = vmax.f32 %v306, 0.0
    %v401 = vmax.f32 %v311, 0.0
    %v402 = vmax.f32 %v316, 0.0
    %v403 = vmax.f32 %v321, 0.0
    %v404 = vmax.f32 %v326, 0.0
    %v405 = vmax.f32 %v331, 0.0
    %v406 = vmax.f32 %v336, 0.0
    %v407 = vmax.f32 %v341, 0.0
    %v408 = vmax.f32 %v346, 0.0
    %v409 = vmax.f32 %v351, 0.0
    %v410 = vmax.f32 %v356, 0.0
    %v411 = vmax.f32 %v361, 0.0
    %v412 = vmax.f32 %v366, 0.0
    %v413 = vmax.f32 %v371, 0.0
    %v414 = vmax.f32 %v376, 0.0
    %v415 = vmax.f32 %v381, 0.0
    %v416 = vld [vmem:[#allocation7] sm:$0xff]
    %v417 = vld [vmem:[#allocation7 + $0x8] sm:$0xff]
    %v418 = vld [vmem:[#allocation7 + $0x10] sm:$0xff]
    %v419 = vld [vmem:[#allocation7 + $0x18] sm:$0xff]
    %v420 = vld [vmem:[#allocation7 + $0x20] sm:$0xff]
    %v421 = vld [vmem:[#allocation7 + $0x28] sm:$0xff]
    %v422 = vld [vmem:[#allocation7 + $0x30] sm:$0xff]
    %v423 = vld [vmem:[#allocation7 + $0x38] sm:$0xff]
    %v424 = vld [vmem:[#allocation7 + $0x40] sm:$0xff]
    %v425 = vld [vmem:[#allocation7 + $0x48] sm:$0xff]
    %v426 = vld [vmem:[#allocation7 + $0x50] sm:$0xff]
    %v427 = vld [vmem:[#allocation7 + $0x58] sm:$0xff]
    %v428 = vld [vmem:[#allocation7 + $0x60] sm:$0xff]
    %v429 = vld [vmem:[#allocation7 + $0x68] sm:$0xff]
    %v430 = vld [vmem:[#allocation7 + $0x70] sm:$0xff]
    %v431 = vld [vmem:[#allocation7 + $0x78] sm:$0xff]
    %v432 = vld [vmem:[%s4] sm:$0x1]
    %v434 = vlaneseq
    %v435 = vshrl.u32 %v434, 7
    %v436 = vsub.s32 0, %v435
    %v437 = vrot.slane %v432, %v436
    %439 = vmatprep.subr.mxu0 0.0
    %440 = vmatpush1.msra.mxu0 %v416
    %441 = vmatprep.subr.mxu0 0.0
    %442 = vmatpush1.msra.mxu0 %v417
    %443 = vmatprep.subr.mxu0 0.0
    %444 = vmatpush1.msra.mxu0 %v418
    %445 = vmatprep.subr.mxu0 0.0
    %446 = vmatpush1.msra.mxu0 %v419
    %447 = vmatprep.subr.mxu0 0.0
    %448 = vmatpush1.msra.mxu0 %v420
    %449 = vmatprep.subr.mxu0 0.0
    %450 = vmatpush1.msra.mxu0 %v421
    %451 = vmatprep.subr.mxu0 0.0
    %452 = vmatpush1.msra.mxu0 %v422
    %453 = vmatprep.subr.mxu0 0.0
    %454 = vmatpush1.msra.mxu0 %v423
    %455 = vmatprep.subr.mxu0 0.0
    %456 = vmatpush1.msra.mxu0 %v424
    %457 = vmatprep.subr.mxu0 0.0
    %458 = vmatpush1.msra.mxu0 %v425
    %459 = vmatprep.subr.mxu0 0.0
    %460 = vmatpush1.msra.mxu0 %v426
    %461 = vmatprep.subr.mxu0 0.0
    %462 = vmatpush1.msra.mxu0 %v427
    %463 = vmatprep.subr.mxu0 0.0
    %464 = vmatpush1.msra.mxu0 %v428
    %465 = vmatprep.subr.mxu0 0.0
    %466 = vmatpush1.msra.mxu0 %v429
    %467 = vmatprep.subr.mxu0 0.0
    %468 = vmatpush1.msra.mxu0 %v430
    %469 = vmatprep.subr.mxu0 0.0
    %470 = vmatpush1.msra.mxu0 %v431
    %471 = vmatprep.subr.mxu0 0.0
    %472 = vmatpush1.msra.mxu0 0.0
    %473 = vmatprep.subr.mxu0 0.0
    %474 = vmatpush1.msra.mxu0 0.0
    %475 = vmatprep.subr.mxu0 0.0
    %476 = vmatpush1.msra.mxu0 0.0
    %477 = vmatprep.subr.mxu0 0.0
    %478 = vmatpush1.msra.mxu0 0.0
    %479 = vmatprep.subr.mxu0 0.0
    %480 = vmatpush1.msra.mxu0 0.0
    %481 = vmatprep.subr.mxu0 0.0
    %482 = vmatpush1.msra.mxu0 0.0
    %483 = vmatprep.subr.mxu0 0.0
    %484 = vmatpush1.msra.mxu0 0.0
    %485 = vmatprep.subr.mxu0 0.0
    %486 = vmatpush1.msra.mxu0 0.0
    %487 = vmatprep.subr.mxu0 0.0
    %488 = vmatpush1.msra.mxu0 0.0
    %489 = vmatprep.subr.mxu0 0.0
    %490 = vmatpush1.msra.mxu0 0.0
    %491 = vmatprep.subr.mxu0 0.0
    %492 = vmatpush1.msra.mxu0 0.0
    %493 = vmatprep.subr.mxu0 0.0
    %494 = vmatpush1.msra.mxu0 0.0
    %495 = vmatprep.subr.mxu0 0.0
    %496 = vmatpush1.msra.mxu0 0.0
    %497 = vmatprep.subr.mxu0 0.0
    %498 = vmatpush1.msra.mxu0 0.0
    %499 = vmatprep.subr.mxu0 0.0
    %500 = vmatpush1.msra.mxu0 0.0
    %501 = vmatprep.subr.mxu0 0.0
    %502 = vmatpush1.msra.mxu0 0.0
    %503 = vmatprep.mubr.f32.mxu0 0.0
    %504 = vmatmul.mubr.f32.gmra.mrb[0].mxu0 %v384
    %v505 = vpop.f32.mrb[0].mxu0
    %v506 = vadd.f32 %v437, %v505
    %v507 = vpop.f32.mrb[0].mxu0
    %508 = vmatprep.mubr.f32.mxu0 0.0
    %509 = vmatmul.mubr.f32.gmra.mrb[0].mxu0 %v385
    %v510 = vpop.f32.mrb[0].mxu0
    %v511 = vadd.f32 %v437, %v510
    %v512 = vpop.f32.mrb[0].mxu0
    %513 = vmatprep.mubr.f32.mxu0 0.0
    %514 = vmatmul.mubr.f32.gmra.mrb[0].mxu0 %v386
    %v515 = vpop.f32.mrb[0].mxu0
    %v516 = vadd.f32 %v437, %v515
    %v517 = vpop.f32.mrb[0].mxu0
    %518 = vmatprep.mubr.f32.mxu0 0.0
    %519 = vmatmul.mubr.f32.gmra.mrb[0].mxu0 %v387
    %v520 = vpop.f32.mrb[0].mxu0
    %v521 = vadd.f32 %v437, %v520
    %v522 = vpop.f32.mrb[0].mxu0
    %523 = vmatprep.mubr.f32.mxu0 0.0
    %524 = vmatmul.mubr.f32.gmra.mrb[0].mxu0 %v388
    %v525 = vpop.f32.mrb[0].mxu0
    %v526 = vadd.f32 %v437, %v525
    %v527 = vpop.f32.mrb[0].mxu0
    %528 = vmatprep.mubr.f32.mxu0 0.0
    %529 = vmatmul.mubr.f32.gmra.mrb[0].mxu0 %v389
    %v530 = vpop.f32.mrb[0].mxu0
    %v531 = vadd.f32 %v437, %v530
    %v532 = vpop.f32.mrb[0].mxu0
    %533 = vmatprep.mubr.f32.mxu0 0.0
    %534 = vmatmul.mubr.f32.gmra.mrb[0].mxu0 %v390
    %v535 = vpop.f32.mrb[0].mxu0
    %v536 = vadd.f32 %v437, %v535
    %v537 = vpop.f32.mrb[0].mxu0
    %538 = vmatprep.mubr.f32.mxu0 0.0
    %539 = vmatmul.mubr.f32.gmra.mrb[0].mxu0 %v391
    %v540 = vpop.f32.mrb[0].mxu0
    %v541 = vadd.f32 %v437, %v540
    %v542 = vpop.f32.mrb[0].mxu0
    %543 = vmatprep.mubr.f32.mxu0 0.0
    %544 = vmatmul.mubr.f32.gmra.mrb[0].mxu0 %v392
    %v545 = vpop.f32.mrb[0].mxu0
    %v546 = vadd.f32 %v437, %v545
    %v547 = vpop.f32.mrb[0].mxu0
    %548 = vmatprep.mubr.f32.mxu0 0.0
    %549 = vmatmul.mubr.f32.gmra.mrb[0].mxu0 %v393
    %v550 = vpop.f32.mrb[0].mxu0
    %v551 = vadd.f32 %v437, %v550
    %v552 = vpop.f32.mrb[0].mxu0
    %553 = vmatprep.mubr.f32.mxu0 0.0
    %554 = vmatmul.mubr.f32.gmra.mrb[0].mxu0 %v394
    %v555 = vpop.f32.mrb[0].mxu0
    %v556 = vadd.f32 %v437, %v555
    %v557 = vpop.f32.mrb[0].mxu0
    %558 = vmatprep.mubr.f32.mxu0 0.0
    %559 = vmatmul.mubr.f32.gmra.mrb[0].mxu0 %v395
    %v560 = vpop.f32.mrb[0].mxu0
    %v561 = vadd.f32 %v437, %v560
    %v562 = vpop.f32.mrb[0].mxu0
    %563 = vmatprep.mubr.f32.mxu0 0.0
    %564 = vmatmul.mubr.f32.gmra.mrb[0].mxu0 %v396
    %v565 = vpop.f32.mrb[0].mxu0
    %v566 = vadd.f32 %v437, %v565
    %v567 = vpop.f32.mrb[0].mxu0
    %568 = vmatprep.mubr.f32.mxu0 0.0
    %569 = vmatmul.mubr.f32.gmra.mrb[0].mxu0 %v397
    %v570 = vpop.f32.mrb[0].mxu0
    %v571 = vadd.f32 %v437, %v570
    %v572 = vpop.f32.mrb[0].mxu0
    %573 = vmatprep.mubr.f32.mxu0 0.0
    %574 = vmatmul.mubr.f32.gmra.mrb[0].mxu0 %v398
    %v575 = vpop.f32.mrb[0].mxu0
    %v576 = vadd.f32 %v437, %v575
    %v577 = vpop.f32.mrb[0].mxu0
    %578 = vmatprep.mubr.f32.mxu0 0.0
    %579 = vmatmul.mubr.f32.gmra.mrb[0].mxu0 %v399
    %v580 = vpop.f32.mrb[0].mxu0
    %v581 = vadd.f32 %v437, %v580
    %v582 = vpop.f32.mrb[0].mxu0
    %583 = vmatprep.mubr.f32.mxu0 0.0
    %584 = vmatmul.mubr.f32.gmra.mrb[0].mxu0 %v400
    %v585 = vpop.f32.mrb[0].mxu0
    %v586 = vadd.f32 %v437, %v585
    %v587 = vpop.f32.mrb[0].mxu0
    %588 = vmatprep.mubr.f32.mxu0 0.0
    %589 = vmatmul.mubr.f32.gmra.mrb[0].mxu0 %v401
    %v590 = vpop.f32.mrb[0].mxu0
    %v591 = vadd.f32 %v437, %v590
    %v592 = vpop.f32.mrb[0].mxu0
    %593 = vmatprep.mubr.f32.mxu0 0.0
    %594 = vmatmul.mubr.f32.gmra.mrb[0].mxu0 %v402
    %v595 = vpop.f32.mrb[0].mxu0
    %v596 = vadd.f32 %v437, %v595
    %v597 = vpop.f32.mrb[0].mxu0
    %598 = vmatprep.mubr.f32.mxu0 0.0
    %599 = vmatmul.mubr.f32.gmra.mrb[0].mxu0 %v403
    %v600 = vpop.f32.mrb[0].mxu0
    %v601 = vadd.f32 %v437, %v600
    %v602 = vpop.f32.mrb[0].mxu0
    %603 = vmatprep.mubr.f32.mxu0 0.0
    %604 = vmatmul.mubr.f32.gmra.mrb[0].mxu0 %v404
    %v605 = vpop.f32.mrb[0].mxu0
    %v606 = vadd.f32 %v437, %v605
    %v607 = vpop.f32.mrb[0].mxu0
    %608 = vmatprep.mubr.f32.mxu0 0.0
    %609 = vmatmul.mubr.f32.gmra.mrb[0].mxu0 %v405
    %v610 = vpop.f32.mrb[0].mxu0
    %v611 = vadd.f32 %v437, %v610
    %v612 = vpop.f32.mrb[0].mxu0
    %613 = vmatprep.mubr.f32.mxu0 0.0
    %614 = vmatmul.mubr.f32.gmra.mrb[0].mxu0 %v406
    %v615 = vpop.f32.mrb[0].mxu0
    %v616 = vadd.f32 %v437, %v615
    %v617 = vpop.f32.mrb[0].mxu0
    %618 = vmatprep.mubr.f32.mxu0 0.0
    %619 = vmatmul.mubr.f32.gmra.mrb[0].mxu0 %v407
    %v620 = vpop.f32.mrb[0].mxu0
    %v621 = vadd.f32 %v437, %v620
    %v622 = vpop.f32.mrb[0].mxu0
    %623 = vmatprep.mubr.f32.mxu0 0.0
    %624 = vmatmul.mubr.f32.gmra.mrb[0].mxu0 %v408
    %v625 = vpop.f32.mrb[0].mxu0
    %v626 = vadd.f32 %v437, %v625
    %v627 = vpop.f32.mrb[0].mxu0
    %628 = vmatprep.mubr.f32.mxu0 0.0
    %629 = vmatmul.mubr.f32.gmra.mrb[0].mxu0 %v409
    %v630 = vpop.f32.mrb[0].mxu0
    %v631 = vadd.f32 %v437, %v630
    %v632 = vpop.f32.mrb[0].mxu0
    %633 = vmatprep.mubr.f32.mxu0 0.0
    %634 = vmatmul.mubr.f32.gmra.mrb[0].mxu0 %v410
    %v635 = vpop.f32.mrb[0].mxu0
    %v636 = vadd.f32 %v437, %v635
    %v637 = vpop.f32.mrb[0].mxu0
    %638 = vmatprep.mubr.f32.mxu0 0.0
    %639 = vmatmul.mubr.f32.gmra.mrb[0].mxu0 %v411
    %v640 = vpop.f32.mrb[0].mxu0
    %v641 = vadd.f32 %v437, %v640
    %v642 = vpop.f32.mrb[0].mxu0
    %643 = vmatprep.mubr.f32.mxu0 0.0
    %644 = vmatmul.mubr.f32.gmra.mrb[0].mxu0 %v412
    %v645 = vpop.f32.mrb[0].mxu0
    %v646 = vadd.f32 %v437, %v645
    %v647 = vpop.f32.mrb[0].mxu0
    %648 = vmatprep.mubr.f32.mxu0 0.0
    %649 = vmatmul.mubr.f32.gmra.mrb[0].mxu0 %v413
    %v650 = vpop.f32.mrb[0].mxu0
    %v651 = vadd.f32 %v437, %v650
    %v652 = vpop.f32.mrb[0].mxu0
    %653 = vmatprep.mubr.f32.mxu0 0.0
    %654 = vmatmul.mubr.f32.gmra.mrb[0].mxu0 %v414
    %v655 = vpop.f32.mrb[0].mxu0
    %v656 = vadd.f32 %v437, %v655
    %v657 = vpop.f32.mrb[0].mxu0
    %658 = vmatprep.mubr.f32.mxu0 0.0
    %659 = vmatmul.mubr.f32.gmra.mrb[0].mxu0 %v415
    %v660 = vpop.f32.mrb[0].mxu0
    %v661 = vadd.f32 %v437, %v660
    %v662 = vpop.f32.mrb[0].mxu0
    %663 = vdwg.mxu0
    %v664 = vld [vmem:[#allocation8] sm:$0xff]
    %v665 = vld [vmem:[#allocation8 + $0x8] sm:$0xff]
    %v666 = vld [vmem:[#allocation8 + $0x10] sm:$0xff]
    %v667 = vld [vmem:[#allocation8 + $0x18] sm:$0xff]
    %v668 = vld [vmem:[#allocation8 + $0x20] sm:$0xff]
    %v669 = vld [vmem:[#allocation8 + $0x28] sm:$0xff]
    %v670 = vld [vmem:[#allocation8 + $0x30] sm:$0xff]
    %v671 = vld [vmem:[#allocation8 + $0x38] sm:$0xff]
    %v672 = vld [vmem:[#allocation8 + $0x40] sm:$0xff]
    %v673 = vld [vmem:[#allocation8 + $0x48] sm:$0xff]
    %v674 = vld [vmem:[#allocation8 + $0x50] sm:$0xff]
    %v675 = vld [vmem:[#allocation8 + $0x58] sm:$0xff]
    %v676 = vld [vmem:[#allocation8 + $0x60] sm:$0xff]
    %v677 = vld [vmem:[#allocation8 + $0x68] sm:$0xff]
    %v678 = vld [vmem:[#allocation8 + $0x70] sm:$0xff]
    %v679 = vld [vmem:[#allocation8 + $0x78] sm:$0xff]
    %v680 = vld [vmem:[%s6] sm:$0x1]
    %v682 = vlaneseq
    %v683 = vshrl.u32 %v682, 7
    %v684 = vsub.s32 0, %v683
    %v685 = vrot.slane %v680, %v684
    %687 = vmatprep.subr.mxu0 0.0
    %688 = vmatpush1.msra.mxu0 %v664
    %689 = vmatprep.subr.mxu0 0.0
    %690 = vmatpush1.msra.mxu0 %v665
    %691 = vmatprep.subr.mxu0 0.0
    %692 = vmatpush1.msra.mxu0 %v666
    %693 = vmatprep.subr.mxu0 0.0
    %694 = vmatpush1.msra.mxu0 %v667
    %695 = vmatprep.subr.mxu0 0.0
    %696 = vmatpush1.msra.mxu0 %v668
    %697 = vmatprep.subr.mxu0 0.0
    %698 = vmatpush1.msra.mxu0 %v669
    %699 = vmatprep.subr.mxu0 0.0
    %700 = vmatpush1.msra.mxu0 %v670
    %701 = vmatprep.subr.mxu0 0.0
    %702 = vmatpush1.msra.mxu0 %v671
    %703 = vmatprep.subr.mxu0 0.0
    %704 = vmatpush1.msra.mxu0 %v672
    %705 = vmatprep.subr.mxu0 0.0
    %706 = vmatpush1.msra.mxu0 %v673
    %707 = vmatprep.subr.mxu0 0.0
    %708 = vmatpush1.msra.mxu0 %v674
    %709 = vmatprep.subr.mxu0 0.0
    %710 = vmatpush1.msra.mxu0 %v675
    %711 = vmatprep.subr.mxu0 0.0
    %712 = vmatpush1.msra.mxu0 %v676
    %713 = vmatprep.subr.mxu0 0.0
    %714 = vmatpush1.msra.mxu0 %v677
    %715 = vmatprep.subr.mxu0 0.0
    %716 = vmatpush1.msra.mxu0 %v678
    %717 = vmatprep.subr.mxu0 0.0
    %718 = vmatpush1.msra.mxu0 %v679
    %719 = vmatprep.subr.mxu0 0.0
    %720 = vmatpush1.msra.mxu0 0.0
    %721 = vmatprep.subr.mxu0 0.0
    %722 = vmatpush1.msra.mxu0 0.0
    %723 = vmatprep.subr.mxu0 0.0
    %724 = vmatpush1.msra.mxu0 0.0
    %725 = vmatprep.subr.mxu0 0.0
    %726 = vmatpush1.msra.mxu0 0.0
    %727 = vmatprep.subr.mxu0 0.0
    %728 = vmatpush1.msra.mxu0 0.0
    %729 = vmatprep.subr.mxu0 0.0
    %730 = vmatpush1.msra.mxu0 0.0
    %731 = vmatprep.subr.mxu0 0.0
    %732 = vmatpush1.msra.mxu0 0.0
    %733 = vmatprep.subr.mxu0 0.0
    %734 = vmatpush1.msra.mxu0 0.0
    %735 = vmatprep.subr.mxu0 0.0
    %736 = vmatpush1.msra.mxu0 0.0
    %737 = vmatprep.subr.mxu0 0.0
    %738 = vmatpush1.msra.mxu0 0.0
    %739 = vmatprep.subr.mxu0 0.0
    %740 = vmatpush1.msra.mxu0 0.0
    %741 = vmatprep.subr.mxu0 0.0
    %742 = vmatpush1.msra.mxu0 0.0
    %743 = vmatprep.subr.mxu0 0.0
    %744 = vmatpush1.msra.mxu0 0.0
    %745 = vmatprep.subr.mxu0 0.0
    %746 = vmatpush1.msra.mxu0 0.0
    %747 = vmatprep.subr.mxu0 0.0
    %748 = vmatpush1.msra.mxu0 0.0
    %749 = vmatprep.subr.mxu0 0.0
    %750 = vmatpush1.msra.mxu0 0.0
    %751 = vmatprep.mubr.f32.mxu0 0.0
    %752 = vmatmul.mubr.f32.gmra.mrb[0].mxu0 %v506
    %v753 = vpop.f32.mrb[0].mxu0
    %v754 = vadd.f32 %v685, %v753
    %v755 = vpop.f32.mrb[0].mxu0
    %756 = vmatprep.mubr.f32.mxu0 0.0
    %757 = vmatmul.mubr.f32.gmra.mrb[0].mxu0 %v511
    %v758 = vpop.f32.mrb[0].mxu0
    %v759 = vadd.f32 %v685, %v758
    %v760 = vpop.f32.mrb[0].mxu0
    %761 = vmatprep.mubr.f32.mxu0 0.0
    %762 = vmatmul.mubr.f32.gmra.mrb[0].mxu0 %v516
    %v763 = vpop.f32.mrb[0].mxu0
    %v764 = vadd.f32 %v685, %v763
    %v765 = vpop.f32.mrb[0].mxu0
    %766 = vmatprep.mubr.f32.mxu0 0.0
    %767 = vmatmul.mubr.f32.gmra.mrb[0].mxu0 %v521
    %v768 = vpop.f32.mrb[0].mxu0
    %v769 = vadd.f32 %v685, %v768
    %v770 = vpop.f32.mrb[0].mxu0
    %771 = vmatprep.mubr.f32.mxu0 0.0
    %772 = vmatmul.mubr.f32.gmra.mrb[0].mxu0 %v526
    %v773 = vpop.f32.mrb[0].mxu0
    %v774 = vadd.f32 %v685, %v773
    %v775 = vpop.f32.mrb[0].mxu0
    %776 = vmatprep.mubr.f32.mxu0 0.0
    %777 = vmatmul.mubr.f32.gmra.mrb[0].mxu0 %v531
    %v778 = vpop.f32.mrb[0].mxu0
    %v779 = vadd.f32 %v685, %v778
    %v780 = vpop.f32.mrb[0].mxu0
    %781 = vmatprep.mubr.f32.mxu0 0.0
    %782 = vmatmul.mubr.f32.gmra.mrb[0].mxu0 %v536
    %v783 = vpop.f32.mrb[0].mxu0
    %v784 = vadd.f32 %v685, %v783
    %v785 = vpop.f32.mrb[0].mxu0
    %786 = vmatprep.mubr.f32.mxu0 0.0
    %787 = vmatmul.mubr.f32.gmra.mrb[0].mxu0 %v541
    %v788 = vpop.f32.mrb[0].mxu0
    %v789 = vadd.f32 %v685, %v788
    %v790 = vpop.f32.mrb[0].mxu0
    %791 = vmatprep.mubr.f32.mxu0 0.0
    %792 = vmatmul.mubr.f32.gmra.mrb[0].mxu0 %v546
    %v793 = vpop.f32.mrb[0].mxu0
    %v794 = vadd.f32 %v685, %v793
    %v795 = vpop.f32.mrb[0].mxu0
    %796 = vmatprep.mubr.f32.mxu0 0.0
    %797 = vmatmul.mubr.f32.gmra.mrb[0].mxu0 %v551
    %v798 = vpop.f32.mrb[0].mxu0
    %v799 = vadd.f32 %v685, %v798
    %v800 = vpop.f32.mrb[0].mxu0
    %801 = vmatprep.mubr.f32.mxu0 0.0
    %802 = vmatmul.mubr.f32.gmra.mrb[0].mxu0 %v556
    %v803 = vpop.f32.mrb[0].mxu0
    %v804 = vadd.f32 %v685, %v803
    %v805 = vpop.f32.mrb[0].mxu0
    %806 = vmatprep.mubr.f32.mxu0 0.0
    %807 = vmatmul.mubr.f32.gmra.mrb[0].mxu0 %v561
    %v808 = vpop.f32.mrb[0].mxu0
    %v809 = vadd.f32 %v685, %v808
    %v810 = vpop.f32.mrb[0].mxu0
    %811 = vmatprep.mubr.f32.mxu0 0.0
    %812 = vmatmul.mubr.f32.gmra.mrb[0].mxu0 %v566
    %v813 = vpop.f32.mrb[0].mxu0
    %v814 = vadd.f32 %v685, %v813
    %v815 = vpop.f32.mrb[0].mxu0
    %816 = vmatprep.mubr.f32.mxu0 0.0
    %817 = vmatmul.mubr.f32.gmra.mrb[0].mxu0 %v571
    %v818 = vpop.f32.mrb[0].mxu0
    %v819 = vadd.f32 %v685, %v818
    %v820 = vpop.f32.mrb[0].mxu0
    %821 = vmatprep.mubr.f32.mxu0 0.0
    %822 = vmatmul.mubr.f32.gmra.mrb[0].mxu0 %v576
    %v823 = vpop.f32.mrb[0].mxu0
    %v824 = vadd.f32 %v685, %v823
    %v825 = vpop.f32.mrb[0].mxu0
    %826 = vmatprep.mubr.f32.mxu0 0.0
    %827 = vmatmul.mubr.f32.gmra.mrb[0].mxu0 %v581
    %v828 = vpop.f32.mrb[0].mxu0
    %v829 = vadd.f32 %v685, %v828
    %v830 = vpop.f32.mrb[0].mxu0
    %831 = vmatprep.mubr.f32.mxu0 0.0
    %832 = vmatmul.mubr.f32.gmra.mrb[0].mxu0 %v586
    %v833 = vpop.f32.mrb[0].mxu0
    %v834 = vadd.f32 %v685, %v833
    %v835 = vpop.f32.mrb[0].mxu0
    %836 = vmatprep.mubr.f32.mxu0 0.0
    %837 = vmatmul.mubr.f32.gmra.mrb[0].mxu0 %v591
    %v838 = vpop.f32.mrb[0].mxu0
    %v839 = vadd.f32 %v685, %v838
    %v840 = vpop.f32.mrb[0].mxu0
    %841 = vmatprep.mubr.f32.mxu0 0.0
    %842 = vmatmul.mubr.f32.gmra.mrb[0].mxu0 %v596
    %v843 = vpop.f32.mrb[0].mxu0
    %v844 = vadd.f32 %v685, %v843
    %v845 = vpop.f32.mrb[0].mxu0
    %846 = vmatprep.mubr.f32.mxu0 0.0
    %847 = vmatmul.mubr.f32.gmra.mrb[0].mxu0 %v601
    %v848 = vpop.f32.mrb[0].mxu0
    %v849 = vadd.f32 %v685, %v848
    %v850 = vpop.f32.mrb[0].mxu0
    %851 = vmatprep.mubr.f32.mxu0 0.0
    %852 = vmatmul.mubr.f32.gmra.mrb[0].mxu0 %v606
    %v853 = vpop.f32.mrb[0].mxu0
    %v854 = vadd.f32 %v685, %v853
    %v855 = vpop.f32.mrb[0].mxu0
    %856 = vmatprep.mubr.f32.mxu0 0.0
    %857 = vmatmul.mubr.f32.gmra.mrb[0].mxu0 %v611
    %v858 = vpop.f32.mrb[0].mxu0
    %v859 = vadd.f32 %v685, %v858
    %v860 = vpop.f32.mrb[0].mxu0
    %861 = vmatprep.mubr.f32.mxu0 0.0
    %862 = vmatmul.mubr.f32.gmra.mrb[0].mxu0 %v616
    %v863 = vpop.f32.mrb[0].mxu0
    %v864 = vadd.f32 %v685, %v863
    %v865 = vpop.f32.mrb[0].mxu0
    %866 = vmatprep.mubr.f32.mxu0 0.0
    %867 = vmatmul.mubr.f32.gmra.mrb[0].mxu0 %v621
    %v868 = vpop.f32.mrb[0].mxu0
    %v869 = vadd.f32 %v685, %v868
    %v870 = vpop.f32.mrb[0].mxu0
    %871 = vmatprep.mubr.f32.mxu0 0.0
    %872 = vmatmul.mubr.f32.gmra.mrb[0].mxu0 %v626
    %v873 = vpop.f32.mrb[0].mxu0
    %v874 = vadd.f32 %v685, %v873
    %v875 = vpop.f32.mrb[0].mxu0
    %876 = vmatprep.mubr.f32.mxu0 0.0
    %877 = vmatmul.mubr.f32.gmra.mrb[0].mxu0 %v631
    %v878 = vpop.f32.mrb[0].mxu0
    %v879 = vadd.f32 %v685, %v878
    %v880 = vpop.f32.mrb[0].mxu0
    %881 = vmatprep.mubr.f32.mxu0 0.0
    %882 = vmatmul.mubr.f32.gmra.mrb[0].mxu0 %v636
    %v883 = vpop.f32.mrb[0].mxu0
    %v884 = vadd.f32 %v685, %v883
    %v885 = vpop.f32.mrb[0].mxu0
    %886 = vmatprep.mubr.f32.mxu0 0.0
    %887 = vmatmul.mubr.f32.gmra.mrb[0].mxu0 %v641
    %v888 = vpop.f32.mrb[0].mxu0
    %v889 = vadd.f32 %v685, %v888
    %v890 = vpop.f32.mrb[0].mxu0
    %891 = vmatprep.mubr.f32.mxu0 0.0
    %892 = vmatmul.mubr.f32.gmra.mrb[0].mxu0 %v646
    %v893 = vpop.f32.mrb[0].mxu0
    %v894 = vadd.f32 %v685, %v893
    %v895 = vpop.f32.mrb[0].mxu0
    %896 = vmatprep.mubr.f32.mxu0 0.0
    %897 = vmatmul.mubr.f32.gmra.mrb[0].mxu0 %v651
    %v898 = vpop.f32.mrb[0].mxu0
    %v899 = vadd.f32 %v685, %v898
    %v900 = vpop.f32.mrb[0].mxu0
    %901 = vmatprep.mubr.f32.mxu0 0.0
    %902 = vmatmul.mubr.f32.gmra.mrb[0].mxu0 %v656
    %v903 = vpop.f32.mrb[0].mxu0
    %v904 = vadd.f32 %v685, %v903
    %v905 = vpop.f32.mrb[0].mxu0
    %906 = vmatprep.mubr.f32.mxu0 0.0
    %907 = vmatmul.mubr.f32.gmra.mrb[0].mxu0 %v661
    %v908 = vpop.f32.mrb[0].mxu0
    %v909 = vadd.f32 %v685, %v908
    %v910 = vpop.f32.mrb[0].mxu0
    %911 = vdwg.mxu0
    %v912 = vmax.f32 %v754, 0.0
    %v913 = vmax.f32 %v759, 0.0
    %v914 = vmax.f32 %v764, 0.0
    %v915 = vmax.f32 %v769, 0.0
    %v916 = vmax.f32 %v774, 0.0
    %v917 = vmax.f32 %v779, 0.0
    %v918 = vmax.f32 %v784, 0.0
    %v919 = vmax.f32 %v789, 0.0
    %v920 = vmax.f32 %v794, 0.0
    %v921 = vmax.f32 %v799, 0.0
    %v922 = vmax.f32 %v804, 0.0
    %v923 = vmax.f32 %v809, 0.0
    %v924 = vmax.f32 %v814, 0.0
    %v925 = vmax.f32 %v819, 0.0
    %v926 = vmax.f32 %v824, 0.0
    %v927 = vmax.f32 %v829, 0.0
    %v928 = vmax.f32 %v834, 0.0
    %v929 = vmax.f32 %v839, 0.0
    %v930 = vmax.f32 %v844, 0.0
    %v931 = vmax.f32 %v849, 0.0
    %v932 = vmax.f32 %v854, 0.0
    %v933 = vmax.f32 %v859, 0.0
    %v934 = vmax.f32 %v864, 0.0
    %v935 = vmax.f32 %v869, 0.0
    %v936 = vmax.f32 %v874, 0.0
    %v937 = vmax.f32 %v879, 0.0
    %v938 = vmax.f32 %v884, 0.0
    %v939 = vmax.f32 %v889, 0.0
    %v940 = vmax.f32 %v894, 0.0
    %v941 = vmax.f32 %v899, 0.0
    %v942 = vmax.f32 %v904, 0.0
    %v943 = vmax.f32 %v909, 0.0
    %v944 = vld [vmem:[#allocation10] sm:$0xff]
    %v945 = vld [vmem:[#allocation10 + $0x8] sm:$0xff]
    %v946 = vld [vmem:[#allocation10 + $0x10] sm:$0xff]
    %v947 = vld [vmem:[#allocation10 + $0x18] sm:$0xff]
    %v948 = vld [vmem:[#allocation10 + $0x20] sm:$0xff]
    %v949 = vld [vmem:[#allocation10 + $0x28] sm:$0xff]
    %v950 = vld [vmem:[#allocation10 + $0x30] sm:$0xff]
    %v951 = vld [vmem:[#allocation10 + $0x38] sm:$0xff]
    %v952 = vld [vmem:[#allocation10 + $0x40] sm:$0xff]
    %v953 = vld [vmem:[#allocation10 + $0x48] sm:$0xff]
    %v954 = vld [vmem:[#allocation10 + $0x50] sm:$0xff]
    %v955 = vld [vmem:[#allocation10 + $0x58] sm:$0xff]
    %v956 = vld [vmem:[#allocation10 + $0x60] sm:$0xff]
    %v957 = vld [vmem:[#allocation10 + $0x68] sm:$0xff]
    %v958 = vld [vmem:[#allocation10 + $0x70] sm:$0xff]
    %v959 = vld [vmem:[#allocation10 + $0x78] sm:$0xff]
    %v960 = vld [vmem:[%s8] sm:$0x1]
    %v962 = vlaneseq
    %v963 = vshrl.u32 %v962, 7
    %v964 = vsub.s32 0, %v963
    %v965 = vrot.slane %v960, %v964
    %967 = vmatprep.subr.mxu0 0.0
    %968 = vmatpush1.msra.mxu0 %v944
    %969 = vmatprep.subr.mxu0 0.0
    %970 = vmatpush1.msra.mxu0 %v945
    %971 = vmatprep.subr.mxu0 0.0
    %972 = vmatpush1.msra.mxu0 %v946
    %973 = vmatprep.subr.mxu0 0.0
    %974 = vmatpush1.msra.mxu0 %v947
    %975 = vmatprep.subr.mxu0 0.0
    %976 = vmatpush1.msra.mxu0 %v948
    %977 = vmatprep.subr.mxu0 0.0
    %978 = vmatpush1.msra.mxu0 %v949
    %979 = vmatprep.subr.mxu0 0.0
    %980 = vmatpush1.msra.mxu0 %v950
    %981 = vmatprep.subr.mxu0 0.0
    %982 = vmatpush1.msra.mxu0 %v951
    %983 = vmatprep.subr.mxu0 0.0
    %984 = vmatpush1.msra.mxu0 %v952
    %985 = vmatprep.subr.mxu0 0.0
    %986 = vmatpush1.msra.mxu0 %v953
    %987 = vmatprep.subr.mxu0 0.0
    %988 = vmatpush1.msra.mxu0 %v954
    %989 = vmatprep.subr.mxu0 0.0
    %990 = vmatpush1.msra.mxu0 %v955
    %991 = vmatprep.subr.mxu0 0.0
    %992 = vmatpush1.msra.mxu0 %v956
    %993 = vmatprep.subr.mxu0 0.0
    %994 = vmatpush1.msra.mxu0 %v957
    %995 = vmatprep.subr.mxu0 0.0
    %996 = vmatpush1.msra.mxu0 %v958
    %997 = vmatprep.subr.mxu0 0.0
    %998 = vmatpush1.msra.mxu0 %v959
    %999 = vmatprep.subr.mxu0 0.0
    %1000 = vmatpush1.msra.mxu0 0.0
    %1001 = vmatprep.subr.mxu0 0.0
    %1002 = vmatpush1.msra.mxu0 0.0
    %1003 = vmatprep.subr.mxu0 0.0
    %1004 = vmatpush1.msra.mxu0 0.0
    %1005 = vmatprep.subr.mxu0 0.0
    %1006 = vmatpush1.msra.mxu0 0.0
    %1007 = vmatprep.subr.mxu0 0.0
    %1008 = vmatpush1.msra.mxu0 0.0
    %1009 = vmatprep.subr.mxu0 0.0
    %1010 = vmatpush1.msra.mxu0 0.0
    %1011 = vmatprep.subr.mxu0 0.0
    %1012 = vmatpush1.msra.mxu0 0.0
    %1013 = vmatprep.subr.mxu0 0.0
    %1014 = vmatpush1.msra.mxu0 0.0
    %1015 = vmatprep.subr.mxu0 0.0
    %1016 = vmatpush1.msra.mxu0 0.0
    %1017 = vmatprep.subr.mxu0 0.0
    %1018 = vmatpush1.msra.mxu0 0.0
    %1019 = vmatprep.subr.mxu0 0.0
    %1020 = vmatpush1.msra.mxu0 0.0
    %1021 = vmatprep.subr.mxu0 0.0
    %1022 = vmatpush1.msra.mxu0 0.0
    %1023 = vmatprep.subr.mxu0 0.0
    %1024 = vmatpush1.msra.mxu0 0.0
    %1025 = vmatprep.subr.mxu0 0.0
    %1026 = vmatpush1.msra.mxu0 0.0
    %1027 = vmatprep.subr.mxu0 0.0
    %1028 = vmatpush1.msra.mxu0 0.0
    %1029 = vmatprep.subr.mxu0 0.0
    %1030 = vmatpush1.msra.mxu0 0.0
    %1031 = vmatprep.mubr.f32.mxu0 0.0
    %1032 = vmatmul.mubr.f32.gmra.mrb[0].mxu0 %v912
    %v1033 = vpop.f32.mrb[0].mxu0
    %v1034 = vadd.f32 %v965, %v1033
    %v1035 = vpop.f32.mrb[0].mxu0
    %1036 = vmatprep.mubr.f32.mxu0 0.0
    %1037 = vmatmul.mubr.f32.gmra.mrb[0].mxu0 %v913
    %v1038 = vpop.f32.mrb[0].mxu0
    %v1039 = vadd.f32 %v965, %v1038
    %v1040 = vpop.f32.mrb[0].mxu0
    %1041 = vmatprep.mubr.f32.mxu0 0.0
    %1042 = vmatmul.mubr.f32.gmra.mrb[0].mxu0 %v914
    %v1043 = vpop.f32.mrb[0].mxu0
    %v1044 = vadd.f32 %v965, %v1043
    %v1045 = vpop.f32.mrb[0].mxu0
    %1046 = vmatprep.mubr.f32.mxu0 0.0
    %1047 = vmatmul.mubr.f32.gmra.mrb[0].mxu0 %v915
    %v1048 = vpop.f32.mrb[0].mxu0
    %v1049 = vadd.f32 %v965, %v1048
    %v1050 = vpop.f32.mrb[0].mxu0
    %1051 = vmatprep.mubr.f32.mxu0 0.0
    %1052 = vmatmul.mubr.f32.gmra.mrb[0].mxu0 %v916
    %v1053 = vpop.f32.mrb[0].mxu0
    %v1054 = vadd.f32 %v965, %v1053
    %v1055 = vpop.f32.mrb[0].mxu0
    %1056 = vmatprep.mubr.f32.mxu0 0.0
    %1057 = vmatmul.mubr.f32.gmra.mrb[0].mxu0 %v917
    %v1058 = vpop.f32.mrb[0].mxu0
    %v1059 = vadd.f32 %v965, %v1058
    %v1060 = vpop.f32.mrb[0].mxu0
    %1061 = vmatprep.mubr.f32.mxu0 0.0
    %1062 = vmatmul.mubr.f32.gmra.mrb[0].mxu0 %v918
    %v1063 = vpop.f32.mrb[0].mxu0
    %v1064 = vadd.f32 %v965, %v1063
    %v1065 = vpop.f32.mrb[0].mxu0
    %1066 = vmatprep.mubr.f32.mxu0 0.0
    %1067 = vmatmul.mubr.f32.gmra.mrb[0].mxu0 %v919
    %v1068 = vpop.f32.mrb[0].mxu0
    %v1069 = vadd.f32 %v965, %v1068
    %v1070 = vpop.f32.mrb[0].mxu0
    %1071 = vmatprep.mubr.f32.mxu0 0.0
    %1072 = vmatmul.mubr.f32.gmra.mrb[0].mxu0 %v920
    %v1073 = vpop.f32.mrb[0].mxu0
    %v1074 = vadd.f32 %v965, %v1073
    %v1075 = vpop.f32.mrb[0].mxu0
    %1076 = vmatprep.mubr.f32.mxu0 0.0
    %1077 = vmatmul.mubr.f32.gmra.mrb[0].mxu0 %v921
    %v1078 = vpop.f32.mrb[0].mxu0
    %v1079 = vadd.f32 %v965, %v1078
    %v1080 = vpop.f32.mrb[0].mxu0
    %1081 = vmatprep.mubr.f32.mxu0 0.0
    %1082 = vmatmul.mubr.f32.gmra.mrb[0].mxu0 %v922
    %v1083 = vpop.f32.mrb[0].mxu0
    %v1084 = vadd.f32 %v965, %v1083
    %v1085 = vpop.f32.mrb[0].mxu0
    %1086 = vmatprep.mubr.f32.mxu0 0.0
    %1087 = vmatmul.mubr.f32.gmra.mrb[0].mxu0 %v923
    %v1088 = vpop.f32.mrb[0].mxu0
    %v1089 = vadd.f32 %v965, %v1088
    %v1090 = vpop.f32.mrb[0].mxu0
    %1091 = vmatprep.mubr.f32.mxu0 0.0
    %1092 = vmatmul.mubr.f32.gmra.mrb[0].mxu0 %v924
    %v1093 = vpop.f32.mrb[0].mxu0
    %v1094 = vadd.f32 %v965, %v1093
    %v1095 = vpop.f32.mrb[0].mxu0
    %1096 = vmatprep.mubr.f32.mxu0 0.0
    %1097 = vmatmul.mubr.f32.gmra.mrb[0].mxu0 %v925
    %v1098 = vpop.f32.mrb[0].mxu0
    %v1099 = vadd.f32 %v965, %v1098
    %v1100 = vpop.f32.mrb[0].mxu0
    %1101 = vmatprep.mubr.f32.mxu0 0.0
    %1102 = vmatmul.mubr.f32.gmra.mrb[0].mxu0 %v926
    %v1103 = vpop.f32.mrb[0].mxu0
    %v1104 = vadd.f32 %v965, %v1103
    %v1105 = vpop.f32.mrb[0].mxu0
    %1106 = vmatprep.mubr.f32.mxu0 0.0
    %1107 = vmatmul.mubr.f32.gmra.mrb[0].mxu0 %v927
    %v1108 = vpop.f32.mrb[0].mxu0
    %v1109 = vadd.f32 %v965, %v1108
    %v1110 = vpop.f32.mrb[0].mxu0
    %1111 = vmatprep.mubr.f32.mxu0 0.0
    %1112 = vmatmul.mubr.f32.gmra.mrb[0].mxu0 %v928
    %v1113 = vpop.f32.mrb[0].mxu0
    %v1114 = vadd.f32 %v965, %v1113
    %v1115 = vpop.f32.mrb[0].mxu0
    %1116 = vmatprep.mubr.f32.mxu0 0.0
    %1117 = vmatmul.mubr.f32.gmra.mrb[0].mxu0 %v929
    %v1118 = vpop.f32.mrb[0].mxu0
    %v1119 = vadd.f32 %v965, %v1118
    %v1120 = vpop.f32.mrb[0].mxu0
    %1121 = vmatprep.mubr.f32.mxu0 0.0
    %1122 = vmatmul.mubr.f32.gmra.mrb[0].mxu0 %v930
    %v1123 = vpop.f32.mrb[0].mxu0
    %v1124 = vadd.f32 %v965, %v1123
    %v1125 = vpop.f32.mrb[0].mxu0
    %1126 = vmatprep.mubr.f32.mxu0 0.0
    %1127 = vmatmul.mubr.f32.gmra.mrb[0].mxu0 %v931
    %v1128 = vpop.f32.mrb[0].mxu0
    %v1129 = vadd.f32 %v965, %v1128
    %v1130 = vpop.f32.mrb[0].mxu0
    %1131 = vmatprep.mubr.f32.mxu0 0.0
    %1132 = vmatmul.mubr.f32.gmra.mrb[0].mxu0 %v932
    %v1133 = vpop.f32.mrb[0].mxu0
    %v1134 = vadd.f32 %v965, %v1133
    %v1135 = vpop.f32.mrb[0].mxu0
    %1136 = vmatprep.mubr.f32.mxu0 0.0
    %1137 = vmatmul.mubr.f32.gmra.mrb[0].mxu0 %v933
    %v1138 = vpop.f32.mrb[0].mxu0
    %v1139 = vadd.f32 %v965, %v1138
    %v1140 = vpop.f32.mrb[0].mxu0
    %1141 = vmatprep.mubr.f32.mxu0 0.0
    %1142 = vmatmul.mubr.f32.gmra.mrb[0].mxu0 %v934
    %v1143 = vpop.f32.mrb[0].mxu0
    %v1144 = vadd.f32 %v965, %v1143
    %v1145 = vpop.f32.mrb[0].mxu0
    %1146 = vmatprep.mubr.f32.mxu0 0.0
    %1147 = vmatmul.mubr.f32.gmra.mrb[0].mxu0 %v935
    %v1148 = vpop.f32.mrb[0].mxu0
    %v1149 = vadd.f32 %v965, %v1148
    %v1150 = vpop.f32.mrb[0].mxu0
    %1151 = vmatprep.mubr.f32.mxu0 0.0
    %1152 = vmatmul.mubr.f32.gmra.mrb[0].mxu0 %v936
    %v1153 = vpop.f32.mrb[0].mxu0
    %v1154 = vadd.f32 %v965, %v1153
    %v1155 = vpop.f32.mrb[0].mxu0
    %1156 = vmatprep.mubr.f32.mxu0 0.0
    %1157 = vmatmul.mubr.f32.gmra.mrb[0].mxu0 %v937
    %v1158 = vpop.f32.mrb[0].mxu0
    %v1159 = vadd.f32 %v965, %v1158
    %v1160 = vpop.f32.mrb[0].mxu0
    %1161 = vmatprep.mubr.f32.mxu0 0.0
    %1162 = vmatmul.mubr.f32.gmra.mrb[0].mxu0 %v938
    %v1163 = vpop.f32.mrb[0].mxu0
    %v1164 = vadd.f32 %v965, %v1163
    %v1165 = vpop.f32.mrb[0].mxu0
    %1166 = vmatprep.mubr.f32.mxu0 0.0
    %1167 = vmatmul.mubr.f32.gmra.mrb[0].mxu0 %v939
    %v1168 = vpop.f32.mrb[0].mxu0
    %v1169 = vadd.f32 %v965, %v1168
    %v1170 = vpop.f32.mrb[0].mxu0
    %1171 = vmatprep.mubr.f32.mxu0 0.0
    %1172 = vmatmul.mubr.f32.gmra.mrb[0].mxu0 %v940
    %v1173 = vpop.f32.mrb[0].mxu0
    %v1174 = vadd.f32 %v965, %v1173
    %v1175 = vpop.f32.mrb[0].mxu0
    %1176 = vmatprep.mubr.f32.mxu0 0.0
    %1177 = vmatmul.mubr.f32.gmra.mrb[0].mxu0 %v941
    %v1178 = vpop.f32.mrb[0].mxu0
    %v1179 = vadd.f32 %v965, %v1178
    %v1180 = vpop.f32.mrb[0].mxu0
    %1181 = vmatprep.mubr.f32.mxu0 0.0
    %1182 = vmatmul.mubr.f32.gmra.mrb[0].mxu0 %v942
    %v1183 = vpop.f32.mrb[0].mxu0
    %v1184 = vadd.f32 %v965, %v1183
    %v1185 = vpop.f32.mrb[0].mxu0
    %1186 = vmatprep.mubr.f32.mxu0 0.0
    %1187 = vmatmul.mubr.f32.gmra.mrb[0].mxu0 %v943
    %v1188 = vpop.f32.mrb[0].mxu0
    %v1189 = vadd.f32 %v965, %v1188
    %v1190 = vpop.f32.mrb[0].mxu0
    %1191 = vdwg.mxu0
    %1192 = vst [vmem:[#allocation12] sm:$0xff] %v506
    %1193 = vst [vmem:[#allocation12 + $0x8] sm:$0xff] %v511
    %1194 = vst [vmem:[#allocation12 + $0x10] sm:$0xff] %v516
    %1195 = vst [vmem:[#allocation12 + $0x18] sm:$0xff] %v521
    %1196 = vst [vmem:[#allocation12 + $0x20] sm:$0xff] %v526
    %1197 = vst [vmem:[#allocation12 + $0x28] sm:$0xff] %v531
    %1198 = vst [vmem:[#allocation12 + $0x30] sm:$0xff] %v536
    %1199 = vst [vmem:[#allocation12 + $0x38] sm:$0xff] %v541
    %1200 = vst [vmem:[#allocation12 + $0x40] sm:$0xff] %v546
    %1201 = vst [vmem:[#allocation12 + $0x48] sm:$0xff] %v551
    %1202 = vst [vmem:[#allocation12 + $0x50] sm:$0xff] %v556
    %1203 = vst [vmem:[#allocation12 + $0x58] sm:$0xff] %v561
    %1204 = vst [vmem:[#allocation12 + $0x60] sm:$0xff] %v566
    %1205 = vst [vmem:[#allocation12 + $0x68] sm:$0xff] %v571
    %1206 = vst [vmem:[#allocation12 + $0x70] sm:$0xff] %v576
    %1207 = vst [vmem:[#allocation12 + $0x78] sm:$0xff] %v581
    %1208 = vst [vmem:[#allocation12 + $0x80] sm:$0xff] %v586
    %1209 = vst [vmem:[#allocation12 + $0x88] sm:$0xff] %v591
    %1210 = vst [vmem:[#allocation12 + $0x90] sm:$0xff] %v596
    %1211 = vst [vmem:[#allocation12 + $0x98] sm:$0xff] %v601
    %1212 = vst [vmem:[#allocation12 + $0xa0] sm:$0xff] %v606
    %1213 = vst [vmem:[#allocation12 + $0xa8] sm:$0xff] %v611
    %1214 = vst [vmem:[#allocation12 + $0xb0] sm:$0xff] %v616
    %1215 = vst [vmem:[#allocation12 + $0xb8] sm:$0xff] %v621
    %1216 = vst [vmem:[#allocation12 + $0xc0] sm:$0xff] %v626
    %1217 = vst [vmem:[#allocation12 + $0xc8] sm:$0xff] %v631
    %1218 = vst [vmem:[#allocation12 + $0xd0] sm:$0xff] %v636
    %1219 = vst [vmem:[#allocation12 + $0xd8] sm:$0xff] %v641
    %1220 = vst [vmem:[#allocation12 + $0xe0] sm:$0xff] %v646
    %1221 = vst [vmem:[#allocation12 + $0xe8] sm:$0xff] %v651
    %1222 = vst [vmem:[#allocation12 + $0xf0] sm:$0xff] %v656
    %1223 = vst [vmem:[#allocation12 + $0xf8] sm:$0xff] %v661
    %1224 = vst [vmem:[#allocation11] sm:$0xff] %v1034
    %1225 = vst [vmem:[#allocation11 + $0x8] sm:$0xff] %v1039
    %1226 = vst [vmem:[#allocation11 + $0x10] sm:$0xff] %v1044
    %1227 = vst [vmem:[#allocation11 + $0x18] sm:$0xff] %v1049
    %1228 = vst [vmem:[#allocation11 + $0x20] sm:$0xff] %v1054
    %1229 = vst [vmem:[#allocation11 + $0x28] sm:$0xff] %v1059
    %1230 = vst [vmem:[#allocation11 + $0x30] sm:$0xff] %v1064
    %1231 = vst [vmem:[#allocation11 + $0x38] sm:$0xff] %v1069
    %1232 = vst [vmem:[#allocation11 + $0x40] sm:$0xff] %v1074
    %1233 = vst [vmem:[#allocation11 + $0x48] sm:$0xff] %v1079
    %1234 = vst [vmem:[#allocation11 + $0x50] sm:$0xff] %v1084
    %1235 = vst [vmem:[#allocation11 + $0x58] sm:$0xff] %v1089
    %1236 = vst [vmem:[#allocation11 + $0x60] sm:$0xff] %v1094
    %1237 = vst [vmem:[#allocation11 + $0x68] sm:$0xff] %v1099
    %1238 = vst [vmem:[#allocation11 + $0x70] sm:$0xff] %v1104
    %1239 = vst [vmem:[#allocation11 + $0x78] sm:$0xff] %v1109
    %1240 = vst [vmem:[#allocation11 + $0x80] sm:$0xff] %v1114
    %1241 = vst [vmem:[#allocation11 + $0x88] sm:$0xff] %v1119
    %1242 = vst [vmem:[#allocation11 + $0x90] sm:$0xff] %v1124
    %1243 = vst [vmem:[#allocation11 + $0x98] sm:$0xff] %v1129
    %1244 = vst [vmem:[#allocation11 + $0xa0] sm:$0xff] %v1134
    %1245 = vst [vmem:[#allocation11 + $0xa8] sm:$0xff] %v1139
    %1246 = vst [vmem:[#allocation11 + $0xb0] sm:$0xff] %v1144
    %1247 = vst [vmem:[#allocation11 + $0xb8] sm:$0xff] %v1149
    %1248 = vst [vmem:[#allocation11 + $0xc0] sm:$0xff] %v1154
    %1249 = vst [vmem:[#allocation11 + $0xc8] sm:$0xff] %v1159
    %1250 = vst [vmem:[#allocation11 + $0xd0] sm:$0xff] %v1164
    %1251 = vst [vmem:[#allocation11 + $0xd8] sm:$0xff] %v1169
    %1252 = vst [vmem:[#allocation11 + $0xe0] sm:$0xff] %v1174
    %1253 = vst [vmem:[#allocation11 + $0xe8] sm:$0xff] %v1179
    %1254 = vst [vmem:[#allocation11 + $0xf0] sm:$0xff] %v1184
    %1255 = vst [vmem:[#allocation11 + $0xf8] sm:$0xff] %v1189
    // Predicated region
    $region58: #{tpu_custom_call.1} parent=1 // pred_check
      _
    $region59: #{tpu_custom_call.1} parent=1 // pred_check_branch
      %1257 = sbr.rel (0) target = $region61
    $region60: #{tpu_custom_call.1} parent=1 // pred_region
      %s1259 = ssub.s32 4096, 4096
      %1260 = vsyncadd [#allocation4], %s1259
      %s1261 = sshll.u32 [#allocation11], 4
      %s1262 = int_to_ptr.vmem [resolvable:$true] %s1261
      %1267 = dma.vmem_to_hbm [thread:$0]  %s1262, 4096, %s9, [#allocation4], 128, 128, 8
    $region61: #{tpu_custom_call.1} parent=1 // pred_fallthru
      _
    // Predicated region
    $region62: #{tpu_custom_call.1} parent=1 // pred_check
      _
    $region63: #{tpu_custom_call.1} parent=1 // pred_check_branch
      %1269 = sbr.rel (0) target = $region65
    $region64: #{tpu_custom_call.1} parent=1 // pred_region
      %s1271 = ssub.s32 4096, 4096
      %1272 = vsyncadd [#allocation13], %s1271
      %s1273 = sshll.u32 [#allocation12], 4
      %s1274 = int_to_ptr.vmem [resolvable:$true] %s1273
      %1279 = dma.vmem_to_hbm [thread:$0]  %s1274, 4096, %s10, [#allocation13], 128, 128, 8
    $region65: #{tpu_custom_call.1} parent=1 // pred_fallthru
      _
    // Predicated region
    $region66: #{tpu_custom_call.1} parent=1 // pred_check
      _
    $region67: #{tpu_custom_call.1} parent=1 // pred_check_branch
      %1281 = sbr.rel (0) target = $region69
    $region68: #{tpu_custom_call.1} parent=1 // pred_region
      %1282 = dma.done [#allocation4], 4096
    $region69: #{tpu_custom_call.1} parent=1 // pred_fallthru
      _
    // Predicated region
    $region70: #{tpu_custom_call.1} parent=1 // pred_check
      _
    $region71: #{tpu_custom_call.1} parent=1 // pred_check_branch
      %1284 = sbr.rel (0) target = $region73
    $region72: #{tpu_custom_call.1} parent=1 // pred_region
      %1285 = dma.done [#allocation13], 4096
    $region73: #{tpu_custom_call.1} parent=1 // pred_fallthru
      _
    %1286 = vsyncpa [#allocation3], 1
    %1287 = vsyncpa [#allocation6], 1
    %1288 = vsyncpa [#allocation9], 1
    %1289 = vsyncpa [#allocation4], 1
    %1290 = vsyncpa [#allocation13], 1

// kernel: tpu_custom_call.1
$region0: #{tpu_custom_call.1}
  #allocation0 [shape = 'u32[]', space=smem, size = 0x4, offset = 0x4, fixed_abs, tag = 'smem constant byte address 0x4 - core index']
  #allocation1 [shape = 'u32[144,128]{1,0:T(1,128)}', space=vmem, size = 0x12000, scoped, tag = 'internal scratch']
  %s0 = inlined_call_operand.hbm [shape: f32[256,128], index: 0, kind: input, shape index: {}]
  %s1 = inlined_call_operand.hbm [shape: f32[128,128], index: 1, kind: input, shape index: {}]
  %s2 = inlined_call_operand.vmem [shape: f32[1,128], index: 2, kind: input, shape index: {}]
  %s3 = inlined_call_operand.hbm [shape: f32[128,128], index: 3, kind: input, shape index: {}]
  %s4 = inlined_call_operand.vmem [shape: f32[1,128], index: 4, kind: input, shape index: {}]
  %s5 = inlined_call_operand.hbm [shape: f32[128,128], index: 5, kind: input, shape index: {}]
  %s6 = inlined_call_operand.vmem [shape: f32[1,128], index: 6, kind: input, shape index: {}]
  %s7 = inlined_call_operand.hbm [shape: f32[128,128], index: 7, kind: input, shape index: {}]
  %s8 = inlined_call_operand.vmem [shape: f32[1,128], index: 8, kind: input, shape index: {}]
  %s9 = inlined_call_operand.hbm [shape: f32[256,128], index: 9, kind: output, shape index: {0}]
  %s10 = inlined_call_operand.hbm [shape: f32[256,128], index: 10, kind: output, shape index: {1}]
  %11 = xla_tuple %s9, %s10
  %s12 = sld [smem:[#allocation0]]
  $region74: #{tpu_custom_call.1} parent=0
    _
  %s14 = ssub.s32 1, %s12
  %s15 = scalar_select 0, %s14, %s12
  $region1: #{tpu_custom_call.1} parent=0
    #allocation2 [shape = 'u8[131072]{0}', space=vmem, size = 0x20000, scoped, tag = 'input window, operand 0, single buffered']
    #allocation3 [shape = 's32[1]{0}', space=sflag, size = 0x4, scoped, tag = 'scoped memory for tpu_custom_call.1']
    #allocation4 [shape = 's32[1]{0}', space=sflag, size = 0x4, scoped, tag = 'scoped memory for tpu_custom_call.1']
    #allocation5 [shape = 'u8[65536]{0}', space=vmem, size = 0x10000, scoped, tag = 'input window, operand 1, single buffered']
    #allocation6 [shape = 's32[1]{0}', space=sflag, size = 0x4, scoped, tag = 'scoped memory for tpu_custom_call.1']
    #allocation7 [shape = 'u8[65536]{0}', space=vmem, size = 0x10000, scoped, tag = 'input window, operand 3, single buffered']
    #allocation8 [shape = 'u8[65536]{0}', space=vmem, size = 0x10000, scoped, tag = 'input window, operand 5, single buffered']
    #allocation9 [shape = 's32[1]{0}', space=sflag, size = 0x4, scoped, tag = 'scoped memory for tpu_custom_call.1']
    #allocation10 [shape = 'u8[65536]{0}', space=vmem, size = 0x10000, scoped, tag = 'input window, operand 7, single buffered']
    #allocation11 [shape = 'u8[131072]{0}', space=vmem, size = 0x20000, scoped, tag = 'output window, operand 0, single buffered']
    #allocation12 [shape = 'u8[131072]{0}', space=vmem, size = 0x20000, scoped, tag = 'output window, operand 1, single buffered']
    #allocation13 [shape = 's32[1]{0}', space=sflag, size = 0x4, scoped, tag = 'scoped memory for tpu_custom_call.1']
    %16 = vsyncpa [#allocation3], 0
    %17 = vsyncpa [#allocation6], 0
    %18 = vsyncpa [#allocation9], 0
    %19 = vsyncpa [#allocation4], 0
    %20 = vsyncpa [#allocation13], 0
    // Predicated region
    $region2: #{tpu_custom_call.1} parent=1 // pred_check
      _
    $region3: #{tpu_custom_call.1} parent=1 // pred_check_branch
      %22 = sbr.rel (0) target = $region5
    $region4: #{tpu_custom_call.1} parent=1 // pred_region
      %s24 = ssub.s32 4096, 4096
      %25 = vsyncadd [#allocation3], %s24
      %s26 = sshll.u32 [#allocation2], 4
      %s27 = int_to_ptr.vmem [resolvable:$true] %s26
      %32 = dma.hbm_to_vmem [thread:$0]  %s0, 4096, %s27, [#allocation3], 128, 128, 8
    $region5: #{tpu_custom_call.1} parent=1 // pred_fallthru
      _
    // Predicated region
    $region6: #{tpu_custom_call.1} parent=1 // pred_check
      _
    $region7: #{tpu_custom_call.1} parent=1 // pred_check_branch
      %34 = sbr.rel (0) target = $region9
    $region8: #{tpu_custom_call.1} parent=1 // pred_region
      %s36 = ssub.s32 2048, 2048
      %37 = vsyncadd [#allocation6], %s36
      %s38 = sshll.u32 [#allocation5], 4
      %s39 = int_to_ptr.vmem [resolvable:$true] %s38
      %44 = dma.hbm_to_vmem [thread:$0]  %s1, 2048, %s39, [#allocation6], 128, 128, 8
    $region9: #{tpu_custom_call.1} parent=1 // pred_fallthru
      _
    // Predicated region
    $region10: #{tpu_custom_call.1} parent=1 // pred_check
      _
    $region11: #{tpu_custom_call.1} parent=1 // pred_check_branch
      %46 = sbr.rel (0) target = $region13
    $region12: #{tpu_custom_call.1} parent=1 // pred_region
      _
    $region13: #{tpu_custom_call.1} parent=1 // pred_fallthru
      _
    // Predicated region
    $region14: #{tpu_custom_call.1} parent=1 // pred_check
      _
    $region15: #{tpu_custom_call.1} parent=1 // pred_check_branch
      %48 = sbr.rel (0) target = $region17
    $region16: #{tpu_custom_call.1} parent=1 // pred_region
      %s50 = ssub.s32 2048, 2048
      %51 = vsyncadd [#allocation6], %s50
      %s52 = sshll.u32 [#allocation7], 4
      %s53 = int_to_ptr.vmem [resolvable:$true] %s52
      %58 = dma.hbm_to_vmem [thread:$0]  %s3, 2048, %s53, [#allocation6], 128, 128, 8
    $region17: #{tpu_custom_call.1} parent=1 // pred_fallthru
      _
    // Predicated region
    $region18: #{tpu_custom_call.1} parent=1 // pred_check
      _
    $region19: #{tpu_custom_call.1} parent=1 // pred_check_branch
      %60 = sbr.rel (0) target = $region21
    $region20: #{tpu_custom_call.1} parent=1 // pred_region
      _
    $region21: #{tpu_custom_call.1} parent=1 // pred_fallthru
      _
    // Predicated region
    $region22: #{tpu_custom_call.1} parent=1 // pred_check
      _
    $region23: #{tpu_custom_call.1} parent=1 // pred_check_branch
      %62 = sbr.rel (0) target = $region25
    $region24: #{tpu_custom_call.1} parent=1 // pred_region
      %s64 = ssub.s32 2048, 2048
      %65 = vsyncadd [#allocation9], %s64
      %s66 = sshll.u32 [#allocation8], 4
      %s67 = int_to_ptr.vmem [resolvable:$true] %s66
      %72 = dma.hbm_to_vmem [thread:$0]  %s5, 2048, %s67, [#allocation9], 128, 128, 8
    $region25: #{tpu_custom_call.1} parent=1 // pred_fallthru
      _
    // Predicated region
    $region26: #{tpu_custom_call.1} parent=1 // pred_check
      _
    $region27: #{tpu_custom_call.1} parent=1 // pred_check_branch
      %74 = sbr.rel (0) target = $region29
    $region28: #{tpu_custom_call.1} parent=1 // pred_region
      _
    $region29: #{tpu_custom_call.1} parent=1 // pred_fallthru
      _
    // Predicated region
    $region30: #{tpu_custom_call.1} parent=1 // pred_check
      _
    $region31: #{tpu_custom_call.1} parent=1 // pred_check_branch
      %76 = sbr.rel (0) target = $region33
    $region32: #{tpu_custom_call.1} parent=1 // pred_region
      %s78 = ssub.s32 2048, 2048
      %79 = vsyncadd [#allocation9], %s78
      %s80 = sshll.u32 [#allocation10], 4
      %s81 = int_to_ptr.vmem [resolvable:$true] %s80
      %86 = dma.hbm_to_vmem [thread:$0]  %s7, 2048, %s81, [#allocation9], 128, 128, 8
    $region33: #{tpu_custom_call.1} parent=1 // pred_fallthru
      _
    // Predicated region
    $region34: #{tpu_custom_call.1} parent=1 // pred_check
      _
    $region35: #{tpu_custom_call.1} parent=1 // pred_check_branch
      %88 = sbr.rel (0) target = $region37
    $region36: #{tpu_custom_call.1} parent=1 // pred_region
      _
    $region37: #{tpu_custom_call.1} parent=1 // pred_fallthru
      _
    // Predicated region
    $region38: #{tpu_custom_call.1} parent=1 // pred_check
      _
    $region39: #{tpu_custom_call.1} parent=1 // pred_check_branch
      %90 = sbr.rel (0) target = $region41
    $region40: #{tpu_custom_call.1} parent=1 // pred_region
      %91 = dma.done [#allocation3], 4096
    $region41: #{tpu_custom_call.1} parent=1 // pred_fallthru
      _
    // Predicated region
    $region42: #{tpu_custom_call.1} parent=1 // pred_check
      _
    $region43: #{tpu_custom_call.1} parent=1 // pred_check_branch
      %93 = sbr.rel (0) target = $region45
    $region44: #{tpu_custom_call.1} parent=1 // pred_region
      %94 = dma.done [#allocation6], 2048
    $region45: #{tpu_custom_call.1} parent=1 // pred_fallthru
      _
    // Predicated region
    $region46: #{tpu_custom_call.1} parent=1 // pred_check
      _
    $region47: #{tpu_custom_call.1} parent=1 // pred_check_branch
      %96 = sbr.rel (0) target = $region49
    $region48: #{tpu_custom_call.1} parent=1 // pred_region
      %97 = dma.done [#allocation6], 2048
    $region49: #{tpu_custom_call.1} parent=1 // pred_fallthru
      _
    // Predicated region
    $region50: #{tpu_custom_call.1} parent=1 // pred_check
      _
    $region51: #{tpu_custom_call.1} parent=1 // pred_check_branch
      %99 = sbr.rel (0) target = $region53
    $region52: #{tpu_custom_call.1} parent=1 // pred_region
      %100 = dma.done [#allocation9], 2048
    $region53: #{tpu_custom_call.1} parent=1 // pred_fallthru
      _
    // Predicated region
    $region54: #{tpu_custom_call.1} parent=1 // pred_check
      _
    $region55: #{tpu_custom_call.1} parent=1 // pred_check_branch
      %102 = sbr.rel (0) target = $region57
    $region56: #{tpu_custom_call.1} parent=1 // pred_region
      %103 = dma.done [#allocation9], 2048
    $region57: #{tpu_custom_call.1} parent=1 // pred_fallthru
      _
    %v104 = vld [vmem:[#allocation2] sm:$0xff]
    %v105 = vld [vmem:[#allocation2 + $0x8] sm:$0xff]
    %v106 = vld [vmem:[#allocation2 + $0x10] sm:$0xff]
    %v107 = vld [vmem:[#allocation2 + $0x18] sm:$0xff]
    %v108 = vld [vmem:[#allocation2 + $0x20] sm:$0xff]
    %v109 = vld [vmem:[#allocation2 + $0x28] sm:$0xff]
    %v110 = vld [vmem:[#allocation2 + $0x30] sm:$0xff]
    %v111 = vld [vmem:[#allocation2 + $0x38] sm:$0xff]
    %v112 = vld [vmem:[#allocation2 + $0x40] sm:$0xff]
    %v113 = vld [vmem:[#allocation2 + $0x48] sm:$0xff]
    %v114 = vld [vmem:[#allocation2 + $0x50] sm:$0xff]
    %v115 = vld [vmem:[#allocation2 + $0x58] sm:$0xff]
    %v116 = vld [vmem:[#allocation2 + $0x60] sm:$0xff]
    %v117 = vld [vmem:[#allocation2 + $0x68] sm:$0xff]
    %v118 = vld [vmem:[#allocation2 + $0x70] sm:$0xff]
    %v119 = vld [vmem:[#allocation2 + $0x78] sm:$0xff]
    %v120 = vld [vmem:[#allocation2 + $0x80] sm:$0xff]
    %v121 = vld [vmem:[#allocation2 + $0x88] sm:$0xff]
    %v122 = vld [vmem:[#allocation2 + $0x90] sm:$0xff]
    %v123 = vld [vmem:[#allocation2 + $0x98] sm:$0xff]
    %v124 = vld [vmem:[#allocation2 + $0xa0] sm:$0xff]
    %v125 = vld [vmem:[#allocation2 + $0xa8] sm:$0xff]
    %v126 = vld [vmem:[#allocation2 + $0xb0] sm:$0xff]
    %v127 = vld [vmem:[#allocation2 + $0xb8] sm:$0xff]
    %v128 = vld [vmem:[#allocation2 + $0xc0] sm:$0xff]
    %v129 = vld [vmem:[#allocation2 + $0xc8] sm:$0xff]
    %v130 = vld [vmem:[#allocation2 + $0xd0] sm:$0xff]
    %v131 = vld [vmem:[#allocation2 + $0xd8] sm:$0xff]
    %v132 = vld [vmem:[#allocation2 + $0xe0] sm:$0xff]
    %v133 = vld [vmem:[#allocation2 + $0xe8] sm:$0xff]
    %v134 = vld [vmem:[#allocation2 + $0xf0] sm:$0xff]
    %v135 = vld [vmem:[#allocation2 + $0xf8] sm:$0xff]
    %v136 = vld [vmem:[#allocation5] sm:$0xff]
    %v137 = vld [vmem:[#allocation5 + $0x8] sm:$0xff]
    %v138 = vld [vmem:[#allocation5 + $0x10] sm:$0xff]
    %v139 = vld [vmem:[#allocation5 + $0x18] sm:$0xff]
    %v140 = vld [vmem:[#allocation5 + $0x20] sm:$0xff]
    %v141 = vld [vmem:[#allocation5 + $0x28] sm:$0xff]
    %v142 = vld [vmem:[#allocation5 + $0x30] sm:$0xff]
    %v143 = vld [vmem:[#allocation5 + $0x38] sm:$0xff]
    %v144 = vld [vmem:[#allocation5 + $0x40] sm:$0xff]
    %v145 = vld [vmem:[#allocation5 + $0x48] sm:$0xff]
    %v146 = vld [vmem:[#allocation5 + $0x50] sm:$0xff]
    %v147 = vld [vmem:[#allocation5 + $0x58] sm:$0xff]
    %v148 = vld [vmem:[#allocation5 + $0x60] sm:$0xff]
    %v149 = vld [vmem:[#allocation5 + $0x68] sm:$0xff]
    %v150 = vld [vmem:[#allocation5 + $0x70] sm:$0xff]
    %v151 = vld [vmem:[#allocation5 + $0x78] sm:$0xff]
    %v152 = vld [vmem:[%s2] sm:$0x1]
    %v154 = vlaneseq
    %v155 = vshrl.u32 %v154, 7
    %v156 = vsub.s32 0, %v155
    %v157 = vrot.slane %v152, %v156
    %159 = vmatprep.subr.mxu0 0.0
    %160 = vmatpush1.msra.mxu0 %v136
    %161 = vmatprep.subr.mxu0 0.0
    %162 = vmatpush1.msra.mxu0 %v137
    %163 = vmatprep.subr.mxu0 0.0
    %164 = vmatpush1.msra.mxu0 %v138
    %165 = vmatprep.subr.mxu0 0.0
    %166 = vmatpush1.msra.mxu0 %v139
    %167 = vmatprep.subr.mxu0 0.0
    %168 = vmatpush1.msra.mxu0 %v140
    %169 = vmatprep.subr.mxu0 0.0
    %170 = vmatpush1.msra.mxu0 %v141
    %171 = vmatprep.subr.mxu0 0.0
    %172 = vmatpush1.msra.mxu0 %v142
    %173 = vmatprep.subr.mxu0 0.0
    %174 = vmatpush1.msra.mxu0 %v143
    %175 = vmatprep.subr.mxu0 0.0
    %176 = vmatpush1.msra.mxu0 %v144
    %177 = vmatprep.subr.mxu0 0.0
    %178 = vmatpush1.msra.mxu0 %v145
    %179 = vmatprep.subr.mxu0 0.0
    %180 = vmatpush1.msra.mxu0 %v146
    %181 = vmatprep.subr.mxu0 0.0
    %182 = vmatpush1.msra.mxu0 %v147
    %183 = vmatprep.subr.mxu0 0.0
    %184 = vmatpush1.msra.mxu0 %v148
    %185 = vmatprep.subr.mxu0 0.0
    %186 = vmatpush1.msra.mxu0 %v149
    %187 = vmatprep.subr.mxu0 0.0
    %188 = vmatpush1.msra.mxu0 %v150
    %189 = vmatprep.subr.mxu0 0.0
    %190 = vmatpush1.msra.mxu0 %v151
    %191 = vmatprep.subr.mxu0 0.0
    %192 = vmatpush1.msra.mxu0 0.0
    %193 = vmatprep.subr.mxu0 0.0
    %194 = vmatpush1.msra.mxu0 0.0
    %195 = vmatprep.subr.mxu0 0.0
    %196 = vmatpush1.msra.mxu0 0.0
    %197 = vmatprep.subr.mxu0 0.0
    %198 = vmatpush1.msra.mxu0 0.0
    %199 = vmatprep.subr.mxu0 0.0
    %200 = vmatpush1.msra.mxu0 0.0
    %201 = vmatprep.subr.mxu0 0.0
    %202 = vmatpush1.msra.mxu0 0.0
    %203 = vmatprep.subr.mxu0 0.0
    %204 = vmatpush1.msra.mxu0 0.0
    %205 = vmatprep.subr.mxu0 0.0
    %206 = vmatpush1.msra.mxu0 0.0
    %207 = vmatprep.subr.mxu0 0.0
    %208 = vmatpush1.msra.mxu0 0.0
    %209 = vmatprep.subr.mxu0 0.0
    %210 = vmatpush1.msra.mxu0 0.0
    %211 = vmatprep.subr.mxu0 0.0
    %212 = vmatpush1.msra.mxu0 0.0
    %213 = vmatprep.subr.mxu0 0.0
    %214 = vmatpush1.msra.mxu0 0.0
    %215 = vmatprep.subr.mxu0 0.0
    %216 = vmatpush1.msra.mxu0 0.0
    %217 = vmatprep.subr.mxu0 0.0
    %218 = vmatpush1.msra.mxu0 0.0
    %219 = vmatprep.subr.mxu0 0.0
    %220 = vmatpush1.msra.mxu0 0.0
    %221 = vmatprep.subr.mxu0 0.0
    %222 = vmatpush1.msra.mxu0 0.0
    %223 = vmatprep.mubr.f32.mxu0 0.0
    %224 = vmatmul.mubr.f32.gmra.mrb[0].mxu0 %v104
    %v225 = vpop.f32.mrb[0].mxu0
    %v226 = vadd.f32 %v157, %v225
    %v227 = vpop.f32.mrb[0].mxu0
    %228 = vmatprep.mubr.f32.mxu0 0.0
    %229 = vmatmul.mubr.f32.gmra.mrb[0].mxu0 %v105
    %v230 = vpop.f32.mrb[0].mxu0
    %v231 = vadd.f32 %v157, %v230
    %v232 = vpop.f32.mrb[0].mxu0
    %233 = vmatprep.mubr.f32.mxu0 0.0
    %234 = vmatmul.mubr.f32.gmra.mrb[0].mxu0 %v106
    %v235 = vpop.f32.mrb[0].mxu0
    %v236 = vadd.f32 %v157, %v235
    %v237 = vpop.f32.mrb[0].mxu0
    %238 = vmatprep.mubr.f32.mxu0 0.0
    %239 = vmatmul.mubr.f32.gmra.mrb[0].mxu0 %v107
    %v240 = vpop.f32.mrb[0].mxu0
    %v241 = vadd.f32 %v157, %v240
    %v242 = vpop.f32.mrb[0].mxu0
    %243 = vmatprep.mubr.f32.mxu0 0.0
    %244 = vmatmul.mubr.f32.gmra.mrb[0].mxu0 %v108
    %v245 = vpop.f32.mrb[0].mxu0
    %v246 = vadd.f32 %v157, %v245
    %v247 = vpop.f32.mrb[0].mxu0
    %248 = vmatprep.mubr.f32.mxu0 0.0
    %249 = vmatmul.mubr.f32.gmra.mrb[0].mxu0 %v109
    %v250 = vpop.f32.mrb[0].mxu0
    %v251 = vadd.f32 %v157, %v250
    %v252 = vpop.f32.mrb[0].mxu0
    %253 = vmatprep.mubr.f32.mxu0 0.0
    %254 = vmatmul.mubr.f32.gmra.mrb[0].mxu0 %v110
    %v255 = vpop.f32.mrb[0].mxu0
    %v256 = vadd.f32 %v157, %v255
    %v257 = vpop.f32.mrb[0].mxu0
    %258 = vmatprep.mubr.f32.mxu0 0.0
    %259 = vmatmul.mubr.f32.gmra.mrb[0].mxu0 %v111
    %v260 = vpop.f32.mrb[0].mxu0
    %v261 = vadd.f32 %v157, %v260
    %v262 = vpop.f32.mrb[0].mxu0
    %263 = vmatprep.mubr.f32.mxu0 0.0
    %264 = vmatmul.mubr.f32.gmra.mrb[0].mxu0 %v112
    %v265 = vpop.f32.mrb[0].mxu0
    %v266 = vadd.f32 %v157, %v265
    %v267 = vpop.f32.mrb[0].mxu0
    %268 = vmatprep.mubr.f32.mxu0 0.0
    %269 = vmatmul.mubr.f32.gmra.mrb[0].mxu0 %v113
    %v270 = vpop.f32.mrb[0].mxu0
    %v271 = vadd.f32 %v157, %v270
    %v272 = vpop.f32.mrb[0].mxu0
    %273 = vmatprep.mubr.f32.mxu0 0.0
    %274 = vmatmul.mubr.f32.gmra.mrb[0].mxu0 %v114
    %v275 = vpop.f32.mrb[0].mxu0
    %v276 = vadd.f32 %v157, %v275
    %v277 = vpop.f32.mrb[0].mxu0
    %278 = vmatprep.mubr.f32.mxu0 0.0
    %279 = vmatmul.mubr.f32.gmra.mrb[0].mxu0 %v115
    %v280 = vpop.f32.mrb[0].mxu0
    %v281 = vadd.f32 %v157, %v280
    %v282 = vpop.f32.mrb[0].mxu0
    %283 = vmatprep.mubr.f32.mxu0 0.0
    %284 = vmatmul.mubr.f32.gmra.mrb[0].mxu0 %v116
    %v285 = vpop.f32.mrb[0].mxu0
    %v286 = vadd.f32 %v157, %v285
    %v287 = vpop.f32.mrb[0].mxu0
    %288 = vmatprep.mubr.f32.mxu0 0.0
    %289 = vmatmul.mubr.f32.gmra.mrb[0].mxu0 %v117
    %v290 = vpop.f32.mrb[0].mxu0
    %v291 = vadd.f32 %v157, %v290
    %v292 = vpop.f32.mrb[0].mxu0
    %293 = vmatprep.mubr.f32.mxu0 0.0
    %294 = vmatmul.mubr.f32.gmra.mrb[0].mxu0 %v118
    %v295 = vpop.f32.mrb[0].mxu0
    %v296 = vadd.f32 %v157, %v295
    %v297 = vpop.f32.mrb[0].mxu0
    %298 = vmatprep.mubr.f32.mxu0 0.0
    %299 = vmatmul.mubr.f32.gmra.mrb[0].mxu0 %v119
    %v300 = vpop.f32.mrb[0].mxu0
    %v301 = vadd.f32 %v157, %v300
    %v302 = vpop.f32.mrb[0].mxu0
    %303 = vmatprep.mubr.f32.mxu0 0.0
    %304 = vmatmul.mubr.f32.gmra.mrb[0].mxu0 %v120
    %v305 = vpop.f32.mrb[0].mxu0
    %v306 = vadd.f32 %v157, %v305
    %v307 = vpop.f32.mrb[0].mxu0
    %308 = vmatprep.mubr.f32.mxu0 0.0
    %309 = vmatmul.mubr.f32.gmra.mrb[0].mxu0 %v121
    %v310 = vpop.f32.mrb[0].mxu0
    %v311 = vadd.f32 %v157, %v310
    %v312 = vpop.f32.mrb[0].mxu0
    %313 = vmatprep.mubr.f32.mxu0 0.0
    %314 = vmatmul.mubr.f32.gmra.mrb[0].mxu0 %v122
    %v315 = vpop.f32.mrb[0].mxu0
    %v316 = vadd.f32 %v157, %v315
    %v317 = vpop.f32.mrb[0].mxu0
    %318 = vmatprep.mubr.f32.mxu0 0.0
    %319 = vmatmul.mubr.f32.gmra.mrb[0].mxu0 %v123
    %v320 = vpop.f32.mrb[0].mxu0
    %v321 = vadd.f32 %v157, %v320
    %v322 = vpop.f32.mrb[0].mxu0
    %323 = vmatprep.mubr.f32.mxu0 0.0
    %324 = vmatmul.mubr.f32.gmra.mrb[0].mxu0 %v124
    %v325 = vpop.f32.mrb[0].mxu0
    %v326 = vadd.f32 %v157, %v325
    %v327 = vpop.f32.mrb[0].mxu0
    %328 = vmatprep.mubr.f32.mxu0 0.0
    %329 = vmatmul.mubr.f32.gmra.mrb[0].mxu0 %v125
    %v330 = vpop.f32.mrb[0].mxu0
    %v331 = vadd.f32 %v157, %v330
    %v332 = vpop.f32.mrb[0].mxu0
    %333 = vmatprep.mubr.f32.mxu0 0.0
    %334 = vmatmul.mubr.f32.gmra.mrb[0].mxu0 %v126
    %v335 = vpop.f32.mrb[0].mxu0
    %v336 = vadd.f32 %v157, %v335
    %v337 = vpop.f32.mrb[0].mxu0
    %338 = vmatprep.mubr.f32.mxu0 0.0
    %339 = vmatmul.mubr.f32.gmra.mrb[0].mxu0 %v127
    %v340 = vpop.f32.mrb[0].mxu0
    %v341 = vadd.f32 %v157, %v340
    %v342 = vpop.f32.mrb[0].mxu0
    %343 = vmatprep.mubr.f32.mxu0 0.0
    %344 = vmatmul.mubr.f32.gmra.mrb[0].mxu0 %v128
    %v345 = vpop.f32.mrb[0].mxu0
    %v346 = vadd.f32 %v157, %v345
    %v347 = vpop.f32.mrb[0].mxu0
    %348 = vmatprep.mubr.f32.mxu0 0.0
    %349 = vmatmul.mubr.f32.gmra.mrb[0].mxu0 %v129
    %v350 = vpop.f32.mrb[0].mxu0
    %v351 = vadd.f32 %v157, %v350
    %v352 = vpop.f32.mrb[0].mxu0
    %353 = vmatprep.mubr.f32.mxu0 0.0
    %354 = vmatmul.mubr.f32.gmra.mrb[0].mxu0 %v130
    %v355 = vpop.f32.mrb[0].mxu0
    %v356 = vadd.f32 %v157, %v355
    %v357 = vpop.f32.mrb[0].mxu0
    %358 = vmatprep.mubr.f32.mxu0 0.0
    %359 = vmatmul.mubr.f32.gmra.mrb[0].mxu0 %v131
    %v360 = vpop.f32.mrb[0].mxu0
    %v361 = vadd.f32 %v157, %v360
    %v362 = vpop.f32.mrb[0].mxu0
    %363 = vmatprep.mubr.f32.mxu0 0.0
    %364 = vmatmul.mubr.f32.gmra.mrb[0].mxu0 %v132
    %v365 = vpop.f32.mrb[0].mxu0
    %v366 = vadd.f32 %v157, %v365
    %v367 = vpop.f32.mrb[0].mxu0
    %368 = vmatprep.mubr.f32.mxu0 0.0
    %369 = vmatmul.mubr.f32.gmra.mrb[0].mxu0 %v133
    %v370 = vpop.f32.mrb[0].mxu0
    %v371 = vadd.f32 %v157, %v370
    %v372 = vpop.f32.mrb[0].mxu0
    %373 = vmatprep.mubr.f32.mxu0 0.0
    %374 = vmatmul.mubr.f32.gmra.mrb[0].mxu0 %v134
    %v375 = vpop.f32.mrb[0].mxu0
    %v376 = vadd.f32 %v157, %v375
    %v377 = vpop.f32.mrb[0].mxu0
    %378 = vmatprep.mubr.f32.mxu0 0.0
    %379 = vmatmul.mubr.f32.gmra.mrb[0].mxu0 %v135
    %v380 = vpop.f32.mrb[0].mxu0
    %v381 = vadd.f32 %v157, %v380
    %v382 = vpop.f32.mrb[0].mxu0
    %383 = vdwg.mxu0
    %v384 = vmax.f32 %v226, 0.0
    %v385 = vmax.f32 %v231, 0.0
    %v386 = vmax.f32 %v236, 0.0
    %v387 = vmax.f32 %v241, 0.0
    %v388 = vmax.f32 %v246, 0.0
    %v389 = vmax.f32 %v251, 0.0
    %v390 = vmax.f32 %v256, 0.0
    %v391 = vmax.f32 %v261, 0.0
    %v392 = vmax.f32 %v266, 0.0
    %v393 = vmax.f32 %v271, 0.0
    %v394 = vmax.f32 %v276, 0.0
    %v395 = vmax.f32 %v281, 0.0
    %v396 = vmax.f32 %v286, 0.0
    %v397 = vmax.f32 %v291, 0.0
    %v398 = vmax.f32 %v296, 0.0
    %v399 = vmax.f32 %v301, 0.0
    %v400 = vmax.f32 %v306, 0.0
    %v401 = vmax.f32 %v311, 0.0
    %v402 = vmax.f32 %v316, 0.0
    %v403 = vmax.f32 %v321, 0.0
    %v404 = vmax.f32 %v326, 0.0
    %v405 = vmax.f32 %v331, 0.0
    %v406 = vmax.f32 %v336, 0.0
    %v407 = vmax.f32 %v341, 0.0
    %v408 = vmax.f32 %v346, 0.0
    %v409 = vmax.f32 %v351, 0.0
    %v410 = vmax.f32 %v356, 0.0
    %v411 = vmax.f32 %v361, 0.0
    %v412 = vmax.f32 %v366, 0.0
    %v413 = vmax.f32 %v371, 0.0
    %v414 = vmax.f32 %v376, 0.0
    %v415 = vmax.f32 %v381, 0.0
    %v416 = vld [vmem:[#allocation7] sm:$0xff]
    %v417 = vld [vmem:[#allocation7 + $0x8] sm:$0xff]
    %v418 = vld [vmem:[#allocation7 + $0x10] sm:$0xff]
    %v419 = vld [vmem:[#allocation7 + $0x18] sm:$0xff]
    %v420 = vld [vmem:[#allocation7 + $0x20] sm:$0xff]
    %v421 = vld [vmem:[#allocation7 + $0x28] sm:$0xff]
    %v422 = vld [vmem:[#allocation7 + $0x30] sm:$0xff]
    %v423 = vld [vmem:[#allocation7 + $0x38] sm:$0xff]
    %v424 = vld [vmem:[#allocation7 + $0x40] sm:$0xff]
    %v425 = vld [vmem:[#allocation7 + $0x48] sm:$0xff]
    %v426 = vld [vmem:[#allocation7 + $0x50] sm:$0xff]
    %v427 = vld [vmem:[#allocation7 + $0x58] sm:$0xff]
    %v428 = vld [vmem:[#allocation7 + $0x60] sm:$0xff]
    %v429 = vld [vmem:[#allocation7 + $0x68] sm:$0xff]
    %v430 = vld [vmem:[#allocation7 + $0x70] sm:$0xff]
    %v431 = vld [vmem:[#allocation7 + $0x78] sm:$0xff]
    %v432 = vld [vmem:[%s4] sm:$0x1]
    %v434 = vlaneseq
    %v435 = vshrl.u32 %v434, 7
    %v436 = vsub.s32 0, %v435
    %v437 = vrot.slane %v432, %v436
    %439 = vmatprep.subr.mxu0 0.0
    %440 = vmatpush1.msra.mxu0 %v416
    %441 = vmatprep.subr.mxu0 0.0
    %442 = vmatpush1.msra.mxu0 %v417
    %443 = vmatprep.subr.mxu0 0.0
    %444 = vmatpush1.msra.mxu0 %v418
    %445 = vmatprep.subr.mxu0 0.0
    %446 = vmatpush1.msra.mxu0 %v419
    %447 = vmatprep.subr.mxu0 0.0
    %448 = vmatpush1.msra.mxu0 %v420
    %449 = vmatprep.subr.mxu0 0.0
    %450 = vmatpush1.msra.mxu0 %v421
    %451 = vmatprep.subr.mxu0 0.0
    %452 = vmatpush1.msra.mxu0 %v422
    %453 = vmatprep.subr.mxu0 0.0
    %454 = vmatpush1.msra.mxu0 %v423
    %455 = vmatprep.subr.mxu0 0.0
    %456 = vmatpush1.msra.mxu0 %v424
    %457 = vmatprep.subr.mxu0 0.0
    %458 = vmatpush1.msra.mxu0 %v425
    %459 = vmatprep.subr.mxu0 0.0
    %460 = vmatpush1.msra.mxu0 %v426
    %461 = vmatprep.subr.mxu0 0.0
    %462 = vmatpush1.msra.mxu0 %v427
    %463 = vmatprep.subr.mxu0 0.0
    %464 = vmatpush1.msra.mxu0 %v428
    %465 = vmatprep.subr.mxu0 0.0
    %466 = vmatpush1.msra.mxu0 %v429
    %467 = vmatprep.subr.mxu0 0.0
    %468 = vmatpush1.msra.mxu0 %v430
    %469 = vmatprep.subr.mxu0 0.0
    %470 = vmatpush1.msra.mxu0 %v431
    %471 = vmatprep.subr.mxu0 0.0
    %472 = vmatpush1.msra.mxu0 0.0
    %473 = vmatprep.subr.mxu0 0.0
    %474 = vmatpush1.msra.mxu0 0.0
    %475 = vmatprep.subr.mxu0 0.0
    %476 = vmatpush1.msra.mxu0 0.0
    %477 = vmatprep.subr.mxu0 0.0
    %478 = vmatpush1.msra.mxu0 0.0
    %479 = vmatprep.subr.mxu0 0.0
    %480 = vmatpush1.msra.mxu0 0.0
    %481 = vmatprep.subr.mxu0 0.0
    %482 = vmatpush1.msra.mxu0 0.0
    %483 = vmatprep.subr.mxu0 0.0
    %484 = vmatpush1.msra.mxu0 0.0
    %485 = vmatprep.subr.mxu0 0.0
    %486 = vmatpush1.msra.mxu0 0.0
    %487 = vmatprep.subr.mxu0 0.0
    %488 = vmatpush1.msra.mxu0 0.0
    %489 = vmatprep.subr.mxu0 0.0
    %490 = vmatpush1.msra.mxu0 0.0
    %491 = vmatprep.subr.mxu0 0.0
    %492 = vmatpush1.msra.mxu0 0.0
    %493 = vmatprep.subr.mxu0 0.0
    %494 = vmatpush1.msra.mxu0 0.0
    %495 = vmatprep.subr.mxu0 0.0
    %496 = vmatpush1.msra.mxu0 0.0
    %497 = vmatprep.subr.mxu0 0.0
    %498 = vmatpush1.msra.mxu0 0.0
    %499 = vmatprep.subr.mxu0 0.0
    %500 = vmatpush1.msra.mxu0 0.0
    %501 = vmatprep.subr.mxu0 0.0
    %502 = vmatpush1.msra.mxu0 0.0
    %503 = vmatprep.mubr.f32.mxu0 0.0
    %504 = vmatmul.mubr.f32.gmra.mrb[0].mxu0 %v384
    %v505 = vpop.f32.mrb[0].mxu0
    %v506 = vadd.f32 %v437, %v505
    %v507 = vpop.f32.mrb[0].mxu0
    %508 = vmatprep.mubr.f32.mxu0 0.0
    %509 = vmatmul.mubr.f32.gmra.mrb[0].mxu0 %v385
    %v510 = vpop.f32.mrb[0].mxu0
    %v511 = vadd.f32 %v437, %v510
    %v512 = vpop.f32.mrb[0].mxu0
    %513 = vmatprep.mubr.f32.mxu0 0.0
    %514 = vmatmul.mubr.f32.gmra.mrb[0].mxu0 %v386
    %v515 = vpop.f32.mrb[0].mxu0
    %v516 = vadd.f32 %v437, %v515
    %v517 = vpop.f32.mrb[0].mxu0
    %518 = vmatprep.mubr.f32.mxu0 0.0
    %519 = vmatmul.mubr.f32.gmra.mrb[0].mxu0 %v387
    %v520 = vpop.f32.mrb[0].mxu0
    %v521 = vadd.f32 %v437, %v520
    %v522 = vpop.f32.mrb[0].mxu0
    %523 = vmatprep.mubr.f32.mxu0 0.0
    %524 = vmatmul.mubr.f32.gmra.mrb[0].mxu0 %v388
    %v525 = vpop.f32.mrb[0].mxu0
    %v526 = vadd.f32 %v437, %v525
    %v527 = vpop.f32.mrb[0].mxu0
    %528 = vmatprep.mubr.f32.mxu0 0.0
    %529 = vmatmul.mubr.f32.gmra.mrb[0].mxu0 %v389
    %v530 = vpop.f32.mrb[0].mxu0
    %v531 = vadd.f32 %v437, %v530
    %v532 = vpop.f32.mrb[0].mxu0
    %533 = vmatprep.mubr.f32.mxu0 0.0
    %534 = vmatmul.mubr.f32.gmra.mrb[0].mxu0 %v390
    %v535 = vpop.f32.mrb[0].mxu0
    %v536 = vadd.f32 %v437, %v535
    %v537 = vpop.f32.mrb[0].mxu0
    %538 = vmatprep.mubr.f32.mxu0 0.0
    %539 = vmatmul.mubr.f32.gmra.mrb[0].mxu0 %v391
    %v540 = vpop.f32.mrb[0].mxu0
    %v541 = vadd.f32 %v437, %v540
    %v542 = vpop.f32.mrb[0].mxu0
    %543 = vmatprep.mubr.f32.mxu0 0.0
    %544 = vmatmul.mubr.f32.gmra.mrb[0].mxu0 %v392
    %v545 = vpop.f32.mrb[0].mxu0
    %v546 = vadd.f32 %v437, %v545
    %v547 = vpop.f32.mrb[0].mxu0
    %548 = vmatprep.mubr.f32.mxu0 0.0
    %549 = vmatmul.mubr.f32.gmra.mrb[0].mxu0 %v393
    %v550 = vpop.f32.mrb[0].mxu0
    %v551 = vadd.f32 %v437, %v550
    %v552 = vpop.f32.mrb[0].mxu0
    %553 = vmatprep.mubr.f32.mxu0 0.0
    %554 = vmatmul.mubr.f32.gmra.mrb[0].mxu0 %v394
    %v555 = vpop.f32.mrb[0].mxu0
    %v556 = vadd.f32 %v437, %v555
    %v557 = vpop.f32.mrb[0].mxu0
    %558 = vmatprep.mubr.f32.mxu0 0.0
    %559 = vmatmul.mubr.f32.gmra.mrb[0].mxu0 %v395
    %v560 = vpop.f32.mrb[0].mxu0
    %v561 = vadd.f32 %v437, %v560
    %v562 = vpop.f32.mrb[0].mxu0
    %563 = vmatprep.mubr.f32.mxu0 0.0
    %564 = vmatmul.mubr.f32.gmra.mrb[0].mxu0 %v396
    %v565 = vpop.f32.mrb[0].mxu0
    %v566 = vadd.f32 %v437, %v565
    %v567 = vpop.f32.mrb[0].mxu0
    %568 = vmatprep.mubr.f32.mxu0 0.0
    %569 = vmatmul.mubr.f32.gmra.mrb[0].mxu0 %v397
    %v570 = vpop.f32.mrb[0].mxu0
    %v571 = vadd.f32 %v437, %v570
    %v572 = vpop.f32.mrb[0].mxu0
    %573 = vmatprep.mubr.f32.mxu0 0.0
    %574 = vmatmul.mubr.f32.gmra.mrb[0].mxu0 %v398
    %v575 = vpop.f32.mrb[0].mxu0
    %v576 = vadd.f32 %v437, %v575
    %v577 = vpop.f32.mrb[0].mxu0
    %578 = vmatprep.mubr.f32.mxu0 0.0
    %579 = vmatmul.mubr.f32.gmra.mrb[0].mxu0 %v399
    %v580 = vpop.f32.mrb[0].mxu0
    %v581 = vadd.f32 %v437, %v580
    %v582 = vpop.f32.mrb[0].mxu0
    %583 = vmatprep.mubr.f32.mxu0 0.0
    %584 = vmatmul.mubr.f32.gmra.mrb[0].mxu0 %v400
    %v585 = vpop.f32.mrb[0].mxu0
    %v586 = vadd.f32 %v437, %v585
    %v587 = vpop.f32.mrb[0].mxu0
    %588 = vmatprep.mubr.f32.mxu0 0.0
    %589 = vmatmul.mubr.f32.gmra.mrb[0].mxu0 %v401
    %v590 = vpop.f32.mrb[0].mxu0
    %v591 = vadd.f32 %v437, %v590
    %v592 = vpop.f32.mrb[0].mxu0
    %593 = vmatprep.mubr.f32.mxu0 0.0
    %594 = vmatmul.mubr.f32.gmra.mrb[0].mxu0 %v402
    %v595 = vpop.f32.mrb[0].mxu0
    %v596 = vadd.f32 %v437, %v595
    %v597 = vpop.f32.mrb[0].mxu0
    %598 = vmatprep.mubr.f32.mxu0 0.0
    %599 = vmatmul.mubr.f32.gmra.mrb[0].mxu0 %v403
    %v600 = vpop.f32.mrb[0].mxu0
    %v601 = vadd.f32 %v437, %v600
    %v602 = vpop.f32.mrb[0].mxu0
    %603 = vmatprep.mubr.f32.mxu0 0.0
    %604 = vmatmul.mubr.f32.gmra.mrb[0].mxu0 %v404
    %v605 = vpop.f32.mrb[0].mxu0
    %v606 = vadd.f32 %v437, %v605
    %v607 = vpop.f32.mrb[0].mxu0
    %608 = vmatprep.mubr.f32.mxu0 0.0
    %609 = vmatmul.mubr.f32.gmra.mrb[0].mxu0 %v405
    %v610 = vpop.f32.mrb[0].mxu0
    %v611 = vadd.f32 %v437, %v610
    %v612 = vpop.f32.mrb[0].mxu0
    %613 = vmatprep.mubr.f32.mxu0 0.0
    %614 = vmatmul.mubr.f32.gmra.mrb[0].mxu0 %v406
    %v615 = vpop.f32.mrb[0].mxu0
    %v616 = vadd.f32 %v437, %v615
    %v617 = vpop.f32.mrb[0].mxu0
    %618 = vmatprep.mubr.f32.mxu0 0.0
    %619 = vmatmul.mubr.f32.gmra.mrb[0].mxu0 %v407
    %v620 = vpop.f32.mrb[0].mxu0
    %v621 = vadd.f32 %v437, %v620
    %v622 = vpop.f32.mrb[0].mxu0
    %623 = vmatprep.mubr.f32.mxu0 0.0
    %624 = vmatmul.mubr.f32.gmra.mrb[0].mxu0 %v408
    %v625 = vpop.f32.mrb[0].mxu0
    %v626 = vadd.f32 %v437, %v625
    %v627 = vpop.f32.mrb[0].mxu0
    %628 = vmatprep.mubr.f32.mxu0 0.0
    %629 = vmatmul.mubr.f32.gmra.mrb[0].mxu0 %v409
    %v630 = vpop.f32.mrb[0].mxu0
    %v631 = vadd.f32 %v437, %v630
    %v632 = vpop.f32.mrb[0].mxu0
    %633 = vmatprep.mubr.f32.mxu0 0.0
    %634 = vmatmul.mubr.f32.gmra.mrb[0].mxu0 %v410
    %v635 = vpop.f32.mrb[0].mxu0
    %v636 = vadd.f32 %v437, %v635
    %v637 = vpop.f32.mrb[0].mxu0
    %638 = vmatprep.mubr.f32.mxu0 0.0
    %639 = vmatmul.mubr.f32.gmra.mrb[0].mxu0 %v411
    %v640 = vpop.f32.mrb[0].mxu0
    %v641 = vadd.f32 %v437, %v640
    %v642 = vpop.f32.mrb[0].mxu0
    %643 = vmatprep.mubr.f32.mxu0 0.0
    %644 = vmatmul.mubr.f32.gmra.mrb[0].mxu0 %v412
    %v645 = vpop.f32.mrb[0].mxu0
    %v646 = vadd.f32 %v437, %v645
    %v647 = vpop.f32.mrb[0].mxu0
    %648 = vmatprep.mubr.f32.mxu0 0.0
    %649 = vmatmul.mubr.f32.gmra.mrb[0].mxu0 %v413
    %v650 = vpop.f32.mrb[0].mxu0
    %v651 = vadd.f32 %v437, %v650
    %v652 = vpop.f32.mrb[0].mxu0
    %653 = vmatprep.mubr.f32.mxu0 0.0
    %654 = vmatmul.mubr.f32.gmra.mrb[0].mxu0 %v414
    %v655 = vpop.f32.mrb[0].mxu0
    %v656 = vadd.f32 %v437, %v655
    %v657 = vpop.f32.mrb[0].mxu0
    %658 = vmatprep.mubr.f32.mxu0 0.0
    %659 = vmatmul.mubr.f32.gmra.mrb[0].mxu0 %v415
    %v660 = vpop.f32.mrb[0].mxu0
    %v661 = vadd.f32 %v437, %v660
    %v662 = vpop.f32.mrb[0].mxu0
    %663 = vdwg.mxu0
    %v664 = vld [vmem:[#allocation8] sm:$0xff]
    %v665 = vld [vmem:[#allocation8 + $0x8] sm:$0xff]
    %v666 = vld [vmem:[#allocation8 + $0x10] sm:$0xff]
    %v667 = vld [vmem:[#allocation8 + $0x18] sm:$0xff]
    %v668 = vld [vmem:[#allocation8 + $0x20] sm:$0xff]
    %v669 = vld [vmem:[#allocation8 + $0x28] sm:$0xff]
    %v670 = vld [vmem:[#allocation8 + $0x30] sm:$0xff]
    %v671 = vld [vmem:[#allocation8 + $0x38] sm:$0xff]
    %v672 = vld [vmem:[#allocation8 + $0x40] sm:$0xff]
    %v673 = vld [vmem:[#allocation8 + $0x48] sm:$0xff]
    %v674 = vld [vmem:[#allocation8 + $0x50] sm:$0xff]
    %v675 = vld [vmem:[#allocation8 + $0x58] sm:$0xff]
    %v676 = vld [vmem:[#allocation8 + $0x60] sm:$0xff]
    %v677 = vld [vmem:[#allocation8 + $0x68] sm:$0xff]
    %v678 = vld [vmem:[#allocation8 + $0x70] sm:$0xff]
    %v679 = vld [vmem:[#allocation8 + $0x78] sm:$0xff]
    %v680 = vld [vmem:[%s6] sm:$0x1]
    %v682 = vlaneseq
    %v683 = vshrl.u32 %v682, 7
    %v684 = vsub.s32 0, %v683
    %v685 = vrot.slane %v680, %v684
    %687 = vmatprep.subr.mxu0 0.0
    %688 = vmatpush1.msra.mxu0 %v664
    %689 = vmatprep.subr.mxu0 0.0
    %690 = vmatpush1.msra.mxu0 %v665
    %691 = vmatprep.subr.mxu0 0.0
    %692 = vmatpush1.msra.mxu0 %v666
    %693 = vmatprep.subr.mxu0 0.0
    %694 = vmatpush1.msra.mxu0 %v667
    %695 = vmatprep.subr.mxu0 0.0
    %696 = vmatpush1.msra.mxu0 %v668
    %697 = vmatprep.subr.mxu0 0.0
    %698 = vmatpush1.msra.mxu0 %v669
    %699 = vmatprep.subr.mxu0 0.0
    %700 = vmatpush1.msra.mxu0 %v670
    %701 = vmatprep.subr.mxu0 0.0
    %702 = vmatpush1.msra.mxu0 %v671
    %703 = vmatprep.subr.mxu0 0.0
    %704 = vmatpush1.msra.mxu0 %v672
    %705 = vmatprep.subr.mxu0 0.0
    %706 = vmatpush1.msra.mxu0 %v673
    %707 = vmatprep.subr.mxu0 0.0
    %708 = vmatpush1.msra.mxu0 %v674
    %709 = vmatprep.subr.mxu0 0.0
    %710 = vmatpush1.msra.mxu0 %v675
    %711 = vmatprep.subr.mxu0 0.0
    %712 = vmatpush1.msra.mxu0 %v676
    %713 = vmatprep.subr.mxu0 0.0
    %714 = vmatpush1.msra.mxu0 %v677
    %715 = vmatprep.subr.mxu0 0.0
    %716 = vmatpush1.msra.mxu0 %v678
    %717 = vmatprep.subr.mxu0 0.0
    %718 = vmatpush1.msra.mxu0 %v679
    %719 = vmatprep.subr.mxu0 0.0
    %720 = vmatpush1.msra.mxu0 0.0
    %721 = vmatprep.subr.mxu0 0.0
    %722 = vmatpush1.msra.mxu0 0.0
    %723 = vmatprep.subr.mxu0 0.0
    %724 = vmatpush1.msra.mxu0 0.0
    %725 = vmatprep.subr.mxu0 0.0
    %726 = vmatpush1.msra.mxu0 0.0
    %727 = vmatprep.subr.mxu0 0.0
    %728 = vmatpush1.msra.mxu0 0.0
    %729 = vmatprep.subr.mxu0 0.0
    %730 = vmatpush1.msra.mxu0 0.0
    %731 = vmatprep.subr.mxu0 0.0
    %732 = vmatpush1.msra.mxu0 0.0
    %733 = vmatprep.subr.mxu0 0.0
    %734 = vmatpush1.msra.mxu0 0.0
    %735 = vmatprep.subr.mxu0 0.0
    %736 = vmatpush1.msra.mxu0 0.0
    %737 = vmatprep.subr.mxu0 0.0
    %738 = vmatpush1.msra.mxu0 0.0
    %739 = vmatprep.subr.mxu0 0.0
    %740 = vmatpush1.msra.mxu0 0.0
    %741 = vmatprep.subr.mxu0 0.0
    %742 = vmatpush1.msra.mxu0 0.0
    %743 = vmatprep.subr.mxu0 0.0
    %744 = vmatpush1.msra.mxu0 0.0
    %745 = vmatprep.subr.mxu0 0.0
    %746 = vmatpush1.msra.mxu0 0.0
    %747 = vmatprep.subr.mxu0 0.0
    %748 = vmatpush1.msra.mxu0 0.0
    %749 = vmatprep.subr.mxu0 0.0
    %750 = vmatpush1.msra.mxu0 0.0
    %751 = vmatprep.mubr.f32.mxu0 0.0
    %752 = vmatmul.mubr.f32.gmra.mrb[0].mxu0 %v506
    %v753 = vpop.f32.mrb[0].mxu0
    %v754 = vadd.f32 %v685, %v753
    %v755 = vpop.f32.mrb[0].mxu0
    %756 = vmatprep.mubr.f32.mxu0 0.0
    %757 = vmatmul.mubr.f32.gmra.mrb[0].mxu0 %v511
    %v758 = vpop.f32.mrb[0].mxu0
    %v759 = vadd.f32 %v685, %v758
    %v760 = vpop.f32.mrb[0].mxu0
    %761 = vmatprep.mubr.f32.mxu0 0.0
    %762 = vmatmul.mubr.f32.gmra.mrb[0].mxu0 %v516
    %v763 = vpop.f32.mrb[0].mxu0
    %v764 = vadd.f32 %v685, %v763
    %v765 = vpop.f32.mrb[0].mxu0
    %766 = vmatprep.mubr.f32.mxu0 0.0
    %767 = vmatmul.mubr.f32.gmra.mrb[0].mxu0 %v521
    %v768 = vpop.f32.mrb[0].mxu0
    %v769 = vadd.f32 %v685, %v768
    %v770 = vpop.f32.mrb[0].mxu0
    %771 = vmatprep.mubr.f32.mxu0 0.0
    %772 = vmatmul.mubr.f32.gmra.mrb[0].mxu0 %v526
    %v773 = vpop.f32.mrb[0].mxu0
    %v774 = vadd.f32 %v685, %v773
    %v775 = vpop.f32.mrb[0].mxu0
    %776 = vmatprep.mubr.f32.mxu0 0.0
    %777 = vmatmul.mubr.f32.gmra.mrb[0].mxu0 %v531
    %v778 = vpop.f32.mrb[0].mxu0
    %v779 = vadd.f32 %v685, %v778
    %v780 = vpop.f32.mrb[0].mxu0
    %781 = vmatprep.mubr.f32.mxu0 0.0
    %782 = vmatmul.mubr.f32.gmra.mrb[0].mxu0 %v536
    %v783 = vpop.f32.mrb[0].mxu0
    %v784 = vadd.f32 %v685, %v783
    %v785 = vpop.f32.mrb[0].mxu0
    %786 = vmatprep.mubr.f32.mxu0 0.0
    %787 = vmatmul.mubr.f32.gmra.mrb[0].mxu0 %v541
    %v788 = vpop.f32.mrb[0].mxu0
    %v789 = vadd.f32 %v685, %v788
    %v790 = vpop.f32.mrb[0].mxu0
    %791 = vmatprep.mubr.f32.mxu0 0.0
    %792 = vmatmul.mubr.f32.gmra.mrb[0].mxu0 %v546
    %v793 = vpop.f32.mrb[0].mxu0
    %v794 = vadd.f32 %v685, %v793
    %v795 = vpop.f32.mrb[0].mxu0
    %796 = vmatprep.mubr.f32.mxu0 0.0
    %797 = vmatmul.mubr.f32.gmra.mrb[0].mxu0 %v551
    %v798 = vpop.f32.mrb[0].mxu0
    %v799 = vadd.f32 %v685, %v798
    %v800 = vpop.f32.mrb[0].mxu0
    %801 = vmatprep.mubr.f32.mxu0 0.0
    %802 = vmatmul.mubr.f32.gmra.mrb[0].mxu0 %v556
    %v803 = vpop.f32.mrb[0].mxu0
    %v804 = vadd.f32 %v685, %v803
    %v805 = vpop.f32.mrb[0].mxu0
    %806 = vmatprep.mubr.f32.mxu0 0.0
    %807 = vmatmul.mubr.f32.gmra.mrb[0].mxu0 %v561
    %v808 = vpop.f32.mrb[0].mxu0
    %v809 = vadd.f32 %v685, %v808
    %v810 = vpop.f32.mrb[0].mxu0
    %811 = vmatprep.mubr.f32.mxu0 0.0
    %812 = vmatmul.mubr.f32.gmra.mrb[0].mxu0 %v566
    %v813 = vpop.f32.mrb[0].mxu0
    %v814 = vadd.f32 %v685, %v813
    %v815 = vpop.f32.mrb[0].mxu0
    %816 = vmatprep.mubr.f32.mxu0 0.0
    %817 = vmatmul.mubr.f32.gmra.mrb[0].mxu0 %v571
    %v818 = vpop.f32.mrb[0].mxu0
    %v819 = vadd.f32 %v685, %v818
    %v820 = vpop.f32.mrb[0].mxu0
    %821 = vmatprep.mubr.f32.mxu0 0.0
    %822 = vmatmul.mubr.f32.gmra.mrb[0].mxu0 %v576
    %v823 = vpop.f32.mrb[0].mxu0
    %v824 = vadd.f32 %v685, %v823
    %v825 = vpop.f32.mrb[0].mxu0
    %826 = vmatprep.mubr.f32.mxu0 0.0
    %827 = vmatmul.mubr.f32.gmra.mrb[0].mxu0 %v581
    %v828 = vpop.f32.mrb[0].mxu0
    %v829 = vadd.f32 %v685, %v828
    %v830 = vpop.f32.mrb[0].mxu0
    %831 = vmatprep.mubr.f32.mxu0 0.0
    %832 = vmatmul.mubr.f32.gmra.mrb[0].mxu0 %v586
    %v833 = vpop.f32.mrb[0].mxu0
    %v834 = vadd.f32 %v685, %v833
    %v835 = vpop.f32.mrb[0].mxu0
    %836 = vmatprep.mubr.f32.mxu0 0.0
    %837 = vmatmul.mubr.f32.gmra.mrb[0].mxu0 %v591
    %v838 = vpop.f32.mrb[0].mxu0
    %v839 = vadd.f32 %v685, %v838
    %v840 = vpop.f32.mrb[0].mxu0
    %841 = vmatprep.mubr.f32.mxu0 0.0
    %842 = vmatmul.mubr.f32.gmra.mrb[0].mxu0 %v596
    %v843 = vpop.f32.mrb[0].mxu0
    %v844 = vadd.f32 %v685, %v843
    %v845 = vpop.f32.mrb[0].mxu0
    %846 = vmatprep.mubr.f32.mxu0 0.0
    %847 = vmatmul.mubr.f32.gmra.mrb[0].mxu0 %v601
    %v848 = vpop.f32.mrb[0].mxu0
    %v849 = vadd.f32 %v685, %v848
    %v850 = vpop.f32.mrb[0].mxu0
    %851 = vmatprep.mubr.f32.mxu0 0.0
    %852 = vmatmul.mubr.f32.gmra.mrb[0].mxu0 %v606
    %v853 = vpop.f32.mrb[0].mxu0
    %v854 = vadd.f32 %v685, %v853
    %v855 = vpop.f32.mrb[0].mxu0
    %856 = vmatprep.mubr.f32.mxu0 0.0
    %857 = vmatmul.mubr.f32.gmra.mrb[0].mxu0 %v611
    %v858 = vpop.f32.mrb[0].mxu0
    %v859 = vadd.f32 %v685, %v858
    %v860 = vpop.f32.mrb[0].mxu0
    %861 = vmatprep.mubr.f32.mxu0 0.0
    %862 = vmatmul.mubr.f32.gmra.mrb[0].mxu0 %v616
    %v863 = vpop.f32.mrb[0].mxu0
    %v864 = vadd.f32 %v685, %v863
    %v865 = vpop.f32.mrb[0].mxu0
    %866 = vmatprep.mubr.f32.mxu0 0.0
    %867 = vmatmul.mubr.f32.gmra.mrb[0].mxu0 %v621
    %v868 = vpop.f32.mrb[0].mxu0
    %v869 = vadd.f32 %v685, %v868
    %v870 = vpop.f32.mrb[0].mxu0
    %871 = vmatprep.mubr.f32.mxu0 0.0
    %872 = vmatmul.mubr.f32.gmra.mrb[0].mxu0 %v626
    %v873 = vpop.f32.mrb[0].mxu0
    %v874 = vadd.f32 %v685, %v873
    %v875 = vpop.f32.mrb[0].mxu0
    %876 = vmatprep.mubr.f32.mxu0 0.0
    %877 = vmatmul.mubr.f32.gmra.mrb[0].mxu0 %v631
    %v878 = vpop.f32.mrb[0].mxu0
    %v879 = vadd.f32 %v685, %v878
    %v880 = vpop.f32.mrb[0].mxu0
    %881 = vmatprep.mubr.f32.mxu0 0.0
    %882 = vmatmul.mubr.f32.gmra.mrb[0].mxu0 %v636
    %v883 = vpop.f32.mrb[0].mxu0
    %v884 = vadd.f32 %v685, %v883
    %v885 = vpop.f32.mrb[0].mxu0
    %886 = vmatprep.mubr.f32.mxu0 0.0
    %887 = vmatmul.mubr.f32.gmra.mrb[0].mxu0 %v641
    %v888 = vpop.f32.mrb[0].mxu0
    %v889 = vadd.f32 %v685, %v888
    %v890 = vpop.f32.mrb[0].mxu0
    %891 = vmatprep.mubr.f32.mxu0 0.0
    %892 = vmatmul.mubr.f32.gmra.mrb[0].mxu0 %v646
    %v893 = vpop.f32.mrb[0].mxu0
    %v894 = vadd.f32 %v685, %v893
    %v895 = vpop.f32.mrb[0].mxu0
    %896 = vmatprep.mubr.f32.mxu0 0.0
    %897 = vmatmul.mubr.f32.gmra.mrb[0].mxu0 %v651
    %v898 = vpop.f32.mrb[0].mxu0
    %v899 = vadd.f32 %v685, %v898
    %v900 = vpop.f32.mrb[0].mxu0
    %901 = vmatprep.mubr.f32.mxu0 0.0
    %902 = vmatmul.mubr.f32.gmra.mrb[0].mxu0 %v656
    %v903 = vpop.f32.mrb[0].mxu0
    %v904 = vadd.f32 %v685, %v903
    %v905 = vpop.f32.mrb[0].mxu0
    %906 = vmatprep.mubr.f32.mxu0 0.0
    %907 = vmatmul.mubr.f32.gmra.mrb[0].mxu0 %v661
    %v908 = vpop.f32.mrb[0].mxu0
    %v909 = vadd.f32 %v685, %v908
    %v910 = vpop.f32.mrb[0].mxu0
    %911 = vdwg.mxu0
    %v912 = vmax.f32 %v754, 0.0
    %v913 = vmax.f32 %v759, 0.0
    %v914 = vmax.f32 %v764, 0.0
    %v915 = vmax.f32 %v769, 0.0
    %v916 = vmax.f32 %v774, 0.0
    %v917 = vmax.f32 %v779, 0.0
    %v918 = vmax.f32 %v784, 0.0
    %v919 = vmax.f32 %v789, 0.0
    %v920 = vmax.f32 %v794, 0.0
    %v921 = vmax.f32 %v799, 0.0
    %v922 = vmax.f32 %v804, 0.0
    %v923 = vmax.f32 %v809, 0.0
    %v924 = vmax.f32 %v814, 0.0
    %v925 = vmax.f32 %v819, 0.0
    %v926 = vmax.f32 %v824, 0.0
    %v927 = vmax.f32 %v829, 0.0
    %v928 = vmax.f32 %v834, 0.0
    %v929 = vmax.f32 %v839, 0.0
    %v930 = vmax.f32 %v844, 0.0
    %v931 = vmax.f32 %v849, 0.0
    %v932 = vmax.f32 %v854, 0.0
    %v933 = vmax.f32 %v859, 0.0
    %v934 = vmax.f32 %v864, 0.0
    %v935 = vmax.f32 %v869, 0.0
    %v936 = vmax.f32 %v874, 0.0
    %v937 = vmax.f32 %v879, 0.0
    %v938 = vmax.f32 %v884, 0.0
    %v939 = vmax.f32 %v889, 0.0
    %v940 = vmax.f32 %v894, 0.0
    %v941 = vmax.f32 %v899, 0.0
    %v942 = vmax.f32 %v904, 0.0
    %v943 = vmax.f32 %v909, 0.0
    %v944 = vld [vmem:[#allocation10] sm:$0xff]
    %v945 = vld [vmem:[#allocation10 + $0x8] sm:$0xff]
    %v946 = vld [vmem:[#allocation10 + $0x10] sm:$0xff]
    %v947 = vld [vmem:[#allocation10 + $0x18] sm:$0xff]
    %v948 = vld [vmem:[#allocation10 + $0x20] sm:$0xff]
    %v949 = vld [vmem:[#allocation10 + $0x28] sm:$0xff]
    %v950 = vld [vmem:[#allocation10 + $0x30] sm:$0xff]
    %v951 = vld [vmem:[#allocation10 + $0x38] sm:$0xff]
    %v952 = vld [vmem:[#allocation10 + $0x40] sm:$0xff]
    %v953 = vld [vmem:[#allocation10 + $0x48] sm:$0xff]
    %v954 = vld [vmem:[#allocation10 + $0x50] sm:$0xff]
    %v955 = vld [vmem:[#allocation10 + $0x58] sm:$0xff]
    %v956 = vld [vmem:[#allocation10 + $0x60] sm:$0xff]
    %v957 = vld [vmem:[#allocation10 + $0x68] sm:$0xff]
    %v958 = vld [vmem:[#allocation10 + $0x70] sm:$0xff]
    %v959 = vld [vmem:[#allocation10 + $0x78] sm:$0xff]
    %v960 = vld [vmem:[%s8] sm:$0x1]
    %v962 = vlaneseq
    %v963 = vshrl.u32 %v962, 7
    %v964 = vsub.s32 0, %v963
    %v965 = vrot.slane %v960, %v964
    %967 = vmatprep.subr.mxu0 0.0
    %968 = vmatpush1.msra.mxu0 %v944
    %969 = vmatprep.subr.mxu0 0.0
    %970 = vmatpush1.msra.mxu0 %v945
    %971 = vmatprep.subr.mxu0 0.0
    %972 = vmatpush1.msra.mxu0 %v946
    %973 = vmatprep.subr.mxu0 0.0
    %974 = vmatpush1.msra.mxu0 %v947
    %975 = vmatprep.subr.mxu0 0.0
    %976 = vmatpush1.msra.mxu0 %v948
    %977 = vmatprep.subr.mxu0 0.0
    %978 = vmatpush1.msra.mxu0 %v949
    %979 = vmatprep.subr.mxu0 0.0
    %980 = vmatpush1.msra.mxu0 %v950
    %981 = vmatprep.subr.mxu0 0.0
    %982 = vmatpush1.msra.mxu0 %v951
    %983 = vmatprep.subr.mxu0 0.0
    %984 = vmatpush1.msra.mxu0 %v952
    %985 = vmatprep.subr.mxu0 0.0
    %986 = vmatpush1.msra.mxu0 %v953
    %987 = vmatprep.subr.mxu0 0.0
    %988 = vmatpush1.msra.mxu0 %v954
    %989 = vmatprep.subr.mxu0 0.0
    %990 = vmatpush1.msra.mxu0 %v955
    %991 = vmatprep.subr.mxu0 0.0
    %992 = vmatpush1.msra.mxu0 %v956
    %993 = vmatprep.subr.mxu0 0.0
    %994 = vmatpush1.msra.mxu0 %v957
    %995 = vmatprep.subr.mxu0 0.0
    %996 = vmatpush1.msra.mxu0 %v958
    %997 = vmatprep.subr.mxu0 0.0
    %998 = vmatpush1.msra.mxu0 %v959
    %999 = vmatprep.subr.mxu0 0.0
    %1000 = vmatpush1.msra.mxu0 0.0
    %1001 = vmatprep.subr.mxu0 0.0
    %1002 = vmatpush1.msra.mxu0 0.0
    %1003 = vmatprep.subr.mxu0 0.0
    %1004 = vmatpush1.msra.mxu0 0.0
    %1005 = vmatprep.subr.mxu0 0.0
    %1006 = vmatpush1.msra.mxu0 0.0
    %1007 = vmatprep.subr.mxu0 0.0
    %1008 = vmatpush1.msra.mxu0 0.0
    %1009 = vmatprep.subr.mxu0 0.0
    %1010 = vmatpush1.msra.mxu0 0.0
    %1011 = vmatprep.subr.mxu0 0.0
    %1012 = vmatpush1.msra.mxu0 0.0
    %1013 = vmatprep.subr.mxu0 0.0
    %1014 = vmatpush1.msra.mxu0 0.0
    %1015 = vmatprep.subr.mxu0 0.0
    %1016 = vmatpush1.msra.mxu0 0.0
    %1017 = vmatprep.subr.mxu0 0.0
    %1018 = vmatpush1.msra.mxu0 0.0
    %1019 = vmatprep.subr.mxu0 0.0
    %1020 = vmatpush1.msra.mxu0 0.0
    %1021 = vmatprep.subr.mxu0 0.0
    %1022 = vmatpush1.msra.mxu0 0.0
    %1023 = vmatprep.subr.mxu0 0.0
    %1024 = vmatpush1.msra.mxu0 0.0
    %1025 = vmatprep.subr.mxu0 0.0
    %1026 = vmatpush1.msra.mxu0 0.0
    %1027 = vmatprep.subr.mxu0 0.0
    %1028 = vmatpush1.msra.mxu0 0.0
    %1029 = vmatprep.subr.mxu0 0.0
    %1030 = vmatpush1.msra.mxu0 0.0
    %1031 = vmatprep.mubr.f32.mxu0 0.0
    %1032 = vmatmul.mubr.f32.gmra.mrb[0].mxu0 %v912
    %v1033 = vpop.f32.mrb[0].mxu0
    %v1034 = vadd.f32 %v965, %v1033
    %v1035 = vpop.f32.mrb[0].mxu0
    %1036 = vmatprep.mubr.f32.mxu0 0.0
    %1037 = vmatmul.mubr.f32.gmra.mrb[0].mxu0 %v913
    %v1038 = vpop.f32.mrb[0].mxu0
    %v1039 = vadd.f32 %v965, %v1038
    %v1040 = vpop.f32.mrb[0].mxu0
    %1041 = vmatprep.mubr.f32.mxu0 0.0
    %1042 = vmatmul.mubr.f32.gmra.mrb[0].mxu0 %v914
    %v1043 = vpop.f32.mrb[0].mxu0
    %v1044 = vadd.f32 %v965, %v1043
    %v1045 = vpop.f32.mrb[0].mxu0
    %1046 = vmatprep.mubr.f32.mxu0 0.0
    %1047 = vmatmul.mubr.f32.gmra.mrb[0].mxu0 %v915
    %v1048 = vpop.f32.mrb[0].mxu0
    %v1049 = vadd.f32 %v965, %v1048
    %v1050 = vpop.f32.mrb[0].mxu0
    %1051 = vmatprep.mubr.f32.mxu0 0.0
    %1052 = vmatmul.mubr.f32.gmra.mrb[0].mxu0 %v916
    %v1053 = vpop.f32.mrb[0].mxu0
    %v1054 = vadd.f32 %v965, %v1053
    %v1055 = vpop.f32.mrb[0].mxu0
    %1056 = vmatprep.mubr.f32.mxu0 0.0
    %1057 = vmatmul.mubr.f32.gmra.mrb[0].mxu0 %v917
    %v1058 = vpop.f32.mrb[0].mxu0
    %v1059 = vadd.f32 %v965, %v1058
    %v1060 = vpop.f32.mrb[0].mxu0
    %1061 = vmatprep.mubr.f32.mxu0 0.0
    %1062 = vmatmul.mubr.f32.gmra.mrb[0].mxu0 %v918
    %v1063 = vpop.f32.mrb[0].mxu0
    %v1064 = vadd.f32 %v965, %v1063
    %v1065 = vpop.f32.mrb[0].mxu0
    %1066 = vmatprep.mubr.f32.mxu0 0.0
    %1067 = vmatmul.mubr.f32.gmra.mrb[0].mxu0 %v919
    %v1068 = vpop.f32.mrb[0].mxu0
    %v1069 = vadd.f32 %v965, %v1068
    %v1070 = vpop.f32.mrb[0].mxu0
    %1071 = vmatprep.mubr.f32.mxu0 0.0
    %1072 = vmatmul.mubr.f32.gmra.mrb[0].mxu0 %v920
    %v1073 = vpop.f32.mrb[0].mxu0
    %v1074 = vadd.f32 %v965, %v1073
    %v1075 = vpop.f32.mrb[0].mxu0
    %1076 = vmatprep.mubr.f32.mxu0 0.0
    %1077 = vmatmul.mubr.f32.gmra.mrb[0].mxu0 %v921
    %v1078 = vpop.f32.mrb[0].mxu0
    %v1079 = vadd.f32 %v965, %v1078
    %v1080 = vpop.f32.mrb[0].mxu0
    %1081 = vmatprep.mubr.f32.mxu0 0.0
    %1082 = vmatmul.mubr.f32.gmra.mrb[0].mxu0 %v922
    %v1083 = vpop.f32.mrb[0].mxu0
    %v1084 = vadd.f32 %v965, %v1083
    %v1085 = vpop.f32.mrb[0].mxu0
    %1086 = vmatprep.mubr.f32.mxu0 0.0
    %1087 = vmatmul.mubr.f32.gmra.mrb[0].mxu0 %v923
    %v1088 = vpop.f32.mrb[0].mxu0
    %v1089 = vadd.f32 %v965, %v1088
    %v1090 = vpop.f32.mrb[0].mxu0
    %1091 = vmatprep.mubr.f32.mxu0 0.0
    %1092 = vmatmul.mubr.f32.gmra.mrb[0].mxu0 %v924
    %v1093 = vpop.f32.mrb[0].mxu0
    %v1094 = vadd.f32 %v965, %v1093
    %v1095 = vpop.f32.mrb[0].mxu0
    %1096 = vmatprep.mubr.f32.mxu0 0.0
    %1097 = vmatmul.mubr.f32.gmra.mrb[0].mxu0 %v925
    %v1098 = vpop.f32.mrb[0].mxu0
    %v1099 = vadd.f32 %v965, %v1098
    %v1100 = vpop.f32.mrb[0].mxu0
    %1101 = vmatprep.mubr.f32.mxu0 0.0
    %1102 = vmatmul.mubr.f32.gmra.mrb[0].mxu0 %v926
    %v1103 = vpop.f32.mrb[0].mxu0
    %v1104 = vadd.f32 %v965, %v1103
    %v1105 = vpop.f32.mrb[0].mxu0
    %1106 = vmatprep.mubr.f32.mxu0 0.0
    %1107 = vmatmul.mubr.f32.gmra.mrb[0].mxu0 %v927
    %v1108 = vpop.f32.mrb[0].mxu0
    %v1109 = vadd.f32 %v965, %v1108
    %v1110 = vpop.f32.mrb[0].mxu0
    %1111 = vmatprep.mubr.f32.mxu0 0.0
    %1112 = vmatmul.mubr.f32.gmra.mrb[0].mxu0 %v928
    %v1113 = vpop.f32.mrb[0].mxu0
    %v1114 = vadd.f32 %v965, %v1113
    %v1115 = vpop.f32.mrb[0].mxu0
    %1116 = vmatprep.mubr.f32.mxu0 0.0
    %1117 = vmatmul.mubr.f32.gmra.mrb[0].mxu0 %v929
    %v1118 = vpop.f32.mrb[0].mxu0
    %v1119 = vadd.f32 %v965, %v1118
    %v1120 = vpop.f32.mrb[0].mxu0
    %1121 = vmatprep.mubr.f32.mxu0 0.0
    %1122 = vmatmul.mubr.f32.gmra.mrb[0].mxu0 %v930
    %v1123 = vpop.f32.mrb[0].mxu0
    %v1124 = vadd.f32 %v965, %v1123
    %v1125 = vpop.f32.mrb[0].mxu0
    %1126 = vmatprep.mubr.f32.mxu0 0.0
    %1127 = vmatmul.mubr.f32.gmra.mrb[0].mxu0 %v931
    %v1128 = vpop.f32.mrb[0].mxu0
    %v1129 = vadd.f32 %v965, %v1128
    %v1130 = vpop.f32.mrb[0].mxu0
    %1131 = vmatprep.mubr.f32.mxu0 0.0
    %1132 = vmatmul.mubr.f32.gmra.mrb[0].mxu0 %v932
    %v1133 = vpop.f32.mrb[0].mxu0
    %v1134 = vadd.f32 %v965, %v1133
    %v1135 = vpop.f32.mrb[0].mxu0
    %1136 = vmatprep.mubr.f32.mxu0 0.0
    %1137 = vmatmul.mubr.f32.gmra.mrb[0].mxu0 %v933
    %v1138 = vpop.f32.mrb[0].mxu0
    %v1139 = vadd.f32 %v965, %v1138
    %v1140 = vpop.f32.mrb[0].mxu0
    %1141 = vmatprep.mubr.f32.mxu0 0.0
    %1142 = vmatmul.mubr.f32.gmra.mrb[0].mxu0 %v934
    %v1143 = vpop.f32.mrb[0].mxu0
    %v1144 = vadd.f32 %v965, %v1143
    %v1145 = vpop.f32.mrb[0].mxu0
    %1146 = vmatprep.mubr.f32.mxu0 0.0
    %1147 = vmatmul.mubr.f32.gmra.mrb[0].mxu0 %v935
    %v1148 = vpop.f32.mrb[0].mxu0
    %v1149 = vadd.f32 %v965, %v1148
    %v1150 = vpop.f32.mrb[0].mxu0
    %1151 = vmatprep.mubr.f32.mxu0 0.0
    %1152 = vmatmul.mubr.f32.gmra.mrb[0].mxu0 %v936
    %v1153 = vpop.f32.mrb[0].mxu0
    %v1154 = vadd.f32 %v965, %v1153
    %v1155 = vpop.f32.mrb[0].mxu0
    %1156 = vmatprep.mubr.f32.mxu0 0.0
    %1157 = vmatmul.mubr.f32.gmra.mrb[0].mxu0 %v937
    %v1158 = vpop.f32.mrb[0].mxu0
    %v1159 = vadd.f32 %v965, %v1158
    %v1160 = vpop.f32.mrb[0].mxu0
    %1161 = vmatprep.mubr.f32.mxu0 0.0
    %1162 = vmatmul.mubr.f32.gmra.mrb[0].mxu0 %v938
    %v1163 = vpop.f32.mrb[0].mxu0
    %v1164 = vadd.f32 %v965, %v1163
    %v1165 = vpop.f32.mrb[0].mxu0
    %1166 = vmatprep.mubr.f32.mxu0 0.0
    %1167 = vmatmul.mubr.f32.gmra.mrb[0].mxu0 %v939
    %v1168 = vpop.f32.mrb[0].mxu0
    %v1169 = vadd.f32 %v965, %v1168
    %v1170 = vpop.f32.mrb[0].mxu0
    %1171 = vmatprep.mubr.f32.mxu0 0.0
    %1172 = vmatmul.mubr.f32.gmra.mrb[0].mxu0 %v940
    %v1173 = vpop.f32.mrb[0].mxu0
    %v1174 = vadd.f32 %v965, %v1173
    %v1175 = vpop.f32.mrb[0].mxu0
    %1176 = vmatprep.mubr.f32.mxu0 0.0
    %1177 = vmatmul.mubr.f32.gmra.mrb[0].mxu0 %v941
    %v1178 = vpop.f32.mrb[0].mxu0
    %v1179 = vadd.f32 %v965, %v1178
    %v1180 = vpop.f32.mrb[0].mxu0
    %1181 = vmatprep.mubr.f32.mxu0 0.0
    %1182 = vmatmul.mubr.f32.gmra.mrb[0].mxu0 %v942
    %v1183 = vpop.f32.mrb[0].mxu0
    %v1184 = vadd.f32 %v965, %v1183
    %v1185 = vpop.f32.mrb[0].mxu0
    %1186 = vmatprep.mubr.f32.mxu0 0.0
    %1187 = vmatmul.mubr.f32.gmra.mrb[0].mxu0 %v943
    %v1188 = vpop.f32.mrb[0].mxu0
    %v1189 = vadd.f32 %v965, %v1188
    %v1190 = vpop.f32.mrb[0].mxu0
    %1191 = vdwg.mxu0
    %1192 = vst [vmem:[#allocation12] sm:$0xff] %v506
    %1193 = vst [vmem:[#allocation12 + $0x8] sm:$0xff] %v511
    %1194 = vst [vmem:[#allocation12 + $0x10] sm:$0xff] %v516
    %1195 = vst [vmem:[#allocation12 + $0x18] sm:$0xff] %v521
    %1196 = vst [vmem:[#allocation12 + $0x20] sm:$0xff] %v526
    %1197 = vst [vmem:[#allocation12 + $0x28] sm:$0xff] %v531
    %1198 = vst [vmem:[#allocation12 + $0x30] sm:$0xff] %v536
    %1199 = vst [vmem:[#allocation12 + $0x38] sm:$0xff] %v541
    %1200 = vst [vmem:[#allocation12 + $0x40] sm:$0xff] %v546
    %1201 = vst [vmem:[#allocation12 + $0x48] sm:$0xff] %v551
    %1202 = vst [vmem:[#allocation12 + $0x50] sm:$0xff] %v556
    %1203 = vst [vmem:[#allocation12 + $0x58] sm:$0xff] %v561
    %1204 = vst [vmem:[#allocation12 + $0x60] sm:$0xff] %v566
    %1205 = vst [vmem:[#allocation12 + $0x68] sm:$0xff] %v571
    %1206 = vst [vmem:[#allocation12 + $0x70] sm:$0xff] %v576
    %1207 = vst [vmem:[#allocation12 + $0x78] sm:$0xff] %v581
    %1208 = vst [vmem:[#allocation12 + $0x80] sm:$0xff] %v586
    %1209 = vst [vmem:[#allocation12 + $0x88] sm:$0xff] %v591
    %1210 = vst [vmem:[#allocation12 + $0x90] sm:$0xff] %v596
    %1211 = vst [vmem:[#allocation12 + $0x98] sm:$0xff] %v601
    %1212 = vst [vmem:[#allocation12 + $0xa0] sm:$0xff] %v606
    %1213 = vst [vmem:[#allocation12 + $0xa8] sm:$0xff] %v611
    %1214 = vst [vmem:[#allocation12 + $0xb0] sm:$0xff] %v616
    %1215 = vst [vmem:[#allocation12 + $0xb8] sm:$0xff] %v621
    %1216 = vst [vmem:[#allocation12 + $0xc0] sm:$0xff] %v626
    %1217 = vst [vmem:[#allocation12 + $0xc8] sm:$0xff] %v631
    %1218 = vst [vmem:[#allocation12 + $0xd0] sm:$0xff] %v636
    %1219 = vst [vmem:[#allocation12 + $0xd8] sm:$0xff] %v641
    %1220 = vst [vmem:[#allocation12 + $0xe0] sm:$0xff] %v646
    %1221 = vst [vmem:[#allocation12 + $0xe8] sm:$0xff] %v651
    %1222 = vst [vmem:[#allocation12 + $0xf0] sm:$0xff] %v656
    %1223 = vst [vmem:[#allocation12 + $0xf8] sm:$0xff] %v661
    %1224 = vst [vmem:[#allocation11] sm:$0xff] %v1034
    %1225 = vst [vmem:[#allocation11 + $0x8] sm:$0xff] %v1039
    %1226 = vst [vmem:[#allocation11 + $0x10] sm:$0xff] %v1044
    %1227 = vst [vmem:[#allocation11 + $0x18] sm:$0xff] %v1049
    %1228 = vst [vmem:[#allocation11 + $0x20] sm:$0xff] %v1054
    %1229 = vst [vmem:[#allocation11 + $0x28] sm:$0xff] %v1059
    %1230 = vst [vmem:[#allocation11 + $0x30] sm:$0xff] %v1064
    %1231 = vst [vmem:[#allocation11 + $0x38] sm:$0xff] %v1069
    %1232 = vst [vmem:[#allocation11 + $0x40] sm:$0xff] %v1074
    %1233 = vst [vmem:[#allocation11 + $0x48] sm:$0xff] %v1079
    %1234 = vst [vmem:[#allocation11 + $0x50] sm:$0xff] %v1084
    %1235 = vst [vmem:[#allocation11 + $0x58] sm:$0xff] %v1089
    %1236 = vst [vmem:[#allocation11 + $0x60] sm:$0xff] %v1094
    %1237 = vst [vmem:[#allocation11 + $0x68] sm:$0xff] %v1099
    %1238 = vst [vmem:[#allocation11 + $0x70] sm:$0xff] %v1104
    %1239 = vst [vmem:[#allocation11 + $0x78] sm:$0xff] %v1109
    %1240 = vst [vmem:[#allocation11 + $0x80] sm:$0xff] %v1114
    %1241 = vst [vmem:[#allocation11 + $0x88] sm:$0xff] %v1119
    %1242 = vst [vmem:[#allocation11 + $0x90] sm:$0xff] %v1124
    %1243 = vst [vmem:[#allocation11 + $0x98] sm:$0xff] %v1129
    %1244 = vst [vmem:[#allocation11 + $0xa0] sm:$0xff] %v1134
    %1245 = vst [vmem:[#allocation11 + $0xa8] sm:$0xff] %v1139
    %1246 = vst [vmem:[#allocation11 + $0xb0] sm:$0xff] %v1144
    %1247 = vst [vmem:[#allocation11 + $0xb8] sm:$0xff] %v1149
    %1248 = vst [vmem:[#allocation11 + $0xc0] sm:$0xff] %v1154
    %1249 = vst [vmem:[#allocation11 + $0xc8] sm:$0xff] %v1159
    %1250 = vst [vmem:[#allocation11 + $0xd0] sm:$0xff] %v1164
    %1251 = vst [vmem:[#allocation11 + $0xd8] sm:$0xff] %v1169
    %1252 = vst [vmem:[#allocation11 + $0xe0] sm:$0xff] %v1174
    %1253 = vst [vmem:[#allocation11 + $0xe8] sm:$0xff] %v1179
    %1254 = vst [vmem:[#allocation11 + $0xf0] sm:$0xff] %v1184
    %1255 = vst [vmem:[#allocation11 + $0xf8] sm:$0xff] %v1189
    // Predicated region
    $region58: #{tpu_custom_call.1} parent=1 // pred_check
      _
    $region59: #{tpu_custom_call.1} parent=1 // pred_check_branch
      %1257 = sbr.rel (0) target = $region61
    $region60: #{tpu_custom_call.1} parent=1 // pred_region
      %s1259 = ssub.s32 4096, 4096
      %1260 = vsyncadd [#allocation4], %s1259
      %s1261 = sshll.u32 [#allocation11], 4
      %s1262 = int_to_ptr.vmem [resolvable:$true] %s1261
      %1267 = dma.vmem_to_hbm [thread:$0]  %s1262, 4096, %s9, [#allocation4], 128, 128, 8
    $region61: #{tpu_custom_call.1} parent=1 // pred_fallthru
      _
    // Predicated region
    $region62: #{tpu_custom_call.1} parent=1 // pred_check
      _
    $region63: #{tpu_custom_call.1} parent=1 // pred_check_branch
      %1269 = sbr.rel (0) target = $region65
    $region64: #{tpu_custom_call.1} parent=1 // pred_region
      %s1271 = ssub.s32 4096, 4096
      %1272 = vsyncadd [#allocation13], %s1271
      %s1273 = sshll.u32 [#allocation12], 4
      %s1274 = int_to_ptr.vmem [resolvable:$true] %s1273
      %1279 = dma.vmem_to_hbm [thread:$0]  %s1274, 4096, %s10, [#allocation13], 128, 128, 8
    $region65: #{tpu_custom_call.1} parent=1 // pred_fallthru
      _
    // Predicated region
    $region66: #{tpu_custom_call.1} parent=1 // pred_check
      _
    $region67: #{tpu_custom_call.1} parent=1 // pred_check_branch
      %1281 = sbr.rel (0) target = $region69
    $region68: #{tpu_custom_call.1} parent=1 // pred_region
      %1282 = dma.done [#allocation4], 4096
    $region69: #{tpu_custom_call.1} parent=1 // pred_fallthru
      _
    // Predicated region
    $region70: #{tpu_custom_call.1} parent=1 // pred_check
      _
    $region71: #{tpu_custom_call.1} parent=1 // pred_check_branch
      %1284 = sbr.rel (0) target = $region73
    $region72: #{tpu_custom_call.1} parent=1 // pred_region
      %1285 = dma.done [#allocation13], 4096
    $region73: #{tpu_custom_call.1} parent=1 // pred_fallthru
      _
    %1286 = vsyncpa [#allocation3], 1
    %1287 = vsyncpa [#allocation6], 1
    %1288 = vsyncpa [#allocation9], 1
    %1289 = vsyncpa [#allocation4], 1
    %1290 = vsyncpa [#allocation13], 1

</llo_original>
